<compile_context>
chip_gen: v5e
topology: v5e:2x2
jax: 0.10.0
libtpu: 0.0.40
codegen_flags: <defaults>
</compile_context>

<pallas_src>
import math
import functools

import jax
import jax.numpy as jnp
from jax import lax
from jax.experimental import pallas as pl
from jax.experimental.pallas import tpu as pltpu

CONTEXT_LENGTH = 512
PARAM_DTYPE = jnp.bfloat16           # bf16 weights/activations; f32 accumulation
VMEM_LIMIT_BYTES = 32 * 1024 * 1024  # explicit scoped-VMEM limit for every kernel
NEG_INF = -1e30                      # finite mask constant (no inf-inf NaN hazard)


# ----------------------------- tiling helpers ------------------------------


def _sublane(dtype):
    """Minimum multiple for the second-to-last block dim (16 for 16-bit types)."""
    return 16 if jnp.dtype(dtype).itemsize == 2 else 8


def _pick_tile(dim, target, mult):
    """Largest tile <= target that is a multiple of `mult` and divides `dim`.
    Falls back to the full dimension (full-extent blocks are always legal)."""
    if dim <= target:
        return dim
    t = (target // mult) * mult
    while t >= mult:
        if dim % t == 0:
            return t
        t -= mult
    return dim


def _gelu_exact(x):
    """Exact (erf) GELU matching torch.nn.GELU().  erf is evaluated with the
    Abramowitz-Stegun 7.1.26 approximation (|err| < 1.5e-7, far below bf16/f32
    noise) so the kernel only needs EUP exp + VPU ops."""
    z = x * 0.7071067811865476
    a = jnp.abs(z)
    t = 1.0 / (1.0 + 0.3275911 * a)
    poly = t * (0.254829592 + t * (-0.284496736 + t * (1.421413741
               + t * (-1.453152027 + t * 1.061405429))))
    erf_abs = 1.0 - poly * jnp.exp(-a * a)
    erf = jnp.where(z >= 0, erf_abs, -erf_abs)
    return 0.5 * x * (1.0 + erf)


# --------------------------- tiled linear kernel ----------------------------


def _matmul_kernel(x_ref, w_ref, b_ref, o_ref, acc_ref, *, activation):
    k = pl.program_id(2)

    @pl.when(k == 0)
    def _():
        acc_ref[...] = jnp.zeros_like(acc_ref)

    acc_ref[...] += jnp.dot(x_ref[...], w_ref[...],
                            preferred_element_type=jnp.float32)

    @pl.when(k == pl.num_programs(2) - 1)
    def _():
        y = acc_ref[...] + b_ref[...].astype(jnp.float32)
        if activation == "gelu":
            y = _gelu_exact(y)
        o_ref[...] = y.astype(o_ref.dtype)


def linear_tiled(x, w, b, *, activation=None,
                 tm_target=512, tk_target=512, tn_target=512):
    """y = act(x @ W + b) with W stored [K, N]."""
    M, K = x.shape
    N = w.shape[1]

    tm = _pick_tile(M, tm_target, _sublane(x.dtype))
    tk = _pick_tile(K, tk_target, 128)
    tn = _pick_tile(N, tn_target, 128)
    grid = (M // tm, N // tn, K // tk)

    kernel = functools.partial(_matmul_kernel, activation=activation)
    return pl.pallas_call(
        kernel,
        grid=grid,
        in_specs=[
            pl.BlockSpec((tm, tk), lambda i, j, k: (i, k)),
            pl.BlockSpec((tk, tn), lambda i, j, k: (k, j)),
            pl.BlockSpec((1, tn), lambda i, j, k: (0, j)),
        ],
        out_specs=pl.BlockSpec((tm, tn), lambda i, j, k: (i, j)),
        out_shape=jax.ShapeDtypeStruct((M, N), x.dtype),
        scratch_shapes=[pltpu.VMEM((tm, tn), jnp.float32)],
        compiler_params=pltpu.CompilerParams(
            dimension_semantics=("parallel", "parallel", "arbitrary"),
            vmem_limit_bytes=VMEM_LIMIT_BYTES),
    )(x, w, b.reshape(1, N))


# ---------------- matmul + residual add + LayerNorm (fused) -----------------


def _matmul_add_ln_kernel(x_ref, w_ref, b_ref, r_ref, g_ref, be_ref,
                          o_ref, acc_ref):
    k = pl.program_id(1)

    @pl.when(k == 0)
    def _():
        acc_ref[...] = jnp.zeros_like(acc_ref)

    acc_ref[...] += jnp.dot(x_ref[...], w_ref[...],
                            preferred_element_type=jnp.float32)

    @pl.when(k == pl.num_programs(1) - 1)
    def _():
        # out = LayerNorm(residual + x @ W + b), eps = 1e-5 (PyTorch default)
        z = (acc_ref[...] + b_ref[...].astype(jnp.float32)
             + r_ref[...].astype(jnp.float32))
        mean = jnp.mean(z, axis=-1, keepdims=True)
        var = jnp.mean(jnp.square(z - mean), axis=-1, keepdims=True)
        zn = (z - mean) * lax.rsqrt(var + 1e-5)
        o_ref[...] = (zn * g_ref[...].astype(jnp.float32)
                      + be_ref[...].astype(jnp.float32)).astype(o_ref.dtype)


def matmul_add_ln(x, w, b, residual, gamma, beta, *, tm_target=512, tk_target=512):
    """LayerNorm(residual + x @ W + b); full N kept resident so the LN
    reduction runs on the f32 accumulator (no extra HBM round-trip)."""
    M, K = x.shape
    N = w.shape[1]
    tm = _pick_tile(M, tm_target, _sublane(x.dtype))
    tk = _pick_tile(K, tk_target, 128)
    grid = (M // tm, K // tk)

    return pl.pallas_call(
        _matmul_add_ln_kernel,
        grid=grid,
        in_specs=[
            pl.BlockSpec((tm, tk), lambda i, k: (i, k)),
            pl.BlockSpec((tk, N), lambda i, k: (k, 0)),
            pl.BlockSpec((1, N), lambda i, k: (0, 0)),
            pl.BlockSpec((tm, N), lambda i, k: (i, 0)),
            pl.BlockSpec((1, N), lambda i, k: (0, 0)),
            pl.BlockSpec((1, N), lambda i, k: (0, 0)),
        ],
        out_specs=pl.BlockSpec((tm, N), lambda i, k: (i, 0)),
        out_shape=jax.ShapeDtypeStruct((M, N), x.dtype),
        scratch_shapes=[pltpu.VMEM((tm, N), jnp.float32)],
        compiler_params=pltpu.CompilerParams(
            dimension_semantics=("parallel", "arbitrary"),
            vmem_limit_bytes=VMEM_LIMIT_BYTES),
    )(x, w, b.reshape(1, N), residual, gamma.reshape(1, N), beta.reshape(1, N))


# ----------------------- flash-style causal attention -----------------------


def _flash_attn_kernel(q_ref, k_ref, v_ref, o_ref, m_sc, l_sc, acc_sc):
    qi = pl.program_id(1)
    ki = pl.program_id(2)
    tq = q_ref.shape[0]
    tk = k_ref.shape[0]

    # Key blocks entirely in the causal future contribute nothing: skip them.
    @pl.when(ki <= qi)
    def _():
        @pl.when(ki == 0)
        def _():
            m_sc[...] = jnp.full(m_sc.shape, NEG_INF, jnp.float32)
            l_sc[...] = jnp.zeros(l_sc.shape, jnp.float32)
            acc_sc[...] = jnp.zeros(acc_sc.shape, jnp.float32)

        # scores [tq, tk]; 1/sqrt(d_head) is pre-folded into the Q projection.
        s = lax.dot_general(q_ref[...], k_ref[...],
                            dimension_numbers=(((1,), (1,)), ((), ())),
                            preferred_element_type=jnp.float32)
        row = qi * tq + lax.broadcasted_iota(jnp.int32, (tq, tk), 0)
        col = ki * tk + lax.broadcasted_iota(jnp.int32, (tq, tk), 1)
        s = jnp.where(col > row, NEG_INF, s)

        m_prev = m_sc[...]
        m_new = jnp.maximum(m_prev, jnp.max(s, axis=-1, keepdims=True))
        alpha = jnp.exp(m_prev - m_new)
        p = jnp.exp(s - m_new)
        l_sc[...] = alpha * l_sc[...] + jnp.sum(p, axis=-1, keepdims=True)
        # TODO(synk): attention dropout (p=0.2) is identity in eval mode; not applied.
        acc_sc[...] = alpha * acc_sc[...] + jnp.dot(
            p.astype(v_ref.dtype), v_ref[...], preferred_element_type=jnp.float32)
        m_sc[...] = m_new

        @pl.when(ki == qi)   # last un-skipped KV block for this query block
        def _():
            o_ref[...] = (acc_sc[...] *
                          pl.reciprocal(l_sc[...], approx=True)).astype(o_ref.dtype)


def causal_attention(q, k, v, *, tq_target=256):
    """q, k, v: [B*H, S, d_head].  Returns [B*H, S, d_head]."""
    BH, S, d_head = q.shape
    tq = _pick_tile(S, tq_target, _sublane(q.dtype))
    tk = tq
    nq, nk = S // tq, S // tk

    # KV index clamped so fully-masked future blocks map to the previously
    # loaded block (Pallas skips the re-DMA when the block index is unchanged).
    kv_map = lambda b, qi, ki: (b, jnp.minimum(ki, qi), 0)

    return pl.pallas_call(
        _flash_attn_kernel,
        grid=(BH, nq, nk),
        in_specs=[
            pl.BlockSpec((None, tq, d_head), lambda b, qi, ki: (b, qi, 0)),
            pl.BlockSpec((None, tk, d_head), kv_map),
            pl.BlockSpec((None, tk, d_head), kv_map),
        ],
        out_specs=pl.BlockSpec((None, tq, d_head), lambda b, qi, ki: (b, qi, 0)),
        out_shape=jax.ShapeDtypeStruct((BH, S, d_head), q.dtype),
        scratch_shapes=[
            pltpu.VMEM((tq, 1), jnp.float32),        # running max m
            pltpu.VMEM((tq, 1), jnp.float32),        # running denom l
            pltpu.VMEM((tq, d_head), jnp.float32),   # running PV accumulator
        ],
        compiler_params=pltpu.CompilerParams(
            dimension_semantics=("parallel", "parallel", "arbitrary"),
            vmem_limit_bytes=VMEM_LIMIT_BYTES),
    )(q, k, v)


# ----------------------------- model wrapper -------------------------------


def positional_encoding(context_length, d_model):
    position = jnp.arange(context_length, dtype=jnp.float32)[:, None]
    div_term = jnp.exp(jnp.arange(0, d_model, 2, dtype=jnp.float32)
                       * (-math.log(10000.0) / d_model))
    pe = jnp.zeros((context_length, d_model), jnp.float32)
    pe = pe.at[:, 0::2].set(jnp.sin(position * div_term))
    pe = pe.at[:, 1::2].set(jnp.cos(position * div_term))
    return pe.astype(PARAM_DTYPE)


def _init_linear(key, fan_in, fan_out):
    # nn.Linear default init: U(-1/sqrt(fan_in), 1/sqrt(fan_in)) for W and b.
    k1, k2 = jax.random.split(key)
    bound = 1.0 / math.sqrt(fan_in)
    w = jax.random.uniform(k1, (fan_in, fan_out), jnp.float32, -bound, bound)
    b = jax.random.uniform(k2, (fan_out,), jnp.float32, -bound, bound)
    return w, b


def init_gpt_params(key, vocab_size, d_model, n_heads, n_layers):
    keys = jax.random.split(key, n_layers + 1)
    # linear1.weight (tied with wte.weight) has torch shape (vocab, d_model).
    w_lm, b_lm = _init_linear(keys[0], d_model, vocab_size)     # (d_model, vocab)
    wte = w_lm.T                                                # (vocab, d_model)
    # One-time pre-transpose + 128-pad of the tied lm-head weight (no per-forward
    # transpose, lane-aligned tiles, never a full-vocab block).
    vocab_p = ((vocab_size + 127) // 128) * 128
    wte_t = jnp.zeros((d_model, vocab_p), jnp.float32).at[:, :vocab_size].set(w_lm)
    lm_b = jnp.zeros((vocab_p,), jnp.float32).at[:vocab_size].set(b_lm)

    params = {
        "wte": wte.astype(PARAM_DTYPE),
        "wte_t": wte_t.astype(PARAM_DTYPE),
        "lm_b": lm_b.astype(PARAM_DTYPE),
        "pe": positional_encoding(CONTEXT_LENGTH, d_model),
        "blocks": [],
    }

    d_head = d_model // n_heads
    q_scale = 1.0 / math.sqrt(d_head)
    for l in range(n_layers):
        bkeys = jax.random.split(keys[l + 1], 6)
        wq, bq = _init_linear(bkeys[0], d_model, d_model)
        wk, bk = _init_linear(bkeys[1], d_model, d_model)
        wv, bv = _init_linear(bkeys[2], d_model, d_model)
        wo, bo = _init_linear(bkeys[3], d_model, d_model)
        w1, bf1 = _init_linear(bkeys[4], d_model, 4 * d_model)
        w2, bf2 = _init_linear(bkeys[5], 4 * d_model, d_model)
        # Fused QKV projection with the attention scale folded into Q (free).
        wqkv = jnp.concatenate([wq * q_scale, wk, wv], axis=1)
        bqkv = jnp.concatenate([bq * q_scale, bk, bv], axis=0)
        params["blocks"].append({
            "wqkv": wqkv.astype(PARAM_DTYPE), "bqkv": bqkv.astype(PARAM_DTYPE),
            "wo": wo.astype(PARAM_DTYPE), "bo": bo.astype(PARAM_DTYPE),
            "g1": jnp.ones((d_model,), PARAM_DTYPE),
            "be1": jnp.zeros((d_model,), PARAM_DTYPE),
            "g2": jnp.ones((d_model,), PARAM_DTYPE),
            "be2": jnp.zeros((d_model,), PARAM_DTYPE),
            "w1": w1.astype(PARAM_DTYPE), "bf1": bf1.astype(PARAM_DTYPE),
            "w2": w2.astype(PARAM_DTYPE), "bf2": bf2.astype(PARAM_DTYPE),
        })
    return params


def gpt_block(p, x2, B, S, n_heads):
    D = x2.shape[-1]
    d_head = D // n_heads
    qkv = linear_tiled(x2, p["wqkv"], p["bqkv"])                    # [M, 3D] fused QKV
    # TODO(synk): head split/merge relayouts are left to XLA (cheap glue vs. matmul cost).
    qkv_h = qkv.reshape(B, S, 3, n_heads, d_head).transpose(2, 0, 3, 1, 4)
    qkv_h = qkv_h.reshape(3, B * n_heads, S, d_head)
    att = causal_attention(qkv_h[0], qkv_h[1], qkv_h[2])            # [B*H, S, dh]
    att = att.reshape(B, n_heads, S, d_head).transpose(0, 2, 1, 3).reshape(B * S, D)
    # ln1(x + fc_out(att))  -- projection + residual + LN fused in one kernel
    adn = matmul_add_ln(att, p["wo"], p["bo"], x2, p["g1"], p["be1"])
    # TODO(synk): residual dropout (p=0.2) is identity in eval mode; not applied.
    h = linear_tiled(adn, p["w1"], p["bf1"], activation="gelu")     # GELU fused
    # ln2(adn + fc2(h))
    out = matmul_add_ln(h, p["w2"], p["bf2"], adn, p["g2"], p["be2"])
    return out


@functools.partial(jax.jit, static_argnames=("n_heads",))
def gpt_forward(params, inputs, n_heads):
    B, S = inputs.shape
    # TODO(synk): embedding gather + positional-encoding add left to XLA (cheap glue).
    x = jnp.take(params["wte"], inputs, axis=0)                     # wte(inputs)
    x = x + params["pe"][None, :S, :].astype(x.dtype)               # wpe
    D = x.shape[-1]
    x2 = x.reshape(B * S, D)
    for blk in params["blocks"]:
        x2 = gpt_block(blk, x2, B, S, n_heads)
    vocab = params["wte"].shape[0]
    # lm head: tied weight pre-transposed/padded once at init; slice off padding.
    logits = linear_tiled(x2, params["wte_t"], params["lm_b"])
    return logits[:, :vocab].reshape(B, S, vocab)                   # loss=None (no targets)


# --------------------------------- main -------------------------------------

if __name__ == "__main__":
    vocab_size = 256
    d_model = 128
    n_heads = 4
    n_layers = 2
    B, S = 2, 16

    key = jax.random.PRNGKey(0)
    pkey, ikey = jax.random.split(key)
    params = init_gpt_params(pkey, vocab_size, d_model, n_heads, n_layers)
    inputs = jax.random.randint(ikey, (B, S), 0, vocab_size, dtype=jnp.int32)

    logits = gpt_forward(params, inputs, n_heads)
    jax.block_until_ready(logits)
    assert logits.shape == (B, S, vocab_size)
    assert bool(jnp.all(jnp.isfinite(logits.astype(jnp.float32))))
    print("KERNEL_OK")
</pallas_src>

<mosaic_0001>
module attributes {stable_mosaic.version = 11 : i64} {
  func.func @_matmul_kernel(%arg0: i32, %arg1: i32, %arg2: i32, %arg3: memref<32x128xbf16, #tpu.memory_space<vmem>>, %arg4: memref<128x384xbf16, #tpu.memory_space<vmem>>, %arg5: memref<1x384xbf16, #tpu.memory_space<vmem>>, %arg6: memref<32x384xbf16, #tpu.memory_space<vmem>>, %arg7: memref<32x384xf32, #tpu.memory_space<vmem>>) attributes {dimension_semantics = [#tpu.dimension_semantics<parallel>, #tpu.dimension_semantics<parallel>, #tpu.dimension_semantics<arbitrary>], iteration_bounds = array<i64: 1, 1, 1>, scalar_prefetch = 0 : i64, scratch_operands = 1 : i64, tpu.core_type = #tpu.core_type<tc>, window_params = [{transform_indices = @transform_0, window_bounds = array<i64: 32, 128>}, {transform_indices = @transform_1, window_bounds = array<i64: 128, 384>}, {transform_indices = @transform_2, window_bounds = array<i64: 1, 384>}, {transform_indices = @transform_3, window_bounds = array<i64: 32, 384>}]} {
    %c0_i32 = arith.constant 0 : i32
    %0 = arith.cmpi eq, %arg2, %c0_i32 : i32
    %1 = arith.extui %0 : i1 to i32
    %c0_i32_0 = arith.constant 0 : i32
    %2 = arith.cmpi ne, %1, %c0_i32_0 : i32
    scf.if %2 {
      %cst_10 = arith.constant 0.000000e+00 : f32
      %12 = vector.broadcast %cst_10 : f32 to vector<32x384xf32>
      %c0_11 = arith.constant 0 : index
      %c0_12 = arith.constant 0 : index
      %13 = vector.load %arg7[%c0_11, %c0_12] : memref<32x384xf32, #tpu.memory_space<vmem>>, vector<32x384xf32>
      tpu.vector_store %arg7[%c0_11, %c0_12], %12 {strides = array<i32>} : memref<32x384xf32, #tpu.memory_space<vmem>>, vector<32x384xf32>,
    } else {
    }
    %c0 = arith.constant 0 : index
    %c0_1 = arith.constant 0 : index
    %3 = vector.load %arg7[%c0, %c0_1] : memref<32x384xf32, #tpu.memory_space<vmem>>, vector<32x384xf32>
    %c0_2 = arith.constant 0 : index
    %c0_3 = arith.constant 0 : index
    %4 = vector.load %arg3[%c0_2, %c0_3] : memref<32x128xbf16, #tpu.memory_space<vmem>>, vector<32x128xbf16>
    %c0_4 = arith.constant 0 : index
    %c0_5 = arith.constant 0 : index
    %5 = vector.load %arg4[%c0_4, %c0_5] : memref<128x384xbf16, #tpu.memory_space<vmem>>, vector<128x384xbf16>
    %cst = arith.constant dense<0.000000e+00> : vector<32x384xf32>
    %6 = tpu.matmul %4, %5, %cst {dimension_numbers = #tpu.dot_dimension_numbers<[1], [0], [0], [1], [0, 0, 1, 1], [], []>} : vector<32x128xbf16>, vector<128x384xbf16>, vector<32x384xf32> -> vector<32x384xf32>
    %7 = arith.addf %3, %6 : vector<32x384xf32>
    %c0_6 = arith.constant 0 : index
    %c0_7 = arith.constant 0 : index
    %8 = vector.load %arg7[%c0_6, %c0_7] : memref<32x384xf32, #tpu.memory_space<vmem>>, vector<32x384xf32>
    tpu.vector_store %arg7[%c0_6, %c0_7], %7 {strides = array<i32>} : memref<32x384xf32, #tpu.memory_space<vmem>>, vector<32x384xf32>,
    %c0_i32_8 = arith.constant 0 : i32
    %9 = arith.cmpi eq, %arg2, %c0_i32_8 : i32
    %10 = arith.extui %9 : i1 to i32
    %c0_i32_9 = arith.constant 0 : i32
    %11 = arith.cmpi ne, %10, %c0_i32_9 : i32
    scf.if %11 {
      %c0_10 = arith.constant 0 : index
      %c0_11 = arith.constant 0 : index
      %12 = vector.load %arg7[%c0_10, %c0_11] : memref<32x384xf32, #tpu.memory_space<vmem>>, vector<32x384xf32>
      %c0_12 = arith.constant 0 : index
      %c0_13 = arith.constant 0 : index
      %13 = vector.load %arg5[%c0_12, %c0_13] : memref<1x384xbf16, #tpu.memory_space<vmem>>, vector<1x384xbf16>
      %14 = arith.extf %13 : vector<1x384xbf16> to vector<1x384xf32>
      %15 = vector.broadcast %14 : vector<1x384xf32> to vector<32x384xf32>
      %16 = arith.addf %12, %15 : vector<32x384xf32>
      %17 = arith.truncf %16 : vector<32x384xf32> to vector<32x384xbf16>
      %c0_14 = arith.constant 0 : index
      %c0_15 = arith.constant 0 : index
      %18 = vector.load %arg6[%c0_14, %c0_15] : memref<32x384xbf16, #tpu.memory_space<vmem>>, vector<32x384xbf16>
      tpu.vector_store %arg6[%c0_14, %c0_15], %17 {strides = array<i32>} : memref<32x384xbf16, #tpu.memory_space<vmem>>, vector<32x384xbf16>,
    } else {
    }
    return
  }
  func.func @transform_0(%arg0: i32, %arg1: i32, %arg2: i32) -> (i32, i32) {
    %c0_i32 = arith.constant 0 : i32
    return %arg0, %arg2 : i32, i32
  }
  func.func @transform_1(%arg0: i32, %arg1: i32, %arg2: i32) -> (i32, i32) {
    %c0_i32 = arith.constant 0 : i32
    return %arg2, %arg1 : i32, i32
  }
  func.func @transform_2(%arg0: i32, %arg1: i32, %arg2: i32) -> (i32, i32) {
    %c0_i32 = arith.constant 0 : i32
    %c0_i32_0 = arith.constant 0 : i32
    return %c0_i32, %arg1 : i32, i32
  }
  func.func @transform_3(%arg0: i32, %arg1: i32, %arg2: i32) -> (i32, i32) {
    %c0_i32 = arith.constant 0 : i32
    return %arg0, %arg1 : i32, i32
  }
}

module attributes {stable_mosaic.version = 11 : i64} {
  func.func @_flash_attn_kernel(%arg0: i32, %arg1: i32, %arg2: i32, %arg3: memref<1x16x32xbf16, #tpu.memory_space<vmem>>, %arg4: memref<1x16x32xbf16, #tpu.memory_space<vmem>>, %arg5: memref<1x16x32xbf16, #tpu.memory_space<vmem>>, %arg6: memref<1x16x32xbf16, #tpu.memory_space<vmem>>, %arg7: memref<16x1xf32, #tpu.memory_space<vmem>>, %arg8: memref<16x1xf32, #tpu.memory_space<vmem>>, %arg9: memref<16x32xf32, #tpu.memory_space<vmem>>) attributes {dimension_semantics = [#tpu.dimension_semantics<parallel>, #tpu.dimension_semantics<parallel>, #tpu.dimension_semantics<arbitrary>], iteration_bounds = array<i64: 8, 1, 1>, scalar_prefetch = 0 : i64, scratch_operands = 3 : i64, tpu.core_type = #tpu.core_type<tc>, window_params = [{transform_indices = @transform_0, window_bounds = array<i64: 1, 16, 32>}, {transform_indices = @transform_1, window_bounds = array<i64: 1, 16, 32>}, {transform_indices = @transform_2, window_bounds = array<i64: 1, 16, 32>}, {transform_indices = @transform_3, window_bounds = array<i64: 1, 16, 32>}]} {
    %0 = arith.cmpi sle, %arg2, %arg1 : i32
    %1 = arith.extui %0 : i1 to i32
    %c0_i32 = arith.constant 0 : i32
    %2 = arith.cmpi ne, %1, %c0_i32 : i32
    scf.if %2 {
      %c0_i32_0 = arith.constant 0 : i32
      %3 = arith.cmpi eq, %arg2, %c0_i32_0 : i32
      %4 = arith.extui %3 : i1 to i32
      %c0_i32_1 = arith.constant 0 : i32
      %5 = arith.cmpi ne, %4, %c0_i32_1 : i32
      scf.if %5 {
        %cst_28 = arith.constant -1.000000e+30 : f32
        %50 = vector.broadcast %cst_28 : f32 to vector<16x1xf32>
        %c0_29 = arith.constant 0 : index
        %c0_30 = arith.constant 0 : index
        %51 = vector.load %arg7[%c0_29, %c0_30] : memref<16x1xf32, #tpu.memory_space<vmem>>, vector<16x1xf32>
        tpu.vector_store %arg7[%c0_29, %c0_30], %50 {strides = array<i32>} : memref<16x1xf32, #tpu.memory_space<vmem>>, vector<16x1xf32>,
        %cst_31 = arith.constant 0.000000e+00 : f32
        %52 = vector.broadcast %cst_31 : f32 to vector<16x1xf32>
        %c0_32 = arith.constant 0 : index
        %c0_33 = arith.constant 0 : index
        %53 = vector.load %arg8[%c0_32, %c0_33] : memref<16x1xf32, #tpu.memory_space<vmem>>, vector<16x1xf32>
        tpu.vector_store %arg8[%c0_32, %c0_33], %52 {strides = array<i32>} : memref<16x1xf32, #tpu.memory_space<vmem>>, vector<16x1xf32>,
        %cst_34 = arith.constant 0.000000e+00 : f32
        %54 = vector.broadcast %cst_34 : f32 to vector<16x32xf32>
        %c0_35 = arith.constant 0 : index
        %c0_36 = arith.constant 0 : index
        %55 = vector.load %arg9[%c0_35, %c0_36] : memref<16x32xf32, #tpu.memory_space<vmem>>, vector<16x32xf32>
        tpu.vector_store %arg9[%c0_35, %c0_36], %54 {strides = array<i32>} : memref<16x32xf32, #tpu.memory_space<vmem>>, vector<16x32xf32>,
      } else {
      }
      %c0 = arith.constant 0 : index
      %c0_2 = arith.constant 0 : index
      %c0_3 = arith.constant 0 : index
      %6 = vector.load %arg3[%c0, %c0_2, %c0_3] : memref<1x16x32xbf16, #tpu.memory_space<vmem>>, vector<1x16x32xbf16>
      %7 = vector.shape_cast %6 : vector<1x16x32xbf16> to vector<16x32xbf16>
      %c0_4 = arith.constant 0 : index
      %c0_5 = arith.constant 0 : index
      %c0_6 = arith.constant 0 : index
      %8 = vector.load %arg4[%c0_4, %c0_5, %c0_6] : memref<1x16x32xbf16, #tpu.memory_space<vmem>>, vector<1x16x32xbf16>
      %9 = vector.shape_cast %8 : vector<1x16x32xbf16> to vector<16x32xbf16>
      %cst = arith.constant dense<0.000000e+00> : vector<16x16xf32>
      %10 = tpu.matmul %7, %9, %cst {dimension_numbers = #tpu.dot_dimension_numbers<[1], [1], [0], [0], [0, 0, 1, 0], [], []>} : vector<16x32xbf16>, vector<16x32xbf16>, vector<16x16xf32> -> vector<16x16xf32>
      %c16_i32 = arith.constant 16 : i32
      %11 = arith.muli %arg1, %c16_i32 : i32
      %12 = tpu.iota {dimensions = array<i32: 0>} : vector<16x16xi32>
      %13 = vector.broadcast %11 : i32 to vector<16x16xi32>
      %14 = arith.addi %13, %12 : vector<16x16xi32>
      %c16_i32_7 = arith.constant 16 : i32
      %15 = arith.muli %arg2, %c16_i32_7 : i32
      %16 = tpu.iota {dimensions = array<i32: 1>} : vector<16x16xi32>
      %17 = vector.broadcast %15 : i32 to vector<16x16xi32>
      %18 = arith.addi %17, %16 : vector<16x16xi32>
      %19 = arith.cmpi sgt, %18, %14 : vector<16x16xi32>
      %cst_8 = arith.constant -1.000000e+30 : f32
      %20 = vector.broadcast %cst_8 : f32 to vector<16x16xf32>
      %21 = arith.select %19, %20, %10 : vector<16x16xi1>, vector<16x16xf32>
      %c0_9 = arith.constant 0 : index
      %c0_10 = arith.constant 0 : index
      %22 = vector.load %arg7[%c0_9, %c0_10] : memref<16x1xf32, #tpu.memory_space<vmem>>, vector<16x1xf32>
      %cst_11 = arith.constant dense<0xFF800000> : vector<16xf32>
      %23 = vector.multi_reduction <maximumf>, %21, %cst_11 [1] : vector<16x16xf32> to vector<16xf32>
      %24 = vector.shape_cast %23 : vector<16xf32> to vector<16x1xf32>
      %25 = arith.maximumf %22, %24 : vector<16x1xf32>
      %26 = arith.subf %22, %25 : vector<16x1xf32>
      %27 = math.exp %26 : vector<16x1xf32>
      %28 = vector.broadcast %25 : vector<16x1xf32> to vector<16x16xf32>
      %29 = arith.subf %21, %28 : vector<16x16xf32>
      %30 = math.exp %29 : vector<16x16xf32>
      %c0_12 = arith.constant 0 : index
      %c0_13 = arith.constant 0 : index
      %31 = vector.load %arg8[%c0_12, %c0_13] : memref<16x1xf32, #tpu.memory_space<vmem>>, vector<16x1xf32>
      %32 = arith.mulf %27, %31 : vector<16x1xf32>
      %cst_14 = arith.constant dense<0.000000e+00> : vector<16xf32>
      %33 = vector.multi_reduction <add>, %30, %cst_14 [1] : vector<16x16xf32> to vector<16xf32>
      %34 = vector.shape_cast %33 : vector<16xf32> to vector<16x1xf32>
      %35 = arith.addf %32, %34 : vector<16x1xf32>
      %c0_15 = arith.constant 0 : index
      %c0_16 = arith.constant 0 : index
      %36 = vector.load %arg8[%c0_15, %c0_16] : memref<16x1xf32, #tpu.memory_space<vmem>>, vector<16x1xf32>
      tpu.vector_store %arg8[%c0_15, %c0_16], %35 {strides = array<i32>} : memref<16x1xf32, #tpu.memory_space<vmem>>, vector<16x1xf32>,
      %c0_17 = arith.constant 0 : index
      %c0_18 = arith.constant 0 : index
      %37 = vector.load %arg9[%c0_17, %c0_18] : memref<16x32xf32, #tpu.memory_space<vmem>>, vector<16x32xf32>
      %38 = vector.broadcast %27 : vector<16x1xf32> to vector<16x32xf32>
      %39 = arith.mulf %38, %37 : vector<16x32xf32>
      %40 = arith.truncf %30 : vector<16x16xf32> to vector<16x16xbf16>
      %c0_19 = arith.constant 0 : index
      %c0_20 = arith.constant 0 : index
      %c0_21 = arith.constant 0 : index
      %41 = vector.load %arg5[%c0_19, %c0_20, %c0_21] : memref<1x16x32xbf16, #tpu.memory_space<vmem>>, vector<1x16x32xbf16>
      %42 = vector.shape_cast %41 : vector<1x16x32xbf16> to vector<16x32xbf16>
      %cst_22 = arith.constant dense<0.000000e+00> : vector<16x32xf32>
      %43 = tpu.matmul %40, %42, %cst_22 {dimension_numbers = #tpu.dot_dimension_numbers<[1], [0], [0], [1], [0, 0, 1, 1], [], []>} : vector<16x16xbf16>, vector<16x32xbf16>, vector<16x32xf32> -> vector<16x32xf32>
      %44 = arith.addf %39, %43 : vector<16x32xf32>
      %c0_23 = arith.constant 0 : index
      %c0_24 = arith.constant 0 : index
      %45 = vector.load %arg9[%c0_23, %c0_24] : memref<16x32xf32, #tpu.memory_space<vmem>>, vector<16x32xf32>
      tpu.vector_store %arg9[%c0_23, %c0_24], %44 {strides = array<i32>} : memref<16x32xf32, #tpu.memory_space<vmem>>, vector<16x32xf32>,
      %c0_25 = arith.constant 0 : index
      %c0_26 = arith.constant 0 : index
      %46 = vector.load %arg7[%c0_25, %c0_26] : memref<16x1xf32, #tpu.memory_space<vmem>>, vector<16x1xf32>
      tpu.vector_store %arg7[%c0_25, %c0_26], %25 {strides = array<i32>} : memref<16x1xf32, #tpu.memory_space<vmem>>, vector<16x1xf32>,
      %47 = arith.cmpi eq, %arg2, %arg1 : i32
      %48 = arith.extui %47 : i1 to i32
      %c0_i32_27 = arith.constant 0 : i32
      %49 = arith.cmpi ne, %48, %c0_i32_27 : i32
      scf.if %49 {
        %c0_28 = arith.constant 0 : index
        %c0_29 = arith.constant 0 : index
        %50 = vector.load %arg9[%c0_28, %c0_29] : memref<16x32xf32, #tpu.memory_space<vmem>>, vector<16x32xf32>
        %c0_30 = arith.constant 0 : index
        %c0_31 = arith.constant 0 : index
        %51 = vector.load %arg8[%c0_30, %c0_31] : memref<16x1xf32, #tpu.memory_space<vmem>>, vector<16x1xf32>
        %52 = tpu.reciprocal %51 {approx = true} : vector<16x1xf32> -> vector<16x1xf32>
        %53 = vector.broadcast %52 : vector<16x1xf32> to vector<16x32xf32>
        %54 = arith.mulf %50, %53 : vector<16x32xf32>
        %55 = arith.truncf %54 : vector<16x32xf32> to vector<16x32xbf16>
        %c0_32 = arith.constant 0 : index
        %c0_33 = arith.constant 0 : index
        %c0_34 = arith.constant 0 : index
        %56 = vector.load %arg6[%c0_32, %c0_33, %c0_34] : memref<1x16x32xbf16, #tpu.memory_space<vmem>>, vector<1x16x32xbf16>
        %57 = vector.shape_cast %56 : vector<1x16x32xbf16> to vector<16x32xbf16>
        %58 = vector.shape_cast %55 : vector<16x32xbf16> to vector<1x16x32xbf16>
        tpu.vector_store %arg6[%c0_32, %c0_33, %c0_34], %58 {strides = array<i32>} : memref<1x16x32xbf16, #tpu.memory_space<vmem>>, vector<1x16x32xbf16>,
      } else {
      }
    } else {
    }
    return
  }
  func.func @transform_0(%arg0: i32, %arg1: i32, %arg2: i32) -> (i32, i32, i32) {
    %c0_i32 = arith.constant 0 : i32
    %c0_i32_0 = arith.constant 0 : i32
    return %arg0, %arg1, %c0_i32 : i32, i32, i32
  }
  func.func @transform_1(%arg0: i32, %arg1: i32, %arg2: i32) -> (i32, i32, i32) {
    %0 = arith.minsi %arg2, %arg1 : i32
    %c0_i32 = arith.constant 0 : i32
    %c0_i32_0 = arith.constant 0 : i32
    return %arg0, %0, %c0_i32 : i32, i32, i32
  }
  func.func @transform_2(%arg0: i32, %arg1: i32, %arg2: i32) -> (i32, i32, i32) {
    %0 = arith.minsi %arg2, %arg1 : i32
    %c0_i32 = arith.constant 0 : i32
    %c0_i32_0 = arith.constant 0 : i32
    return %arg0, %0, %c0_i32 : i32, i32, i32
  }
  func.func @transform_3(%arg0: i32, %arg1: i32, %arg2: i32) -> (i32, i32, i32) {
    %c0_i32 = arith.constant 0 : i32
    %c0_i32_0 = arith.constant 0 : i32
    return %arg0, %arg1, %c0_i32 : i32, i32, i32
  }
}

module attributes {stable_mosaic.version = 11 : i64} {
  func.func @_matmul_add_ln_kernel(%arg0: i32, %arg1: i32, %arg2: memref<32x128xbf16, #tpu.memory_space<vmem>>, %arg3: memref<128x128xbf16, #tpu.memory_space<vmem>>, %arg4: memref<1x128xbf16, #tpu.memory_space<vmem>>, %arg5: memref<32x128xbf16, #tpu.memory_space<vmem>>, %arg6: memref<1x128xbf16, #tpu.memory_space<vmem>>, %arg7: memref<1x128xbf16, #tpu.memory_space<vmem>>, %arg8: memref<32x128xbf16, #tpu.memory_space<vmem>>, %arg9: memref<32x128xf32, #tpu.memory_space<vmem>>) attributes {dimension_semantics = [#tpu.dimension_semantics<parallel>, #tpu.dimension_semantics<arbitrary>], iteration_bounds = array<i64: 1, 1>, scalar_prefetch = 0 : i64, scratch_operands = 1 : i64, tpu.core_type = #tpu.core_type<tc>, window_params = [{transform_indices = @transform_0, window_bounds = array<i64: 32, 128>}, {transform_indices = @transform_1, window_bounds = array<i64: 128, 128>}, {pipeline_mode = #tpu.pipeline_mode<synchronous>, transform_indices = @transform_2, window_bounds = array<i64: 1, 128>}, {transform_indices = @transform_3, window_bounds = array<i64: 32, 128>}, {pipeline_mode = #tpu.pipeline_mode<synchronous>, transform_indices = @transform_4, window_bounds = array<i64: 1, 128>}, {pipeline_mode = #tpu.pipeline_mode<synchronous>, transform_indices = @transform_5, window_bounds = array<i64: 1, 128>}, {transform_indices = @transform_6, window_bounds = array<i64: 32, 128>}]} {
    %c0_i32 = arith.constant 0 : i32
    %0 = arith.cmpi eq, %arg1, %c0_i32 : i32
    %1 = arith.extui %0 : i1 to i32
    %c0_i32_0 = arith.constant 0 : i32
    %2 = arith.cmpi ne, %1, %c0_i32_0 : i32
    scf.if %2 {
      %cst_10 = arith.constant 0.000000e+00 : f32
      %12 = vector.broadcast %cst_10 : f32 to vector<32x128xf32>
      %c0_11 = arith.constant 0 : index
      %c0_12 = arith.constant 0 : index
      %13 = vector.load %arg9[%c0_11, %c0_12] : memref<32x128xf32, #tpu.memory_space<vmem>>, vector<32x128xf32>
      tpu.vector_store %arg9[%c0_11, %c0_12], %12 {strides = array<i32>} : memref<32x128xf32, #tpu.memory_space<vmem>>, vector<32x128xf32>,
    } else {
    }
    %c0 = arith.constant 0 : index
    %c0_1 = arith.constant 0 : index
    %3 = vector.load %arg9[%c0, %c0_1] : memref<32x128xf32, #tpu.memory_space<vmem>>, vector<32x128xf32>
    %c0_2 = arith.constant 0 : index
    %c0_3 = arith.constant 0 : index
    %4 = vector.load %arg2[%c0_2, %c0_3] : memref<32x128xbf16, #tpu.memory_space<vmem>>, vector<32x128xbf16>
    %c0_4 = arith.constant 0 : index
    %c0_5 = arith.constant 0 : index
    %5 = vector.load %arg3[%c0_4, %c0_5] : memref<128x128xbf16, #tpu.memory_space<vmem>>, vector<128x128xbf16>
    %cst = arith.constant dense<0.000000e+00> : vector<32x128xf32>
    %6 = tpu.matmul %4, %5, %cst {dimension_numbers = #tpu.dot_dimension_numbers<[1], [0], [0], [1], [0, 0, 1, 1], [], []>} : vector<32x128xbf16>, vector<128x128xbf16>, vector<32x128xf32> -> vector<32x128xf32>
    %7 = arith.addf %3, %6 : vector<32x128xf32>
    %c0_6 = arith.constant 0 : index
    %c0_7 = arith.constant 0 : index
    %8 = vector.load %arg9[%c0_6, %c0_7] : memref<32x128xf32, #tpu.memory_space<vmem>>, vector<32x128xf32>
    tpu.vector_store %arg9[%c0_6, %c0_7], %7 {strides = array<i32>} : memref<32x128xf32, #tpu.memory_space<vmem>>, vector<32x128xf32>,
    %c0_i32_8 = arith.constant 0 : i32
    %9 = arith.cmpi eq, %arg1, %c0_i32_8 : i32
    %10 = arith.extui %9 : i1 to i32
    %c0_i32_9 = arith.constant 0 : i32
    %11 = arith.cmpi ne, %10, %c0_i32_9 : i32
    scf.if %11 {
      %c0_10 = arith.constant 0 : index
      %c0_11 = arith.constant 0 : index
      %12 = vector.load %arg9[%c0_10, %c0_11] : memref<32x128xf32, #tpu.memory_space<vmem>>, vector<32x128xf32>
      %c0_12 = arith.constant 0 : index
      %c0_13 = arith.constant 0 : index
      %13 = vector.load %arg4[%c0_12, %c0_13] : memref<1x128xbf16, #tpu.memory_space<vmem>>, vector<1x128xbf16>
      %14 = arith.extf %13 : vector<1x128xbf16> to vector<1x128xf32>
      %15 = vector.broadcast %14 : vector<1x128xf32> to vector<32x128xf32>
      %16 = arith.addf %12, %15 : vector<32x128xf32>
      %c0_14 = arith.constant 0 : index
      %c0_15 = arith.constant 0 : index
      %17 = vector.load %arg5[%c0_14, %c0_15] : memref<32x128xbf16, #tpu.memory_space<vmem>>, vector<32x128xbf16>
      %18 = arith.extf %17 : vector<32x128xbf16> to vector<32x128xf32>
      %19 = arith.addf %16, %18 : vector<32x128xf32>
      %cst_16 = arith.constant dense<0.000000e+00> : vector<32xf32>
      %20 = vector.multi_reduction <add>, %19, %cst_16 [1] : vector<32x128xf32> to vector<32xf32>
      %21 = vector.shape_cast %20 : vector<32xf32> to vector<32x1xf32>
      %cst_17 = arith.constant 1.280000e+02 : f32
      %22 = vector.broadcast %cst_17 : f32 to vector<32x1xf32>
      %23 = arith.divf %21, %22 : vector<32x1xf32>
      %24 = vector.broadcast %23 : vector<32x1xf32> to vector<32x128xf32>
      %25 = arith.subf %19, %24 : vector<32x128xf32>
      %26 = arith.mulf %25, %25 : vector<32x128xf32>
      %cst_18 = arith.constant dense<0.000000e+00> : vector<32xf32>
      %27 = vector.multi_reduction <add>, %26, %cst_18 [1] : vector<32x128xf32> to vector<32xf32>
      %28 = vector.shape_cast %27 : vector<32xf32> to vector<32x1xf32>
      %cst_19 = arith.constant 1.280000e+02 : f32
      %29 = vector.broadcast %cst_19 : f32 to vector<32x1xf32>
      %30 = arith.divf %28, %29 : vector<32x1xf32>
      %31 = vector.broadcast %23 : vector<32x1xf32> to vector<32x128xf32>
      %32 = arith.subf %19, %31 : vector<32x128xf32>
      %cst_20 = arith.constant 9.99999974E-6 : f32
      %33 = vector.broadcast %cst_20 : f32 to vector<32x1xf32>
      %34 = arith.addf %30, %33 : vector<32x1xf32>
      %35 = math.rsqrt %34 : vector<32x1xf32>
      %36 = vector.broadcast %35 : vector<32x1xf32> to vector<32x128xf32>
      %37 = arith.mulf %32, %36 : vector<32x128xf32>
      %c0_21 = arith.constant 0 : index
      %c0_22 = arith.constant 0 : index
      %38 = vector.load %arg6[%c0_21, %c0_22] : memref<1x128xbf16, #tpu.memory_space<vmem>>, vector<1x128xbf16>
      %39 = arith.extf %38 : vector<1x128xbf16> to vector<1x128xf32>
      %40 = vector.broadcast %39 : vector<1x128xf32> to vector<32x128xf32>
      %41 = arith.mulf %37, %40 : vector<32x128xf32>
      %c0_23 = arith.constant 0 : index
      %c0_24 = arith.constant 0 : index
      %42 = vector.load %arg7[%c0_23, %c0_24] : memref<1x128xbf16, #tpu.memory_space<vmem>>, vector<1x128xbf16>
      %43 = arith.extf %42 : vector<1x128xbf16> to vector<1x128xf32>
      %44 = vector.broadcast %43 : vector<1x128xf32> to vector<32x128xf32>
      %45 = arith.addf %41, %44 : vector<32x128xf32>
      %46 = arith.truncf %45 : vector<32x128xf32> to vector<32x128xbf16>
      %c0_25 = arith.constant 0 : index
      %c0_26 = arith.constant 0 : index
      %47 = vector.load %arg8[%c0_25, %c0_26] : memref<32x128xbf16, #tpu.memory_space<vmem>>, vector<32x128xbf16>
      tpu.vector_store %arg8[%c0_25, %c0_26], %46 {strides = array<i32>} : memref<32x128xbf16, #tpu.memory_space<vmem>>, vector<32x128xbf16>,
    } else {
    }
    return
  }
  func.func @transform_0(%arg0: i32, %arg1: i32) -> (i32, i32) {
    %c0_i32 = arith.constant 0 : i32
    return %arg0, %arg1 : i32, i32
  }
  func.func @transform_1(%arg0: i32, %arg1: i32) -> (i32, i32) {
    %c0_i32 = arith.constant 0 : i32
    %c0_i32_0 = arith.constant 0 : i32
    return %arg1, %c0_i32 : i32, i32
  }
  func.func @transform_2(%arg0: i32, %arg1: i32) -> (i32, i32) {
    %c0_i32 = arith.constant 0 : i32
    %c0_i32_0 = arith.constant 0 : i32
    %c0_i32_1 = arith.constant 0 : i32
    return %c0_i32, %c0_i32_0 : i32, i32
  }
  func.func @transform_3(%arg0: i32, %arg1: i32) -> (i32, i32) {
    %c0_i32 = arith.constant 0 : i32
    %c0_i32_0 = arith.constant 0 : i32
    return %arg0, %c0_i32 : i32, i32
  }
  func.func @transform_4(%arg0: i32, %arg1: i32) -> (i32, i32) {
    %c0_i32 = arith.constant 0 : i32
    %c0_i32_0 = arith.constant 0 : i32
    %c0_i32_1 = arith.constant 0 : i32
    return %c0_i32, %c0_i32_0 : i32, i32
  }
  func.func @transform_5(%arg0: i32, %arg1: i32) -> (i32, i32) {
    %c0_i32 = arith.constant 0 : i32
    %c0_i32_0 = arith.constant 0 : i32
    %c0_i32_1 = arith.constant 0 : i32
    return %c0_i32, %c0_i32_0 : i32, i32
  }
  func.func @transform_6(%arg0: i32, %arg1: i32) -> (i32, i32) {
    %c0_i32 = arith.constant 0 : i32
    %c0_i32_0 = arith.constant 0 : i32
    return %arg0, %c0_i32 : i32, i32
  }
}

module attributes {stable_mosaic.version = 11 : i64} {
  func.func @_matmul_kernel(%arg0: i32, %arg1: i32, %arg2: i32, %arg3: memref<32x128xbf16, #tpu.memory_space<vmem>>, %arg4: memref<128x512xbf16, #tpu.memory_space<vmem>>, %arg5: memref<1x512xbf16, #tpu.memory_space<vmem>>, %arg6: memref<32x512xbf16, #tpu.memory_space<vmem>>, %arg7: memref<32x512xf32, #tpu.memory_space<vmem>>) attributes {dimension_semantics = [#tpu.dimension_semantics<parallel>, #tpu.dimension_semantics<parallel>, #tpu.dimension_semantics<arbitrary>], iteration_bounds = array<i64: 1, 1, 1>, scalar_prefetch = 0 : i64, scratch_operands = 1 : i64, tpu.core_type = #tpu.core_type<tc>, window_params = [{transform_indices = @transform_0, window_bounds = array<i64: 32, 128>}, {transform_indices = @transform_1, window_bounds = array<i64: 128, 512>}, {transform_indices = @transform_2, window_bounds = array<i64: 1, 512>}, {transform_indices = @transform_3, window_bounds = array<i64: 32, 512>}]} {
    %c0_i32 = arith.constant 0 : i32
    %0 = arith.cmpi eq, %arg2, %c0_i32 : i32
    %1 = arith.extui %0 : i1 to i32
    %c0_i32_0 = arith.constant 0 : i32
    %2 = arith.cmpi ne, %1, %c0_i32_0 : i32
    scf.if %2 {
      %cst_10 = arith.constant 0.000000e+00 : f32
      %12 = vector.broadcast %cst_10 : f32 to vector<32x512xf32>
      %c0_11 = arith.constant 0 : index
      %c0_12 = arith.constant 0 : index
      %13 = vector.load %arg7[%c0_11, %c0_12] : memref<32x512xf32, #tpu.memory_space<vmem>>, vector<32x512xf32>
      tpu.vector_store %arg7[%c0_11, %c0_12], %12 {strides = array<i32>} : memref<32x512xf32, #tpu.memory_space<vmem>>, vector<32x512xf32>,
    } else {
    }
    %c0 = arith.constant 0 : index
    %c0_1 = arith.constant 0 : index
    %3 = vector.load %arg7[%c0, %c0_1] : memref<32x512xf32, #tpu.memory_space<vmem>>, vector<32x512xf32>
    %c0_2 = arith.constant 0 : index
    %c0_3 = arith.constant 0 : index
    %4 = vector.load %arg3[%c0_2, %c0_3] : memref<32x128xbf16, #tpu.memory_space<vmem>>, vector<32x128xbf16>
    %c0_4 = arith.constant 0 : index
    %c0_5 = arith.constant 0 : index
    %5 = vector.load %arg4[%c0_4, %c0_5] : memref<128x512xbf16, #tpu.memory_space<vmem>>, vector<128x512xbf16>
    %cst = arith.constant dense<0.000000e+00> : vector<32x512xf32>
    %6 = tpu.matmul %4, %5, %cst {dimension_numbers = #tpu.dot_dimension_numbers<[1], [0], [0], [1], [0, 0, 1, 1], [], []>} : vector<32x128xbf16>, vector<128x512xbf16>, vector<32x512xf32> -> vector<32x512xf32>
    %7 = arith.addf %3, %6 : vector<32x512xf32>
    %c0_6 = arith.constant 0 : index
    %c0_7 = arith.constant 0 : index
    %8 = vector.load %arg7[%c0_6, %c0_7] : memref<32x512xf32, #tpu.memory_space<vmem>>, vector<32x512xf32>
    tpu.vector_store %arg7[%c0_6, %c0_7], %7 {strides = array<i32>} : memref<32x512xf32, #tpu.memory_space<vmem>>, vector<32x512xf32>,
    %c0_i32_8 = arith.constant 0 : i32
    %9 = arith.cmpi eq, %arg2, %c0_i32_8 : i32
    %10 = arith.extui %9 : i1 to i32
    %c0_i32_9 = arith.constant 0 : i32
    %11 = arith.cmpi ne, %10, %c0_i32_9 : i32
    scf.if %11 {
      %c0_10 = arith.constant 0 : index
      %c0_11 = arith.constant 0 : index
      %12 = vector.load %arg7[%c0_10, %c0_11] : memref<32x512xf32, #tpu.memory_space<vmem>>, vector<32x512xf32>
      %c0_12 = arith.constant 0 : index
      %c0_13 = arith.constant 0 : index
      %13 = vector.load %arg5[%c0_12, %c0_13] : memref<1x512xbf16, #tpu.memory_space<vmem>>, vector<1x512xbf16>
      %14 = arith.extf %13 : vector<1x512xbf16> to vector<1x512xf32>
      %15 = vector.broadcast %14 : vector<1x512xf32> to vector<32x512xf32>
      %16 = arith.addf %12, %15 : vector<32x512xf32>
      %cst_14 = arith.constant 0.707106769 : f32
      %17 = vector.broadcast %cst_14 : f32 to vector<32x512xf32>
      %18 = arith.mulf %16, %17 : vector<32x512xf32>
      %19 = math.absf %18 : vector<32x512xf32>
      %cst_15 = arith.constant 0.327591091 : f32
      %20 = vector.broadcast %cst_15 : f32 to vector<32x512xf32>
      %21 = arith.mulf %20, %19 : vector<32x512xf32>
      %cst_16 = arith.constant 1.000000e+00 : f32
      %22 = vector.broadcast %cst_16 : f32 to vector<32x512xf32>
      %23 = arith.addf %22, %21 : vector<32x512xf32>
      %cst_17 = arith.constant 1.000000e+00 : f32
      %24 = vector.broadcast %cst_17 : f32 to vector<32x512xf32>
      %25 = arith.divf %24, %23 : vector<32x512xf32>
      %cst_18 = arith.constant 1.06140542 : f32
      %26 = vector.broadcast %cst_18 : f32 to vector<32x512xf32>
      %27 = arith.mulf %25, %26 : vector<32x512xf32>
      %cst_19 = arith.constant -1.45315206 : f32
      %28 = vector.broadcast %cst_19 : f32 to vector<32x512xf32>
      %29 = arith.addf %28, %27 : vector<32x512xf32>
      %30 = arith.mulf %25, %29 : vector<32x512xf32>
      %cst_20 = arith.constant 1.42141378 : f32
      %31 = vector.broadcast %cst_20 : f32 to vector<32x512xf32>
      %32 = arith.addf %31, %30 : vector<32x512xf32>
      %33 = arith.mulf %25, %32 : vector<32x512xf32>
      %cst_21 = arith.constant -0.284496725 : f32
      %34 = vector.broadcast %cst_21 : f32 to vector<32x512xf32>
      %35 = arith.addf %34, %33 : vector<32x512xf32>
      %36 = arith.mulf %25, %35 : vector<32x512xf32>
      %cst_22 = arith.constant 0.254829586 : f32
      %37 = vector.broadcast %cst_22 : f32 to vector<32x512xf32>
      %38 = arith.addf %37, %36 : vector<32x512xf32>
      %39 = arith.mulf %25, %38 : vector<32x512xf32>
      %cst_23 = arith.constant 0.000000e+00 : f32
      %40 = vector.broadcast %cst_23 : f32 to vector<32x512xf32>
      %41 = arith.subf %40, %19 : vector<32x512xf32>
      %42 = arith.mulf %41, %19 : vector<32x512xf32>
      %43 = math.exp %42 : vector<32x512xf32>
      %44 = arith.mulf %39, %43 : vector<32x512xf32>
      %cst_24 = arith.constant 1.000000e+00 : f32
      %45 = vector.broadcast %cst_24 : f32 to vector<32x512xf32>
      %46 = arith.subf %45, %44 : vector<32x512xf32>
      %cst_25 = arith.constant 0.000000e+00 : f32
      %47 = vector.broadcast %cst_25 : f32 to vector<32x512xf32>
      %48 = arith.cmpf oge, %18, %47 : vector<32x512xf32>
      %cst_26 = arith.constant 0.000000e+00 : f32
      %49 = vector.broadcast %cst_26 : f32 to vector<32x512xf32>
      %50 = arith.subf %49, %46 : vector<32x512xf32>
      %51 = arith.select %48, %46, %50 : vector<32x512xi1>, vector<32x512xf32>
      %cst_27 = arith.constant 5.000000e-01 : f32
      %52 = vector.broadcast %cst_27 : f32 to vector<32x512xf32>
      %53 = arith.mulf %52, %16 : vector<32x512xf32>
      %cst_28 = arith.constant 1.000000e+00 : f32
      %54 = vector.broadcast %cst_28 : f32 to vector<32x512xf32>
      %55 = arith.addf %54, %51 : vector<32x512xf32>
      %56 = arith.mulf %53, %55 : vector<32x512xf32>
      %57 = arith.truncf %56 : vector<32x512xf32> to vector<32x512xbf16>
      %c0_29 = arith.constant 0 : index
      %c0_30 = arith.constant 0 : index
      %58 = vector.load %arg6[%c0_29, %c0_30] : memref<32x512xbf16, #tpu.memory_space<vmem>>, vector<32x512xbf16>
      tpu.vector_store %arg6[%c0_29, %c0_30], %57 {strides = array<i32>} : memref<32x512xbf16, #tpu.memory_space<vmem>>, vector<32x512xbf16>,
    } else {
    }
    return
  }
  func.func @transform_0(%arg0: i32, %arg1: i32, %arg2: i32) -> (i32, i32) {
    %c0_i32 = arith.constant 0 : i32
    return %arg0, %arg2 : i32, i32
  }
  func.func @transform_1(%arg0: i32, %arg1: i32, %arg2: i32) -> (i32, i32) {
    %c0_i32 = arith.constant 0 : i32
    return %arg2, %arg1 : i32, i32
  }
  func.func @transform_2(%arg0: i32, %arg1: i32, %arg2: i32) -> (i32, i32) {
    %c0_i32 = arith.constant 0 : i32
    %c0_i32_0 = arith.constant 0 : i32
    return %c0_i32, %arg1 : i32, i32
  }
  func.func @transform_3(%arg0: i32, %arg1: i32, %arg2: i32) -> (i32, i32) {
    %c0_i32 = arith.constant 0 : i32
    return %arg0, %arg1 : i32, i32
  }
}

module attributes {stable_mosaic.version = 11 : i64} {
  func.func @_matmul_add_ln_kernel(%arg0: i32, %arg1: i32, %arg2: memref<32x512xbf16, #tpu.memory_space<vmem>>, %arg3: memref<512x128xbf16, #tpu.memory_space<vmem>>, %arg4: memref<1x128xbf16, #tpu.memory_space<vmem>>, %arg5: memref<32x128xbf16, #tpu.memory_space<vmem>>, %arg6: memref<1x128xbf16, #tpu.memory_space<vmem>>, %arg7: memref<1x128xbf16, #tpu.memory_space<vmem>>, %arg8: memref<32x128xbf16, #tpu.memory_space<vmem>>, %arg9: memref<32x128xf32, #tpu.memory_space<vmem>>) attributes {dimension_semantics = [#tpu.dimension_semantics<parallel>, #tpu.dimension_semantics<arbitrary>], iteration_bounds = array<i64: 1, 1>, scalar_prefetch = 0 : i64, scratch_operands = 1 : i64, tpu.core_type = #tpu.core_type<tc>, window_params = [{transform_indices = @transform_0, window_bounds = array<i64: 32, 512>}, {transform_indices = @transform_1, window_bounds = array<i64: 512, 128>}, {pipeline_mode = #tpu.pipeline_mode<synchronous>, transform_indices = @transform_2, window_bounds = array<i64: 1, 128>}, {transform_indices = @transform_3, window_bounds = array<i64: 32, 128>}, {pipeline_mode = #tpu.pipeline_mode<synchronous>, transform_indices = @transform_4, window_bounds = array<i64: 1, 128>}, {pipeline_mode = #tpu.pipeline_mode<synchronous>, transform_indices = @transform_5, window_bounds = array<i64: 1, 128>}, {transform_indices = @transform_6, window_bounds = array<i64: 32, 128>}]} {
    %c0_i32 = arith.constant 0 : i32
    %0 = arith.cmpi eq, %arg1, %c0_i32 : i32
    %1 = arith.extui %0 : i1 to i32
    %c0_i32_0 = arith.constant 0 : i32
    %2 = arith.cmpi ne, %1, %c0_i32_0 : i32
    scf.if %2 {
      %cst_10 = arith.constant 0.000000e+00 : f32
      %12 = vector.broadcast %cst_10 : f32 to vector<32x128xf32>
      %c0_11 = arith.constant 0 : index
      %c0_12 = arith.constant 0 : index
      %13 = vector.load %arg9[%c0_11, %c0_12] : memref<32x128xf32, #tpu.memory_space<vmem>>, vector<32x128xf32>
      tpu.vector_store %arg9[%c0_11, %c0_12], %12 {strides = array<i32>} : memref<32x128xf32, #tpu.memory_space<vmem>>, vector<32x128xf32>,
    } else {
    }
    %c0 = arith.constant 0 : index
    %c0_1 = arith.constant 0 : index
    %3 = vector.load %arg9[%c0, %c0_1] : memref<32x128xf32, #tpu.memory_space<vmem>>, vector<32x128xf32>
    %c0_2 = arith.constant 0 : index
    %c0_3 = arith.constant 0 : index
    %4 = vector.load %arg2[%c0_2, %c0_3] : memref<32x512xbf16, #tpu.memory_space<vmem>>, vector<32x512xbf16>
    %c0_4 = arith.constant 0 : index
    %c0_5 = arith.constant 0 : index
    %5 = vector.load %arg3[%c0_4, %c0_5] : memref<512x128xbf16, #tpu.memory_space<vmem>>, vector<512x128xbf16>
    %cst = arith.constant dense<0.000000e+00> : vector<32x128xf32>
    %6 = tpu.matmul %4, %5, %cst {dimension_numbers = #tpu.dot_dimension_numbers<[1], [0], [0], [1], [0, 0, 1, 1], [], []>} : vector<32x512xbf16>, vector<512x128xbf16>, vector<32x128xf32> -> vector<32x128xf32>
    %7 = arith.addf %3, %6 : vector<32x128xf32>
    %c0_6 = arith.constant 0 : index
    %c0_7 = arith.constant 0 : index
    %8 = vector.load %arg9[%c0_6, %c0_7] : memref<32x128xf32, #tpu.memory_space<vmem>>, vector<32x128xf32>
    tpu.vector_store %arg9[%c0_6, %c0_7], %7 {strides = array<i32>} : memref<32x128xf32, #tpu.memory_space<vmem>>, vector<32x128xf32>,
    %c0_i32_8 = arith.constant 0 : i32
    %9 = arith.cmpi eq, %arg1, %c0_i32_8 : i32
    %10 = arith.extui %9 : i1 to i32
    %c0_i32_9 = arith.constant 0 : i32
    %11 = arith.cmpi ne, %10, %c0_i32_9 : i32
    scf.if %11 {
      %c0_10 = arith.constant 0 : index
      %c0_11 = arith.constant 0 : index
      %12 = vector.load %arg9[%c0_10, %c0_11] : memref<32x128xf32, #tpu.memory_space<vmem>>, vector<32x128xf32>
      %c0_12 = arith.constant 0 : index
      %c0_13 = arith.constant 0 : index
      %13 = vector.load %arg4[%c0_12, %c0_13] : memref<1x128xbf16, #tpu.memory_space<vmem>>, vector<1x128xbf16>
      %14 = arith.extf %13 : vector<1x128xbf16> to vector<1x128xf32>
      %15 = vector.broadcast %14 : vector<1x128xf32> to vector<32x128xf32>
      %16 = arith.addf %12, %15 : vector<32x128xf32>
      %c0_14 = arith.constant 0 : index
      %c0_15 = arith.constant 0 : index
      %17 = vector.load %arg5[%c0_14, %c0_15] : memref<32x128xbf16, #tpu.memory_space<vmem>>, vector<32x128xbf16>
      %18 = arith.extf %17 : vector<32x128xbf16> to vector<32x128xf32>
      %19 = arith.addf %16, %18 : vector<32x128xf32>
      %cst_16 = arith.constant dense<0.000000e+00> : vector<32xf32>
      %20 = vector.multi_reduction <add>, %19, %cst_16 [1] : vector<32x128xf32> to vector<32xf32>
      %21 = vector.shape_cast %20 : vector<32xf32> to vector<32x1xf32>
      %cst_17 = arith.constant 1.280000e+02 : f32
      %22 = vector.broadcast %cst_17 : f32 to vector<32x1xf32>
      %23 = arith.divf %21, %22 : vector<32x1xf32>
      %24 = vector.broadcast %23 : vector<32x1xf32> to vector<32x128xf32>
      %25 = arith.subf %19, %24 : vector<32x128xf32>
      %26 = arith.mulf %25, %25 : vector<32x128xf32>
      %cst_18 = arith.constant dense<0.000000e+00> : vector<32xf32>
      %27 = vector.multi_reduction <add>, %26, %cst_18 [1] : vector<32x128xf32> to vector<32xf32>
      %28 = vector.shape_cast %27 : vector<32xf32> to vector<32x1xf32>
      %cst_19 = arith.constant 1.280000e+02 : f32
      %29 = vector.broadcast %cst_19 : f32 to vector<32x1xf32>
      %30 = arith.divf %28, %29 : vector<32x1xf32>
      %31 = vector.broadcast %23 : vector<32x1xf32> to vector<32x128xf32>
      %32 = arith.subf %19, %31 : vector<32x128xf32>
      %cst_20 = arith.constant 9.99999974E-6 : f32
      %33 = vector.broadcast %cst_20 : f32 to vector<32x1xf32>
      %34 = arith.addf %30, %33 : vector<32x1xf32>
      %35 = math.rsqrt %34 : vector<32x1xf32>
      %36 = vector.broadcast %35 : vector<32x1xf32> to vector<32x128xf32>
      %37 = arith.mulf %32, %36 : vector<32x128xf32>
      %c0_21 = arith.constant 0 : index
      %c0_22 = arith.constant 0 : index
      %38 = vector.load %arg6[%c0_21, %c0_22] : memref<1x128xbf16, #tpu.memory_space<vmem>>, vector<1x128xbf16>
      %39 = arith.extf %38 : vector<1x128xbf16> to vector<1x128xf32>
      %40 = vector.broadcast %39 : vector<1x128xf32> to vector<32x128xf32>
      %41 = arith.mulf %37, %40 : vector<32x128xf32>
      %c0_23 = arith.constant 0 : index
      %c0_24 = arith.constant 0 : index
      %42 = vector.load %arg7[%c0_23, %c0_24] : memref<1x128xbf16, #tpu.memory_space<vmem>>, vector<1x128xbf16>
      %43 = arith.extf %42 : vector<1x128xbf16> to vector<1x128xf32>
      %44 = vector.broadcast %43 : vector<1x128xf32> to vector<32x128xf32>
      %45 = arith.addf %41, %44 : vector<32x128xf32>
      %46 = arith.truncf %45 : vector<32x128xf32> to vector<32x128xbf16>
      %c0_25 = arith.constant 0 : index
      %c0_26 = arith.constant 0 : index
      %47 = vector.load %arg8[%c0_25, %c0_26] : memref<32x128xbf16, #tpu.memory_space<vmem>>, vector<32x128xbf16>
      tpu.vector_store %arg8[%c0_25, %c0_26], %46 {strides = array<i32>} : memref<32x128xbf16, #tpu.memory_space<vmem>>, vector<32x128xbf16>,
    } else {
    }
    return
  }
  func.func @transform_0(%arg0: i32, %arg1: i32) -> (i32, i32) {
    %c0_i32 = arith.constant 0 : i32
    return %arg0, %arg1 : i32, i32
  }
  func.func @transform_1(%arg0: i32, %arg1: i32) -> (i32, i32) {
    %c0_i32 = arith.constant 0 : i32
    %c0_i32_0 = arith.constant 0 : i32
    return %arg1, %c0_i32 : i32, i32
  }
  func.func @transform_2(%arg0: i32, %arg1: i32) -> (i32, i32) {
    %c0_i32 = arith.constant 0 : i32
    %c0_i32_0 = arith.constant 0 : i32
    %c0_i32_1 = arith.constant 0 : i32
    return %c0_i32, %c0_i32_0 : i32, i32
  }
  func.func @transform_3(%arg0: i32, %arg1: i32) -> (i32, i32) {
    %c0_i32 = arith.constant 0 : i32
    %c0_i32_0 = arith.constant 0 : i32
    return %arg0, %c0_i32 : i32, i32
  }
  func.func @transform_4(%arg0: i32, %arg1: i32) -> (i32, i32) {
    %c0_i32 = arith.constant 0 : i32
    %c0_i32_0 = arith.constant 0 : i32
    %c0_i32_1 = arith.constant 0 : i32
    return %c0_i32, %c0_i32_0 : i32, i32
  }
  func.func @transform_5(%arg0: i32, %arg1: i32) -> (i32, i32) {
    %c0_i32 = arith.constant 0 : i32
    %c0_i32_0 = arith.constant 0 : i32
    %c0_i32_1 = arith.constant 0 : i32
    return %c0_i32, %c0_i32_0 : i32, i32
  }
  func.func @transform_6(%arg0: i32, %arg1: i32) -> (i32, i32) {
    %c0_i32 = arith.constant 0 : i32
    %c0_i32_0 = arith.constant 0 : i32
    return %arg0, %c0_i32 : i32, i32
  }
}

module attributes {stable_mosaic.version = 11 : i64} {
  func.func @_matmul_kernel(%arg0: i32, %arg1: i32, %arg2: i32, %arg3: memref<32x128xbf16, #tpu.memory_space<vmem>>, %arg4: memref<128x384xbf16, #tpu.memory_space<vmem>>, %arg5: memref<1x384xbf16, #tpu.memory_space<vmem>>, %arg6: memref<32x384xbf16, #tpu.memory_space<vmem>>, %arg7: memref<32x384xf32, #tpu.memory_space<vmem>>) attributes {dimension_semantics = [#tpu.dimension_semantics<parallel>, #tpu.dimension_semantics<parallel>, #tpu.dimension_semantics<arbitrary>], iteration_bounds = array<i64: 1, 1, 1>, scalar_prefetch = 0 : i64, scratch_operands = 1 : i64, tpu.core_type = #tpu.core_type<tc>, window_params = [{transform_indices = @transform_0, window_bounds = array<i64: 32, 128>}, {transform_indices = @transform_1, window_bounds = array<i64: 128, 384>}, {transform_indices = @transform_2, window_bounds = array<i64: 1, 384>}, {transform_indices = @transform_3, window_bounds = array<i64: 32, 384>}]} {
    %c0_i32 = arith.constant 0 : i32
    %0 = arith.cmpi eq, %arg2, %c0_i32 : i32
    %1 = arith.extui %0 : i1 to i32
    %c0_i32_0 = arith.constant 0 : i32
    %2 = arith.cmpi ne, %1, %c0_i32_0 : i32
    scf.if %2 {
      %cst_10 = arith.constant 0.000000e+00 : f32
      %12 = vector.broadcast %cst_10 : f32 to vector<32x384xf32>
      %c0_11 = arith.constant 0 : index
      %c0_12 = arith.constant 0 : index
      %13 = vector.load %arg7[%c0_11, %c0_12] : memref<32x384xf32, #tpu.memory_space<vmem>>, vector<32x384xf32>
      tpu.vector_store %arg7[%c0_11, %c0_12], %12 {strides = array<i32>} : memref<32x384xf32, #tpu.memory_space<vmem>>, vector<32x384xf32>,
    } else {
    }
    %c0 = arith.constant 0 : index
    %c0_1 = arith.constant 0 : index
    %3 = vector.load %arg7[%c0, %c0_1] : memref<32x384xf32, #tpu.memory_space<vmem>>, vector<32x384xf32>
    %c0_2 = arith.constant 0 : index
    %c0_3 = arith.constant 0 : index
    %4 = vector.load %arg3[%c0_2, %c0_3] : memref<32x128xbf16, #tpu.memory_space<vmem>>, vector<32x128xbf16>
    %c0_4 = arith.constant 0 : index
    %c0_5 = arith.constant 0 : index
    %5 = vector.load %arg4[%c0_4, %c0_5] : memref<128x384xbf16, #tpu.memory_space<vmem>>, vector<128x384xbf16>
    %cst = arith.constant dense<0.000000e+00> : vector<32x384xf32>
    %6 = tpu.matmul %4, %5, %cst {dimension_numbers = #tpu.dot_dimension_numbers<[1], [0], [0], [1], [0, 0, 1, 1], [], []>} : vector<32x128xbf16>, vector<128x384xbf16>, vector<32x384xf32> -> vector<32x384xf32>
    %7 = arith.addf %3, %6 : vector<32x384xf32>
    %c0_6 = arith.constant 0 : index
    %c0_7 = arith.constant 0 : index
    %8 = vector.load %arg7[%c0_6, %c0_7] : memref<32x384xf32, #tpu.memory_space<vmem>>, vector<32x384xf32>
    tpu.vector_store %arg7[%c0_6, %c0_7], %7 {strides = array<i32>} : memref<32x384xf32, #tpu.memory_space<vmem>>, vector<32x384xf32>,
    %c0_i32_8 = arith.constant 0 : i32
    %9 = arith.cmpi eq, %arg2, %c0_i32_8 : i32
    %10 = arith.extui %9 : i1 to i32
    %c0_i32_9 = arith.constant 0 : i32
    %11 = arith.cmpi ne, %10, %c0_i32_9 : i32
    scf.if %11 {
      %c0_10 = arith.constant 0 : index
      %c0_11 = arith.constant 0 : index
      %12 = vector.load %arg7[%c0_10, %c0_11] : memref<32x384xf32, #tpu.memory_space<vmem>>, vector<32x384xf32>
      %c0_12 = arith.constant 0 : index
      %c0_13 = arith.constant 0 : index
      %13 = vector.load %arg5[%c0_12, %c0_13] : memref<1x384xbf16, #tpu.memory_space<vmem>>, vector<1x384xbf16>
      %14 = arith.extf %13 : vector<1x384xbf16> to vector<1x384xf32>
      %15 = vector.broadcast %14 : vector<1x384xf32> to vector<32x384xf32>
      %16 = arith.addf %12, %15 : vector<32x384xf32>
      %17 = arith.truncf %16 : vector<32x384xf32> to vector<32x384xbf16>
      %c0_14 = arith.constant 0 : index
      %c0_15 = arith.constant 0 : index
      %18 = vector.load %arg6[%c0_14, %c0_15] : memref<32x384xbf16, #tpu.memory_space<vmem>>, vector<32x384xbf16>
      tpu.vector_store %arg6[%c0_14, %c0_15], %17 {strides = array<i32>} : memref<32x384xbf16, #tpu.memory_space<vmem>>, vector<32x384xbf16>,
    } else {
    }
    return
  }
  func.func @transform_0(%arg0: i32, %arg1: i32, %arg2: i32) -> (i32, i32) {
    %c0_i32 = arith.constant 0 : i32
    return %arg0, %arg2 : i32, i32
  }
  func.func @transform_1(%arg0: i32, %arg1: i32, %arg2: i32) -> (i32, i32) {
    %c0_i32 = arith.constant 0 : i32
    return %arg2, %arg1 : i32, i32
  }
  func.func @transform_2(%arg0: i32, %arg1: i32, %arg2: i32) -> (i32, i32) {
    %c0_i32 = arith.constant 0 : i32
    %c0_i32_0 = arith.constant 0 : i32
    return %c0_i32, %arg1 : i32, i32
  }
  func.func @transform_3(%arg0: i32, %arg1: i32, %arg2: i32) -> (i32, i32) {
    %c0_i32 = arith.constant 0 : i32
    return %arg0, %arg1 : i32, i32
  }
}

module attributes {stable_mosaic.version = 11 : i64} {
  func.func @_matmul_kernel(%arg0: i32, %arg1: i32, %arg2: i32, %arg3: memref<32x128xbf16, #tpu.memory_space<vmem>>, %arg4: memref<128x256xbf16, #tpu.memory_space<vmem>>, %arg5: memref<1x256xbf16, #tpu.memory_space<vmem>>, %arg6: memref<32x256xbf16, #tpu.memory_space<vmem>>, %arg7: memref<32x256xf32, #tpu.memory_space<vmem>>) attributes {dimension_semantics = [#tpu.dimension_semantics<parallel>, #tpu.dimension_semantics<parallel>, #tpu.dimension_semantics<arbitrary>], iteration_bounds = array<i64: 1, 1, 1>, scalar_prefetch = 0 : i64, scratch_operands = 1 : i64, tpu.core_type = #tpu.core_type<tc>, window_params = [{transform_indices = @transform_0, window_bounds = array<i64: 32, 128>}, {transform_indices = @transform_1, window_bounds = array<i64: 128, 256>}, {transform_indices = @transform_2, window_bounds = array<i64: 1, 256>}, {transform_indices = @transform_3, window_bounds = array<i64: 32, 256>}]} {
    %c0_i32 = arith.constant 0 : i32
    %0 = arith.cmpi eq, %arg2, %c0_i32 : i32
    %1 = arith.extui %0 : i1 to i32
    %c0_i32_0 = arith.constant 0 : i32
    %2 = arith.cmpi ne, %1, %c0_i32_0 : i32
    scf.if %2 {
      %cst_10 = arith.constant 0.000000e+00 : f32
      %12 = vector.broadcast %cst_10 : f32 to vector<32x256xf32>
      %c0_11 = arith.constant 0 : index
      %c0_12 = arith.constant 0 : index
      %13 = vector.load %arg7[%c0_11, %c0_12] : memref<32x256xf32, #tpu.memory_space<vmem>>, vector<32x256xf32>
      tpu.vector_store %arg7[%c0_11, %c0_12], %12 {strides = array<i32>} : memref<32x256xf32, #tpu.memory_space<vmem>>, vector<32x256xf32>,
    } else {
    }
    %c0 = arith.constant 0 : index
    %c0_1 = arith.constant 0 : index
    %3 = vector.load %arg7[%c0, %c0_1] : memref<32x256xf32, #tpu.memory_space<vmem>>, vector<32x256xf32>
    %c0_2 = arith.constant 0 : index
    %c0_3 = arith.constant 0 : index
    %4 = vector.load %arg3[%c0_2, %c0_3] : memref<32x128xbf16, #tpu.memory_space<vmem>>, vector<32x128xbf16>
    %c0_4 = arith.constant 0 : index
    %c0_5 = arith.constant 0 : index
    %5 = vector.load %arg4[%c0_4, %c0_5] : memref<128x256xbf16, #tpu.memory_space<vmem>>, vector<128x256xbf16>
    %cst = arith.constant dense<0.000000e+00> : vector<32x256xf32>
    %6 = tpu.matmul %4, %5, %cst {dimension_numbers = #tpu.dot_dimension_numbers<[1], [0], [0], [1], [0, 0, 1, 1], [], []>} : vector<32x128xbf16>, vector<128x256xbf16>, vector<32x256xf32> -> vector<32x256xf32>
    %7 = arith.addf %3, %6 : vector<32x256xf32>
    %c0_6 = arith.constant 0 : index
    %c0_7 = arith.constant 0 : index
    %8 = vector.load %arg7[%c0_6, %c0_7] : memref<32x256xf32, #tpu.memory_space<vmem>>, vector<32x256xf32>
    tpu.vector_store %arg7[%c0_6, %c0_7], %7 {strides = array<i32>} : memref<32x256xf32, #tpu.memory_space<vmem>>, vector<32x256xf32>,
    %c0_i32_8 = arith.constant 0 : i32
    %9 = arith.cmpi eq, %arg2, %c0_i32_8 : i32
    %10 = arith.extui %9 : i1 to i32
    %c0_i32_9 = arith.constant 0 : i32
    %11 = arith.cmpi ne, %10, %c0_i32_9 : i32
    scf.if %11 {
      %c0_10 = arith.constant 0 : index
      %c0_11 = arith.constant 0 : index
      %12 = vector.load %arg7[%c0_10, %c0_11] : memref<32x256xf32, #tpu.memory_space<vmem>>, vector<32x256xf32>
      %c0_12 = arith.constant 0 : index
      %c0_13 = arith.constant 0 : index
      %13 = vector.load %arg5[%c0_12, %c0_13] : memref<1x256xbf16, #tpu.memory_space<vmem>>, vector<1x256xbf16>
      %14 = arith.extf %13 : vector<1x256xbf16> to vector<1x256xf32>
      %15 = vector.broadcast %14 : vector<1x256xf32> to vector<32x256xf32>
      %16 = arith.addf %12, %15 : vector<32x256xf32>
      %17 = arith.truncf %16 : vector<32x256xf32> to vector<32x256xbf16>
      %c0_14 = arith.constant 0 : index
      %c0_15 = arith.constant 0 : index
      %18 = vector.load %arg6[%c0_14, %c0_15] : memref<32x256xbf16, #tpu.memory_space<vmem>>, vector<32x256xbf16>
      tpu.vector_store %arg6[%c0_14, %c0_15], %17 {strides = array<i32>} : memref<32x256xbf16, #tpu.memory_space<vmem>>, vector<32x256xbf16>,
    } else {
    }
    return
  }
  func.func @transform_0(%arg0: i32, %arg1: i32, %arg2: i32) -> (i32, i32) {
    %c0_i32 = arith.constant 0 : i32
    return %arg0, %arg2 : i32, i32
  }
  func.func @transform_1(%arg0: i32, %arg1: i32, %arg2: i32) -> (i32, i32) {
    %c0_i32 = arith.constant 0 : i32
    return %arg2, %arg1 : i32, i32
  }
  func.func @transform_2(%arg0: i32, %arg1: i32, %arg2: i32) -> (i32, i32) {
    %c0_i32 = arith.constant 0 : i32
    %c0_i32_0 = arith.constant 0 : i32
    return %c0_i32, %arg1 : i32, i32
  }
  func.func @transform_3(%arg0: i32, %arg1: i32, %arg2: i32) -> (i32, i32) {
    %c0_i32 = arith.constant 0 : i32
    return %arg0, %arg1 : i32, i32
  }
}

</mosaic_0001>

<llo_original>
// kernel: gpt_forward.12
$region0: #{gpt_forward.12}
  #allocation0 [shape = 'u32[]', space=smem, size = 0x4, offset = 0x4, fixed_abs, tag = 'smem constant byte address 0x4 - core index']
  #allocation1 [shape = 'u32[72,128]{1,0:T(1,128)}', space=vmem, size = 0x9000, scoped, tag = 'internal scratch']
  #allocation2 [shape = 'f32[16,1]{1,0:T(8,128)}', space=vmem, size = 0x2000, scoped, tag = 'scratch operand']
  #allocation3 [shape = 'f32[16,1]{1,0:T(8,128)}', space=vmem, size = 0x2000, scoped, tag = 'scratch operand']
  #allocation4 [shape = 'f32[16,32]{1,0:T(8,128)}', space=vmem, size = 0x2000, scoped, tag = 'scratch operand']
  %s0 = inlined_call_operand.vmem [shape: bf16[8,16,32], index: 0, kind: input, shape index: {}]
  %s1 = inlined_call_operand.vmem [shape: bf16[8,16,32], index: 1, kind: input, shape index: {}]
  %s2 = inlined_call_operand.vmem [shape: bf16[8,16,32], index: 2, kind: input, shape index: {}]
  %s3 = inlined_call_operand.vmem [shape: bf16[8,16,32], index: 3, kind: output, shape index: {}]
  %s4 = sld [smem:[#allocation0]]
  $region57: #{gpt_forward.12} parent=0
    _
  %s6 = ssub.s32 1, %s4
  %s7 = scalar_select 0, %s6, %s4
  loop: start=0, step=1, limit=10
  $region2: #{gpt_forward.12} parent=0 // loop_pre_header
    _
  $region3: #{gpt_forward.12} parent=0 // loop_header
    %s9 = sphi 0, %s13
    %p10 = scmp.ge.s32.totalorder %s9, 10
    %s16 = sphi 0, %s35
    %s17 = sphi 0, %s31
    %s18 = sphi 0, %s27
    %s19 = sphi 0, %s16
    %s20 = sphi 0, %s17
    %s21 = sphi 0, %s18
    %s22 = sphi 0, %s19
    %s23 = sphi 0, %s20
    %s24 = sphi 0, %s21
    %s40 = sphi 0, %s42
    %s43 = sphi 0, %s40
    %s44 = sphi 0, %s43
    %s60 = sphi 0, %s44
    %s72 = sphi 0, %s74
    %s75 = sphi 0, %s72
    %s76 = sphi 0, %s75
    %s92 = sphi 0, %s76
    %s104 = sphi 0, %s106
    %s107 = sphi 0, %s104
    %s108 = sphi 0, %s107
    %s124 = sphi 0, %s108
    %s132 = sphi 0, %s134
    %s135 = sphi 0, %s132
    %s136 = sphi 0, %s135
    %s152 = sphi 0, %s136
  $region4: #{gpt_forward.12} parent=0 // loop_header_branch
    %12 = sbr.rel (%p10) target = $region8
  $region5: #{gpt_forward.12} parent=0 // loop_body
    %s14 = ssub.s32 %s9, 1
    %s15 = ssub.s32 %s9, 2
    %s25 = sadd.s32 1, %s18
    %p26 = scmp.ge.s32.totalorder %s25, 1
    %s27 = scalar_select %p26, 0, %s25
    %s28 = sadd.s32 1, %s17
    %s29 = scalar_select %p26, %s28, %s17
    %p30 = scmp.ge.s32.totalorder %s29, 1
    %s31 = scalar_select %p30, 0, %s29
    %s32 = sadd.s32 1, %s16
    %s33 = scalar_select %p30, %s32, %s16
    %p34 = scmp.ge.s32.totalorder %s33, 8
    %s35 = scalar_select %p34, 0, %s33
    %s36 = ssub.s32 %s16, %s35
    %s37 = ssub.s32 %s17, %s31
    %s38 = sor.u32 %s36, %s37
    %p39 = scmp.eq.s32.totalorder %s38, 0
    %s41 = sadd.s32 %s40, 1
    %s42 = scalar_select %p39, %s40, %s41
    %p45 = pneg %p39
    %p46 = scmp.eq.s32.totalorder %s9, 7
    %p47 = por %p45, %p46
    %p48 = scmp.ne.s32.totalorder %s40, %s43
    %p49 = scmp.eq.s32.totalorder %s9, 0
    %p50 = por %p48, %p49
    %p51 = scmp.ne.s32.totalorder %s40, %s43
    %p52 = scmp.eq.s32.totalorder %s14, 7
    %p53 = por %p51, %p52
    %p54 = scmp.ne.s32.totalorder %s43, %s44
    %p55 = scmp.eq.s32.totalorder %s14, 0
    %p56 = por %p54, %p55
    %p57 = scmp.ne.s32.totalorder %s43, %s44
    %p58 = scmp.eq.s32.totalorder %s15, 7
    %p59 = por %p57, %p58
    %p61 = scmp.ne.s32.totalorder %s44, %s60
    %p62 = scmp.eq.s32.totalorder %s15, 0
    %p63 = por %p61, %p62
    %p64 = scmp.lt.s32.totalorder %s18, %s17
    %s65 = scalar_select %p64, %s18, %s17
    %p66 = scmp.lt.s32.totalorder %s27, %s31
    %s67 = scalar_select %p66, %s27, %s31
    %s68 = ssub.s32 %s16, %s35
    %s69 = ssub.s32 %s65, %s67
    %s70 = sor.u32 %s68, %s69
    %p71 = scmp.eq.s32.totalorder %s70, 0
    %s73 = sadd.s32 %s72, 1
    %s74 = scalar_select %p71, %s72, %s73
    %p77 = pneg %p71
    %p78 = scmp.eq.s32.totalorder %s9, 7
    %p79 = por %p77, %p78
    %p80 = scmp.ne.s32.totalorder %s72, %s75
    %p81 = scmp.eq.s32.totalorder %s9, 0
    %p82 = por %p80, %p81
    %p83 = scmp.ne.s32.totalorder %s72, %s75
    %p84 = scmp.eq.s32.totalorder %s14, 7
    %p85 = por %p83, %p84
    %p86 = scmp.ne.s32.totalorder %s75, %s76
    %p87 = scmp.eq.s32.totalorder %s14, 0
    %p88 = por %p86, %p87
    %p89 = scmp.ne.s32.totalorder %s75, %s76
    %p90 = scmp.eq.s32.totalorder %s15, 7
    %p91 = por %p89, %p90
    %p93 = scmp.ne.s32.totalorder %s76, %s92
    %p94 = scmp.eq.s32.totalorder %s15, 0
    %p95 = por %p93, %p94
    %p96 = scmp.lt.s32.totalorder %s18, %s17
    %s97 = scalar_select %p96, %s18, %s17
    %p98 = scmp.lt.s32.totalorder %s27, %s31
    %s99 = scalar_select %p98, %s27, %s31
    %s100 = ssub.s32 %s16, %s35
    %s101 = ssub.s32 %s97, %s99
    %s102 = sor.u32 %s100, %s101
    %p103 = scmp.eq.s32.totalorder %s102, 0
    %s105 = sadd.s32 %s104, 1
    %s106 = scalar_select %p103, %s104, %s105
    %p109 = pneg %p103
    %p110 = scmp.eq.s32.totalorder %s9, 7
    %p111 = por %p109, %p110
    %p112 = scmp.ne.s32.totalorder %s104, %s107
    %p113 = scmp.eq.s32.totalorder %s9, 0
    %p114 = por %p112, %p113
    %p115 = scmp.ne.s32.totalorder %s104, %s107
    %p116 = scmp.eq.s32.totalorder %s14, 7
    %p117 = por %p115, %p116
    %p118 = scmp.ne.s32.totalorder %s107, %s108
    %p119 = scmp.eq.s32.totalorder %s14, 0
    %p120 = por %p118, %p119
    %p121 = scmp.ne.s32.totalorder %s107, %s108
    %p122 = scmp.eq.s32.totalorder %s15, 7
    %p123 = por %p121, %p122
    %p125 = scmp.ne.s32.totalorder %s108, %s124
    %p126 = scmp.eq.s32.totalorder %s15, 0
    %p127 = por %p125, %p126
    %s128 = ssub.s32 %s16, %s35
    %s129 = ssub.s32 %s17, %s31
    %s130 = sor.u32 %s128, %s129
    %p131 = scmp.eq.s32.totalorder %s130, 0
    %s133 = sadd.s32 %s132, 1
    %s134 = scalar_select %p131, %s132, %s133
    %p137 = pneg %p131
    %p138 = scmp.eq.s32.totalorder %s9, 7
    %p139 = por %p137, %p138
    %p140 = scmp.ne.s32.totalorder %s132, %s135
    %p141 = scmp.eq.s32.totalorder %s9, 0
    %p142 = por %p140, %p141
    %p143 = scmp.ne.s32.totalorder %s132, %s135
    %p144 = scmp.eq.s32.totalorder %s14, 7
    %p145 = por %p143, %p144
    %p146 = scmp.ne.s32.totalorder %s135, %s136
    %p147 = scmp.eq.s32.totalorder %s14, 0
    %p148 = por %p146, %p147
    %p149 = scmp.ne.s32.totalorder %s135, %s136
    %p150 = scmp.eq.s32.totalorder %s15, 7
    %p151 = por %p149, %p150
    %p153 = scmp.ne.s32.totalorder %s136, %s152
    %p154 = scmp.eq.s32.totalorder %s15, 0
    %p155 = por %p153, %p154
    %p156 = scmp.le.s32.totalorder 1, %s9
    %p157 = scmp.lt.s32.totalorder %s9, 9
    %p158 = pnand %p156, %p157
    %p159 = pneg %p158
    // Predicated region
    $region9: #{gpt_forward.12} parent=5 // pred_check
      _
    $region10: #{gpt_forward.12} parent=5 // pred_check_branch
      %161 = sbr.rel (%p158) target = $region12
    $region11: #{gpt_forward.12} parent=5 // pred_region
      %s162 = ssub.s32 %s9, 1
    $region12: #{gpt_forward.12} parent=5 // pred_fallthru
      _
    %p163 = scmp.lt.s32.totalorder %s9, 8
    // Predicated region
    $region13: #{gpt_forward.12} parent=5 // pred_check
      %p164 = pneg %p163
    $region14: #{gpt_forward.12} parent=5 // pred_check_branch
      %166 = sbr.rel (%p164) target = $region16
    $region15: #{gpt_forward.12} parent=5 // pred_region
      // Predicated region
      $region17: #{gpt_forward.12} parent=15 // pred_check
        %p167 = pneg %p50
      $region18: #{gpt_forward.12} parent=15 // pred_check_branch
        %169 = sbr.rel (%p167) target = $region20
      $region19: #{gpt_forward.12} parent=15 // pred_region
        %s170 = smul.u32 2, %s17
        %p171 = scmp.lt.s32.totalorder %s16, 7
        %s172 = scalar_select %p171, %s16, 7
        %p173 = scmp.lt.s32.totalorder %s170, 1
        %s174 = scalar_select %p173, %s170, 1
        %s175 = smul.addr %s172, 2
        %s176 = sadd.s32 %s174, %s175
        %s177 = smul.addr %s176, 4
        %s178 = scalar_lea.vmem %s0, %s177
        %s179 = smul.u32 2, %s17
      $region20: #{gpt_forward.12} parent=15 // pred_fallthru
        _
      // Predicated region
      $region21: #{gpt_forward.12} parent=15 // pred_check
        %p180 = pneg %p82
      $region22: #{gpt_forward.12} parent=15 // pred_check_branch
        %182 = sbr.rel (%p180) target = $region24
      $region23: #{gpt_forward.12} parent=15 // pred_region
        %p183 = scmp.lt.s32.totalorder %s18, %s17
        %s184 = scalar_select %p183, %s18, %s17
        %s185 = smul.u32 2, %s184
        %p186 = scmp.lt.s32.totalorder %s16, 7
        %s187 = scalar_select %p186, %s16, 7
        %p188 = scmp.lt.s32.totalorder %s185, 1
        %s189 = scalar_select %p188, %s185, 1
        %s190 = smul.addr %s187, 2
        %s191 = sadd.s32 %s189, %s190
        %s192 = smul.addr %s191, 4
        %s193 = scalar_lea.vmem %s1, %s192
        %p194 = scmp.lt.s32.totalorder %s18, %s17
        %s195 = scalar_select %p194, %s18, %s17
        %s196 = smul.u32 2, %s195
      $region24: #{gpt_forward.12} parent=15 // pred_fallthru
        _
      // Predicated region
      $region25: #{gpt_forward.12} parent=15 // pred_check
        %p197 = pneg %p114
      $region26: #{gpt_forward.12} parent=15 // pred_check_branch
        %199 = sbr.rel (%p197) target = $region28
      $region27: #{gpt_forward.12} parent=15 // pred_region
        %p200 = scmp.lt.s32.totalorder %s18, %s17
        %s201 = scalar_select %p200, %s18, %s17
        %s202 = smul.u32 2, %s201
        %p203 = scmp.lt.s32.totalorder %s16, 7
        %s204 = scalar_select %p203, %s16, 7
        %p205 = scmp.lt.s32.totalorder %s202, 1
        %s206 = scalar_select %p205, %s202, 1
        %s207 = smul.addr %s204, 2
        %s208 = sadd.s32 %s206, %s207
        %s209 = smul.addr %s208, 4
        %s210 = scalar_lea.vmem %s2, %s209
        %p211 = scmp.lt.s32.totalorder %s18, %s17
        %s212 = scalar_select %p211, %s18, %s17
        %s213 = smul.u32 2, %s212
      $region28: #{gpt_forward.12} parent=15 // pred_fallthru
        _
    $region16: #{gpt_forward.12} parent=5 // pred_fallthru
      _
    %p214 = scmp.le.s32.totalorder 1, %s9
    %p215 = scmp.lt.s32.totalorder %s9, 9
    %p216 = pnand %p214, %p215
    %p217 = pneg %p216
    // Predicated region
    $region29: #{gpt_forward.12} parent=5 // pred_check
      _
    $region30: #{gpt_forward.12} parent=5 // pred_check_branch
      %219 = sbr.rel (%p216) target = $region32
    $region31: #{gpt_forward.12} parent=5 // pred_region
      %s220 = ssub.s32 %s9, 1
      %s221 = smul.u32 2, %s20
      %p222 = scmp.lt.s32.totalorder %s19, 7
      %s223 = scalar_select %p222, %s19, 7
      %p224 = scmp.lt.s32.totalorder %s221, 1
      %s225 = scalar_select %p224, %s221, 1
      %s226 = smul.addr %s223, 2
      %s227 = sadd.s32 %s225, %s226
      %s228 = smul.addr %s227, 4
      %s229 = scalar_lea.vmem %s0, %s228
      %p230 = pneg %p56
      %p231 = pneg %p53
      %p232 = scmp.lt.s32.totalorder %s21, %s20
      %s233 = scalar_select %p232, %s21, %s20
      %s234 = smul.u32 2, %s233
      %p235 = scmp.lt.s32.totalorder %s19, 7
      %s236 = scalar_select %p235, %s19, 7
      %p237 = scmp.lt.s32.totalorder %s234, 1
      %s238 = scalar_select %p237, %s234, 1
      %s239 = smul.addr %s236, 2
      %s240 = sadd.s32 %s238, %s239
      %s241 = smul.addr %s240, 4
      %s242 = scalar_lea.vmem %s1, %s241
      %p243 = pneg %p88
      %p244 = pneg %p85
      %p245 = scmp.lt.s32.totalorder %s21, %s20
      %s246 = scalar_select %p245, %s21, %s20
      %s247 = smul.u32 2, %s246
      %p248 = scmp.lt.s32.totalorder %s19, 7
      %s249 = scalar_select %p248, %s19, 7
      %p250 = scmp.lt.s32.totalorder %s247, 1
      %s251 = scalar_select %p250, %s247, 1
      %s252 = smul.addr %s249, 2
      %s253 = sadd.s32 %s251, %s252
      %s254 = smul.addr %s253, 4
      %s255 = scalar_lea.vmem %s2, %s254
      %p256 = pneg %p120
      %p257 = pneg %p117
      %p258 = pneg %p148
      %p259 = pneg %p145
      %s260 = smul.u32 2, %s20
      %p261 = scmp.lt.s32.totalorder %s19, 7
      %s262 = scalar_select %p261, %s19, 7
      %p263 = scmp.lt.s32.totalorder %s260, 1
      %s264 = scalar_select %p263, %s260, 1
      %s265 = smul.addr %s262, 2
      %s266 = sadd.s32 %s264, %s265
      %s267 = smul.addr %s266, 4
      %s268 = scalar_lea.vmem %s3, %s267
      %s269 = smul.u32 2, %s20
      %p270 = scmp.lt.s32.totalorder %s19, 7
      %s271 = scalar_select %p270, %s19, 7
      %p272 = scmp.lt.s32.totalorder %s269, 1
      %s273 = scalar_select %p272, %s269, 1
      %s274 = smul.addr %s271, 2
      %s275 = sadd.s32 %s273, %s274
      %s276 = smul.addr %s275, 4
      %s277 = scalar_lea.vmem %s0, %s276
      %s278 = smul.u32 2, %s20
      %p279 = scmp.lt.s32.totalorder %s21, %s20
      %s280 = scalar_select %p279, %s21, %s20
      %s281 = smul.u32 2, %s280
      %p282 = scmp.lt.s32.totalorder %s19, 7
      %s283 = scalar_select %p282, %s19, 7
      %p284 = scmp.lt.s32.totalorder %s281, 1
      %s285 = scalar_select %p284, %s281, 1
      %s286 = smul.addr %s283, 2
      %s287 = sadd.s32 %s285, %s286
      %s288 = smul.addr %s287, 4
      %s289 = scalar_lea.vmem %s1, %s288
      %p290 = scmp.lt.s32.totalorder %s21, %s20
      %s291 = scalar_select %p290, %s21, %s20
      %s292 = smul.u32 2, %s291
      %p293 = scmp.lt.s32.totalorder %s21, %s20
      %s294 = scalar_select %p293, %s21, %s20
      %s295 = smul.u32 2, %s294
      %p296 = scmp.lt.s32.totalorder %s19, 7
      %s297 = scalar_select %p296, %s19, 7
      %p298 = scmp.lt.s32.totalorder %s295, 1
      %s299 = scalar_select %p298, %s295, 1
      %s300 = smul.addr %s297, 2
      %s301 = sadd.s32 %s299, %s300
      %s302 = smul.addr %s301, 4
      %s303 = scalar_lea.vmem %s2, %s302
      %p304 = scmp.lt.s32.totalorder %s21, %s20
      %s305 = scalar_select %p304, %s21, %s20
      %s306 = smul.u32 2, %s305
      %s307 = smul.u32 2, %s20
      %p308 = scmp.lt.s32.totalorder %s19, 7
      %s309 = scalar_select %p308, %s19, 7
      %p310 = scmp.lt.s32.totalorder %s307, 1
      %s311 = scalar_select %p310, %s307, 1
      %s312 = smul.addr %s309, 2
      %s313 = sadd.s32 %s311, %s312
      %s314 = smul.addr %s313, 4
      %s315 = scalar_lea.vmem %s3, %s314
      %s316 = smul.u32 2, %s20
      %p318 = scmp.le.s32.totalorder %s21, %s20
      // Predicated region
      $region33: #{gpt_forward.12} parent=31 // pred_check
        %p319 = pneg %p318
      $region34: #{gpt_forward.12} parent=31 // pred_check_branch
        %321 = sbr.rel (%p319) target = $region36
      $region35: #{gpt_forward.12} parent=31 // pred_region
        %p322 = scmp.eq.s32.totalorder %s21, 0
        // Predicated region
        $region37: #{gpt_forward.12} parent=35 // pred_check
          %p323 = pneg %p322
        $region38: #{gpt_forward.12} parent=35 // pred_check_branch
          %325 = sbr.rel (%p323) target = $region40
        $region39: #{gpt_forward.12} parent=35 // pred_region
          %vm326 = vcmask 7168
          %327 = vst.msk [vmem:[#allocation2] sm:$0xff] %vm326, -1e+30
          %328 = vst.msk [vmem:[#allocation2 + $0x8] sm:$0xff] %vm326, -1e+30
          %329 = vst.msk [vmem:[#allocation3] sm:$0xff] %vm326, 0.0
          %330 = vst.msk [vmem:[#allocation3 + $0x8] sm:$0xff] %vm326, 0.0
          %vm331 = vcmask 261120
          %332 = vst.msk [vmem:[#allocation4] sm:$0xff] %vm331, 0.0
          %333 = vst.msk [vmem:[#allocation4 + $0x8] sm:$0xff] %vm331, 0.0
        $region40: #{gpt_forward.12} parent=35 // pred_fallthru
          _
        %v334 = vld [vmem:[%s277] sm:$0xf]
        %v335 = vld [vmem:[%s277 + $0x4] sm:$0xf]
        %v336 = vld [vmem:[%s289] sm:$0xf]
        %v337 = vld [vmem:[%s289 + $0x4] sm:$0xf]
        %v340 = vunpack.c.l.b16 %v334
        %v341 = vunpack.c.l.b16 %v335
        %v342 = vpack.c.b16 %v341, %v340
        %v345 = vunpack.c.l.b16 %v336
        %v346 = vunpack.c.l.b16 %v337
        %v347 = vpack.c.b16 %v346, %v345
        %vm348 = vcmask 261120
        %v350 = vsel %vm348, %v342, 0
        %v353 = vsel %vm348, %v347, 0
        %355 = vmatpush.bf16.xpose.msra.mxu0 0
        %356 = vmatpush.bf16.xpose.msra.mxu0 0
        %357 = vmatpush.bf16.xpose.msra.mxu0 0
        %358 = vmatpush.bf16.xpose.msra.mxu0 0
        %359 = vmatpush.bf16.xpose.msra.mxu0 0
        %360 = vmatpush.bf16.xpose.msra.mxu0 0
        %361 = vmatpush.bf16.xpose.msra.mxu0 0
        %362 = vmatpush.bf16.xpose.msra.mxu0 %v353
        %363 = vmatmul.bf16.gmra.mxu0 %v350
        %v364 = vpop.f32.mrf.mxu0
        %v365 = vadd.f32 0.0, %v364
        %v366 = vpop.f32.mrf.mxu0
        %v367 = vadd.f32 0.0, %v366
        %368 = vdwg.mxu0
        %s369 = smul.u32 %s20, 16
        %v370 = vlaneseq
        %v371 = vshrl.u32 %v370, 7
        %v372 = vadd.s32 %v371, 8
        %v373 = vstv %s369
        %v374 = vadd.s32 %v373, %v371
        %v375 = vadd.s32 %v373, %v372
        %s376 = smul.u32 %s21, 16
        %v377 = vlaneseq
        %v378 = vand.u32 %v377, 127
        %v379 = vstv %s376
        %v380 = vadd.s32 %v379, %v378
        %vm381 = vcmp.gt.s32.totalorder %v380, %v374
        %vm382 = vcmp.gt.s32.totalorder %v380, %v375
        %v383 = vsel %vm381, -1e+30, %v365
        %v384 = vsel %vm382, -1e+30, %v367
        %v385 = vld [vmem:[#allocation2] sm:$0xff]
        %v386 = vld [vmem:[#allocation2 + $0x8] sm:$0xff]
        %vm387 = vcmask 130048
        %v388 = vsel %vm387, %v383, -inf
        %389 = vmax.xlane.f32.xlu0 %v388
        %v390 = vpop.xlane.xlu0 %389
        %v391 = vsel %vm387, %v384, -inf
        %392 = vmax.xlane.f32.xlu0 %v391
        %v393 = vpop.xlane.xlu0 %392
        %v394 = vmax.f32 %v385, %v390
        %v395 = vmax.f32 %v386, %v393
        %v396 = vsub.f32 %v385, %v394
        %v397 = vsub.f32 %v386, %v395
        %v398 = vmul.f32 %v396, 1.442695
        %v399 = vpow.pop %v398
        %v400 = vmul.f32 %v397, 1.442695
        %v401 = vpow.pop %v400
        %403 = vset.pattern.permute.xlu0 0
        %404 = vperm.xlu0 %403, %v394
        %v405 = vpop.permute.xlu0 %404
        %408 = vset.pattern.permute.xlu0 0
        %409 = vperm.xlu0 %408, %v395
        %v410 = vpop.permute.xlu0 %409
        %v412 = vsub.f32 %v383, %v405
        %v413 = vsub.f32 %v384, %v410
        %v414 = vmul.f32 %v412, 1.442695
        %v415 = vpow.pop %v414
        %v416 = vmul.f32 %v413, 1.442695
        %v417 = vpow.pop %v416
        %v418 = vld [vmem:[#allocation3] sm:$0xff]
        %v419 = vld [vmem:[#allocation3 + $0x8] sm:$0xff]
        %v420 = vmul.f32 %v399, %v418
        %v421 = vmul.f32 %v401, %v419
        %v422 = vsel %vm387, %v415, 0.0
        %423 = vadd.xlane.f32.xlu0 %v422
        %v424 = vpop.xlane.xlu0 %423
        %v425 = vsel %vm387, %v417, 0.0
        %426 = vadd.xlane.f32.xlu0 %v425
        %v427 = vpop.xlane.xlu0 %426
        %v428 = vadd.f32 %v420, %v424
        %v429 = vadd.f32 %v421, %v427
        %vm430 = vcmask 7168
        %431 = vst.msk [vmem:[#allocation3] sm:$0xff] %vm430, %v428
        %432 = vst.msk [vmem:[#allocation3 + $0x8] sm:$0xff] %vm430, %v429
        %v433 = vld [vmem:[#allocation4] sm:$0xff]
        %v434 = vld [vmem:[#allocation4 + $0x8] sm:$0xff]
        %436 = vset.pattern.permute.xlu0 0
        %437 = vperm.xlu0 %436, %v399
        %v438 = vpop.permute.xlu0 %437
        %441 = vset.pattern.permute.xlu0 0
        %442 = vperm.xlu0 %441, %v401
        %v443 = vpop.permute.xlu0 %442
        %v445 = vmul.f32 %v438, %v433
        %v446 = vmul.f32 %v443, %v434
        %v447 = vpack.c.bf16 %v417, %v415
        %v448 = vld [vmem:[%s303] sm:$0xf]
        %v449 = vld [vmem:[%s303 + $0x4] sm:$0xf]
        %v452 = vunpack.c.l.b16 %v448
        %v453 = vunpack.c.l.b16 %v449
        %v454 = vpack.c.b16 %v453, %v452
        %v457 = vsel %vm387, %v447, 0
        %459 = vmatpush.bf16.msra.mxu0 0
        %460 = vmatpush.bf16.msra.mxu0 0
        %461 = vmatpush.bf16.msra.mxu0 0
        %462 = vmatpush.bf16.msra.mxu0 0
        %463 = vmatpush.bf16.msra.mxu0 0
        %464 = vmatpush.bf16.msra.mxu0 0
        %465 = vmatpush.bf16.msra.mxu0 0
        %466 = vmatpush.bf16.msra.mxu0 %v454
        %467 = vmatmul.bf16.gmra.mxu0 %v457
        %v468 = vpop.f32.mrf.mxu0
        %v469 = vadd.f32 0.0, %v468
        %v470 = vpop.f32.mrf.mxu0
        %v471 = vadd.f32 0.0, %v470
        %472 = vdwg.mxu0
        %v473 = vadd.f32 %v445, %v469
        %v474 = vadd.f32 %v446, %v471
        %475 = vst.msk [vmem:[#allocation4] sm:$0xff] %vm348, %v473
        %476 = vst.msk [vmem:[#allocation4 + $0x8] sm:$0xff] %vm348, %v474
        %477 = vst.msk [vmem:[#allocation2] sm:$0xff] %vm430, %v394
        %478 = vst.msk [vmem:[#allocation2 + $0x8] sm:$0xff] %vm430, %v395
        %p479 = scmp.eq.s32.totalorder %s21, %s20
        // Predicated region
        $region41: #{gpt_forward.12} parent=35 // pred_check
          %p480 = pneg %p479
        $region42: #{gpt_forward.12} parent=35 // pred_check_branch
          %482 = sbr.rel (%p480) target = $region44
        $region43: #{gpt_forward.12} parent=35 // pred_region
          %v483 = vld [vmem:[#allocation4] sm:$0xff]
          %v484 = vld [vmem:[#allocation4 + $0x8] sm:$0xff]
          %v485 = vld [vmem:[#allocation3] sm:$0xff]
          %v486 = vld [vmem:[#allocation3 + $0x8] sm:$0xff]
          %v487 = vrcp.pop %v485
          %v488 = vrcp.pop %v486
          %490 = vset.pattern.permute.xlu0 0
          %491 = vperm.xlu0 %490, %v487
          %v492 = vpop.permute.xlu0 %491
          %495 = vset.pattern.permute.xlu0 0
          %496 = vperm.xlu0 %495, %v488
          %v497 = vpop.permute.xlu0 %496
          %v499 = vmul.f32 %v483, %v492
          %v500 = vmul.f32 %v484, %v497
          %v501 = vpack.c.bf16 %v499, %v499
          %v502 = vpack.c.bf16 %v500, %v500
          %vm503 = vcmask 257024
          %504 = vst.msk [vmem:[%s315] sm:$0xf] %vm503, %v501
          %505 = vst.msk [vmem:[%s315 + $0x4] sm:$0xf] %vm503, %v502
        $region44: #{gpt_forward.12} parent=35 // pred_fallthru
          _
      $region36: #{gpt_forward.12} parent=31 // pred_fallthru
        _
      %s506 = smul.u32 2, %s20
      %p507 = scmp.lt.s32.totalorder %s19, 7
      %s508 = scalar_select %p507, %s19, 7
      %p509 = scmp.lt.s32.totalorder %s506, 1
      %s510 = scalar_select %p509, %s506, 1
      %s511 = smul.addr %s508, 2
      %s512 = sadd.s32 %s510, %s511
      %s513 = smul.addr %s512, 4
      %s514 = scalar_lea.vmem %s3, %s513
      // Predicated region
      $region45: #{gpt_forward.12} parent=31 // pred_check
        %p515 = pneg %p145
      $region46: #{gpt_forward.12} parent=31 // pred_check_branch
        %517 = sbr.rel (%p515) target = $region48
      $region47: #{gpt_forward.12} parent=31 // pred_region
        %s518 = smul.u32 2, %s20
      $region48: #{gpt_forward.12} parent=31 // pred_fallthru
        _
    $region32: #{gpt_forward.12} parent=5 // pred_fallthru
      _
    %p519 = scmp.le.s32.totalorder 2, %s9
    // Predicated region
    $region49: #{gpt_forward.12} parent=5 // pred_check
      %p520 = pneg %p519
    $region50: #{gpt_forward.12} parent=5 // pred_check_branch
      %522 = sbr.rel (%p520) target = $region52
    $region51: #{gpt_forward.12} parent=5 // pred_region
      %s523 = ssub.s32 %s9, 2
      // Predicated region
      $region53: #{gpt_forward.12} parent=51 // pred_check
        %p524 = pneg %p151
      $region54: #{gpt_forward.12} parent=51 // pred_check_branch
        %526 = sbr.rel (%p524) target = $region56
      $region55: #{gpt_forward.12} parent=51 // pred_region
        %s527 = smul.u32 2, %s23
        %p528 = scmp.lt.s32.totalorder %s22, 7
        %s529 = scalar_select %p528, %s22, 7
        %p530 = scmp.lt.s32.totalorder %s527, 1
        %s531 = scalar_select %p530, %s527, 1
        %s532 = smul.addr %s529, 2
        %s533 = sadd.s32 %s531, %s532
        %s534 = smul.addr %s533, 4
        %s535 = scalar_lea.vmem %s3, %s534
      $region56: #{gpt_forward.12} parent=51 // pred_fallthru
        _
    $region52: #{gpt_forward.12} parent=5 // pred_fallthru
      _
  $region6: #{gpt_forward.12} parent=0 // loop_footer
    %s13 = sadd.s32 1, %s9
  $region7: #{gpt_forward.12} parent=0 // loop_footer_branch
    %8 = sbr.rel target = $region3
  $region8: #{gpt_forward.12} parent=0 // loop_exit
    _

// kernel: gpt_forward.11
$region0: #{gpt_forward.11}
  #allocation0 [shape = 'u32[]', space=smem, size = 0x4, offset = 0x4, fixed_abs, tag = 'smem constant byte address 0x4 - core index']
  #allocation1 [shape = 'u32[72,128]{1,0:T(1,128)}', space=vmem, size = 0x9000, scoped, tag = 'internal scratch']
  #allocation2 [shape = 'f32[32,384]{1,0:T(8,128)}', space=vmem, size = 0xc000, scoped, tag = 'scratch operand']
  %s0 = inlined_call_operand.vmem [shape: bf16[32,128], index: 0, kind: input, shape index: {}]
  %s1 = inlined_call_operand.hbm [shape: bf16[128,384], index: 1, kind: input, shape index: {}]
  %s2 = inlined_call_operand.vmem [shape: bf16[1,384], index: 2, kind: input, shape index: {}]
  %s3 = inlined_call_operand.vmem [shape: bf16[32,384], index: 3, kind: output, shape index: {}]
  %s4 = sld [smem:[#allocation0]]
  $region34: #{gpt_forward.11} parent=0
    _
  %s6 = ssub.s32 1, %s4
  %s7 = scalar_select 0, %s6, %s4
  $region1: #{gpt_forward.11} parent=0
    #allocation3 [shape = 'u8[98304]{0}', space=vmem, size = 0x18000, scoped, tag = 'input window, operand 1, single buffered']
    #allocation4 [shape = 's32[1]{0}', space=sflag, size = 0x4, scoped, tag = 'scoped memory for gpt_forward.11']
    %8 = vsyncpa [#allocation4], 0
    // Predicated region
    $region2: #{gpt_forward.11} parent=1 // pred_check
      _
    $region3: #{gpt_forward.11} parent=1 // pred_check_branch
      %10 = sbr.rel (0) target = $region5
    $region4: #{gpt_forward.11} parent=1 // pred_region
      _
    $region5: #{gpt_forward.11} parent=1 // pred_fallthru
      _
    // Predicated region
    $region6: #{gpt_forward.11} parent=1 // pred_check
      _
    $region7: #{gpt_forward.11} parent=1 // pred_check_branch
      %12 = sbr.rel (0) target = $region9
    $region8: #{gpt_forward.11} parent=1 // pred_region
      %14 = vsyncadd [#allocation4], 0
      %s15 = sshll.u32 %s1, 4
      %s16 = int_to_ptr.hbm [resolvable:$true] %s15
      %s17 = sshll.u32 [#allocation3], 4
      %s18 = int_to_ptr.vmem [resolvable:$true] %s17
      %23 = dma.hbm_to_vmem [thread:$0]  %s16, 3072, %s18, [#allocation4], 192, 192, 12
    $region9: #{gpt_forward.11} parent=1 // pred_fallthru
      _
    // Predicated region
    $region10: #{gpt_forward.11} parent=1 // pred_check
      _
    $region11: #{gpt_forward.11} parent=1 // pred_check_branch
      %25 = sbr.rel (0) target = $region13
    $region12: #{gpt_forward.11} parent=1 // pred_region
      _
    $region13: #{gpt_forward.11} parent=1 // pred_fallthru
      _
    // Predicated region
    $region14: #{gpt_forward.11} parent=1 // pred_check
      _
    $region15: #{gpt_forward.11} parent=1 // pred_check_branch
      %27 = sbr.rel (0) target = $region17
    $region16: #{gpt_forward.11} parent=1 // pred_region
      %29 = dma.done [#allocation4], 3072
    $region17: #{gpt_forward.11} parent=1 // pred_fallthru
      _
    %p30 = scmp.eq.s32.totalorder 0, 0
    // Predicated region
    $region18: #{gpt_forward.11} parent=1 // pred_check
      %p31 = pneg %p30
    $region19: #{gpt_forward.11} parent=1 // pred_check_branch
      %33 = sbr.rel (%p31) target = $region21
    $region20: #{gpt_forward.11} parent=1 // pred_region
      %34 = vst [vmem:[#allocation2] sm:$0xff] 0.0
      %35 = vst [vmem:[#allocation2 + $0x8] sm:$0xff] 0.0
      %36 = vst [vmem:[#allocation2 + $0x10] sm:$0xff] 0.0
      %37 = vst [vmem:[#allocation2 + $0x18] sm:$0xff] 0.0
      %38 = vst [vmem:[#allocation2 + $0x20] sm:$0xff] 0.0
      %39 = vst [vmem:[#allocation2 + $0x28] sm:$0xff] 0.0
      %40 = vst [vmem:[#allocation2 + $0x30] sm:$0xff] 0.0
      %41 = vst [vmem:[#allocation2 + $0x38] sm:$0xff] 0.0
      %42 = vst [vmem:[#allocation2 + $0x40] sm:$0xff] 0.0
      %43 = vst [vmem:[#allocation2 + $0x48] sm:$0xff] 0.0
      %44 = vst [vmem:[#allocation2 + $0x50] sm:$0xff] 0.0
      %45 = vst [vmem:[#allocation2 + $0x58] sm:$0xff] 0.0
    $region21: #{gpt_forward.11} parent=1 // pred_fallthru
      _
    %v46 = vld [vmem:[#allocation2] sm:$0xff]
    %v47 = vld [vmem:[#allocation2 + $0x8] sm:$0xff]
    %v48 = vld [vmem:[#allocation2 + $0x10] sm:$0xff]
    %v49 = vld [vmem:[#allocation2 + $0x18] sm:$0xff]
    %v50 = vld [vmem:[#allocation2 + $0x20] sm:$0xff]
    %v51 = vld [vmem:[#allocation2 + $0x28] sm:$0xff]
    %v52 = vld [vmem:[#allocation2 + $0x30] sm:$0xff]
    %v53 = vld [vmem:[#allocation2 + $0x38] sm:$0xff]
    %v54 = vld [vmem:[#allocation2 + $0x40] sm:$0xff]
    %v55 = vld [vmem:[#allocation2 + $0x48] sm:$0xff]
    %v56 = vld [vmem:[#allocation2 + $0x50] sm:$0xff]
    %v57 = vld [vmem:[#allocation2 + $0x58] sm:$0xff]
    %v58 = vld [vmem:[%s0] sm:$0xf]
    %v59 = vld [vmem:[%s0 + $0x4] sm:$0xf]
    %v60 = vld [vmem:[%s0 + $0x8] sm:$0xf]
    %v61 = vld [vmem:[%s0 + $0xc] sm:$0xf]
    %v62 = vld [vmem:[#allocation3] sm:$0xff]
    %v63 = vld [vmem:[#allocation3 + $0x8] sm:$0xf]
    %v64 = vld [vmem:[#allocation3 + $0xc] sm:$0xff]
    %v65 = vld [vmem:[#allocation3 + $0x14] sm:$0xf]
    %v66 = vld [vmem:[#allocation3 + $0x18] sm:$0xff]
    %v67 = vld [vmem:[#allocation3 + $0x20] sm:$0xf]
    %v68 = vld [vmem:[#allocation3 + $0x24] sm:$0xff]
    %v69 = vld [vmem:[#allocation3 + $0x2c] sm:$0xf]
    %v70 = vld [vmem:[#allocation3 + $0x30] sm:$0xff]
    %v71 = vld [vmem:[#allocation3 + $0x38] sm:$0xf]
    %v72 = vld [vmem:[#allocation3 + $0x3c] sm:$0xff]
    %v73 = vld [vmem:[#allocation3 + $0x44] sm:$0xf]
    %v74 = vld [vmem:[#allocation3 + $0x48] sm:$0xff]
    %v75 = vld [vmem:[#allocation3 + $0x50] sm:$0xf]
    %v76 = vld [vmem:[#allocation3 + $0x54] sm:$0xff]
    %v77 = vld [vmem:[#allocation3 + $0x5c] sm:$0xf]
    %v78 = vld [vmem:[#allocation3 + $0x60] sm:$0xff]
    %v79 = vld [vmem:[#allocation3 + $0x68] sm:$0xf]
    %v80 = vld [vmem:[#allocation3 + $0x6c] sm:$0xff]
    %v81 = vld [vmem:[#allocation3 + $0x74] sm:$0xf]
    %v82 = vld [vmem:[#allocation3 + $0x78] sm:$0xff]
    %v83 = vld [vmem:[#allocation3 + $0x80] sm:$0xf]
    %v84 = vld [vmem:[#allocation3 + $0x84] sm:$0xff]
    %v85 = vld [vmem:[#allocation3 + $0x8c] sm:$0xf]
    %v86 = vld [vmem:[#allocation3 + $0x90] sm:$0xff]
    %v87 = vld [vmem:[#allocation3 + $0x98] sm:$0xf]
    %v88 = vld [vmem:[#allocation3 + $0x9c] sm:$0xff]
    %v89 = vld [vmem:[#allocation3 + $0xa4] sm:$0xf]
    %v90 = vld [vmem:[#allocation3 + $0xa8] sm:$0xff]
    %v91 = vld [vmem:[#allocation3 + $0xb0] sm:$0xf]
    %v92 = vld [vmem:[#allocation3 + $0xb4] sm:$0xff]
    %v93 = vld [vmem:[#allocation3 + $0xbc] sm:$0xf]
    %v98 = vunpack.c.l.b16 %v58
    %v99 = vunpack.c.l.b16 %v59
    %v100 = vunpack.c.l.b16 %v60
    %v101 = vunpack.c.l.b16 %v61
    %v102 = vpack.c.b16 %v99, %v98
    %v103 = vpack.c.b16 %v101, %v100
    %v138 = vunpack.c.l.b16 %v62
    %v139 = vunpack.c.h.b16 %v62
    %v140 = vunpack.c.l.b16 %v63
    %v141 = vunpack.c.l.b16 %v64
    %v142 = vunpack.c.h.b16 %v64
    %v143 = vunpack.c.l.b16 %v65
    %v144 = vunpack.c.l.b16 %v66
    %v145 = vunpack.c.h.b16 %v66
    %v146 = vunpack.c.l.b16 %v67
    %v147 = vunpack.c.l.b16 %v68
    %v148 = vunpack.c.h.b16 %v68
    %v149 = vunpack.c.l.b16 %v69
    %v150 = vunpack.c.l.b16 %v70
    %v151 = vunpack.c.h.b16 %v70
    %v152 = vunpack.c.l.b16 %v71
    %v153 = vunpack.c.l.b16 %v72
    %v154 = vunpack.c.h.b16 %v72
    %v155 = vunpack.c.l.b16 %v73
    %v156 = vunpack.c.l.b16 %v74
    %v157 = vunpack.c.h.b16 %v74
    %v158 = vunpack.c.l.b16 %v75
    %v159 = vunpack.c.l.b16 %v76
    %v160 = vunpack.c.h.b16 %v76
    %v161 = vunpack.c.l.b16 %v77
    %v162 = vunpack.c.l.b16 %v78
    %v163 = vunpack.c.h.b16 %v78
    %v164 = vunpack.c.l.b16 %v79
    %v165 = vunpack.c.l.b16 %v80
    %v166 = vunpack.c.h.b16 %v80
    %v167 = vunpack.c.l.b16 %v81
    %v168 = vunpack.c.l.b16 %v82
    %v169 = vunpack.c.h.b16 %v82
    %v170 = vunpack.c.l.b16 %v83
    %v171 = vunpack.c.l.b16 %v84
    %v172 = vunpack.c.h.b16 %v84
    %v173 = vunpack.c.l.b16 %v85
    %v174 = vunpack.c.l.b16 %v86
    %v175 = vunpack.c.h.b16 %v86
    %v176 = vunpack.c.l.b16 %v87
    %v177 = vunpack.c.l.b16 %v88
    %v178 = vunpack.c.h.b16 %v88
    %v179 = vunpack.c.l.b16 %v89
    %v180 = vunpack.c.l.b16 %v90
    %v181 = vunpack.c.h.b16 %v90
    %v182 = vunpack.c.l.b16 %v91
    %v183 = vunpack.c.l.b16 %v92
    %v184 = vunpack.c.h.b16 %v92
    %v185 = vunpack.c.l.b16 %v93
    %v186 = vpack.c.b16 %v141, %v138
    %v187 = vpack.c.b16 %v142, %v139
    %v188 = vpack.c.b16 %v143, %v140
    %v189 = vpack.c.b16 %v147, %v144
    %v190 = vpack.c.b16 %v148, %v145
    %v191 = vpack.c.b16 %v149, %v146
    %v192 = vpack.c.b16 %v153, %v150
    %v193 = vpack.c.b16 %v154, %v151
    %v194 = vpack.c.b16 %v155, %v152
    %v195 = vpack.c.b16 %v159, %v156
    %v196 = vpack.c.b16 %v160, %v157
    %v197 = vpack.c.b16 %v161, %v158
    %v198 = vpack.c.b16 %v165, %v162
    %v199 = vpack.c.b16 %v166, %v163
    %v200 = vpack.c.b16 %v167, %v164
    %v201 = vpack.c.b16 %v171, %v168
    %v202 = vpack.c.b16 %v172, %v169
    %v203 = vpack.c.b16 %v173, %v170
    %v204 = vpack.c.b16 %v177, %v174
    %v205 = vpack.c.b16 %v178, %v175
    %v206 = vpack.c.b16 %v179, %v176
    %v207 = vpack.c.b16 %v183, %v180
    %v208 = vpack.c.b16 %v184, %v181
    %v209 = vpack.c.b16 %v185, %v182
    %234 = vmatpush.bf16.msra.mxu0 %v207
    %235 = vmatpush.bf16.msra.mxu0 %v204
    %236 = vmatpush.bf16.msra.mxu0 %v201
    %237 = vmatpush.bf16.msra.mxu0 %v198
    %238 = vmatpush.bf16.msra.mxu0 %v195
    %239 = vmatpush.bf16.msra.mxu0 %v192
    %240 = vmatpush.bf16.msra.mxu0 %v189
    %241 = vmatpush.bf16.msra.mxu0 %v186
    %242 = vmatmul.bf16.gmra.mxu0 %v102
    %v243 = vpop.f32.mrf.mxu0
    %v244 = vadd.f32 0.0, %v243
    %v245 = vpop.f32.mrf.mxu0
    %v246 = vadd.f32 0.0, %v245
    %247 = vmatmul.bf16.gmra.mxu0 %v103
    %v248 = vpop.f32.mrf.mxu0
    %v249 = vadd.f32 0.0, %v248
    %v250 = vpop.f32.mrf.mxu0
    %v251 = vadd.f32 0.0, %v250
    %252 = vdwg.mxu0
    %253 = vmatpush.bf16.msra.mxu0 %v208
    %254 = vmatpush.bf16.msra.mxu0 %v205
    %255 = vmatpush.bf16.msra.mxu0 %v202
    %256 = vmatpush.bf16.msra.mxu0 %v199
    %257 = vmatpush.bf16.msra.mxu0 %v196
    %258 = vmatpush.bf16.msra.mxu0 %v193
    %259 = vmatpush.bf16.msra.mxu0 %v190
    %260 = vmatpush.bf16.msra.mxu0 %v187
    %261 = vmatmul.bf16.gmra.mxu0 %v102
    %v262 = vpop.f32.mrf.mxu0
    %v263 = vadd.f32 0.0, %v262
    %v264 = vpop.f32.mrf.mxu0
    %v265 = vadd.f32 0.0, %v264
    %266 = vmatmul.bf16.gmra.mxu0 %v103
    %v267 = vpop.f32.mrf.mxu0
    %v268 = vadd.f32 0.0, %v267
    %v269 = vpop.f32.mrf.mxu0
    %v270 = vadd.f32 0.0, %v269
    %271 = vdwg.mxu0
    %272 = vmatpush.bf16.msra.mxu0 %v209
    %273 = vmatpush.bf16.msra.mxu0 %v206
    %274 = vmatpush.bf16.msra.mxu0 %v203
    %275 = vmatpush.bf16.msra.mxu0 %v200
    %276 = vmatpush.bf16.msra.mxu0 %v197
    %277 = vmatpush.bf16.msra.mxu0 %v194
    %278 = vmatpush.bf16.msra.mxu0 %v191
    %279 = vmatpush.bf16.msra.mxu0 %v188
    %280 = vmatmul.bf16.gmra.mxu0 %v102
    %v281 = vpop.f32.mrf.mxu0
    %v282 = vadd.f32 0.0, %v281
    %v283 = vpop.f32.mrf.mxu0
    %v284 = vadd.f32 0.0, %v283
    %285 = vmatmul.bf16.gmra.mxu0 %v103
    %v286 = vpop.f32.mrf.mxu0
    %v287 = vadd.f32 0.0, %v286
    %v288 = vpop.f32.mrf.mxu0
    %v289 = vadd.f32 0.0, %v288
    %290 = vdwg.mxu0
    %v291 = vadd.f32 %v46, %v244
    %v292 = vadd.f32 %v47, %v263
    %v293 = vadd.f32 %v48, %v282
    %v294 = vadd.f32 %v49, %v246
    %v295 = vadd.f32 %v50, %v265
    %v296 = vadd.f32 %v51, %v284
    %v297 = vadd.f32 %v52, %v249
    %v298 = vadd.f32 %v53, %v268
    %v299 = vadd.f32 %v54, %v287
    %v300 = vadd.f32 %v55, %v251
    %v301 = vadd.f32 %v56, %v270
    %v302 = vadd.f32 %v57, %v289
    %303 = vst [vmem:[#allocation2] sm:$0xff] %v291
    %304 = vst [vmem:[#allocation2 + $0x8] sm:$0xff] %v292
    %305 = vst [vmem:[#allocation2 + $0x10] sm:$0xff] %v293
    %306 = vst [vmem:[#allocation2 + $0x18] sm:$0xff] %v294
    %307 = vst [vmem:[#allocation2 + $0x20] sm:$0xff] %v295
    %308 = vst [vmem:[#allocation2 + $0x28] sm:$0xff] %v296
    %309 = vst [vmem:[#allocation2 + $0x30] sm:$0xff] %v297
    %310 = vst [vmem:[#allocation2 + $0x38] sm:$0xff] %v298
    %311 = vst [vmem:[#allocation2 + $0x40] sm:$0xff] %v299
    %312 = vst [vmem:[#allocation2 + $0x48] sm:$0xff] %v300
    %313 = vst [vmem:[#allocation2 + $0x50] sm:$0xff] %v301
    %314 = vst [vmem:[#allocation2 + $0x58] sm:$0xff] %v302
    // Predicated region
    $region22: #{gpt_forward.11} parent=1 // pred_check
      %p315 = pneg %p30
    $region23: #{gpt_forward.11} parent=1 // pred_check_branch
      %317 = sbr.rel (%p315) target = $region25
    $region24: #{gpt_forward.11} parent=1 // pred_region
      %v318 = vld [vmem:[#allocation2] sm:$0xff]
      %v319 = vld [vmem:[#allocation2 + $0x8] sm:$0xff]
      %v320 = vld [vmem:[#allocation2 + $0x10] sm:$0xff]
      %v321 = vld [vmem:[#allocation2 + $0x18] sm:$0xff]
      %v322 = vld [vmem:[#allocation2 + $0x20] sm:$0xff]
      %v323 = vld [vmem:[#allocation2 + $0x28] sm:$0xff]
      %v324 = vld [vmem:[#allocation2 + $0x30] sm:$0xff]
      %v325 = vld [vmem:[#allocation2 + $0x38] sm:$0xff]
      %v326 = vld [vmem:[#allocation2 + $0x40] sm:$0xff]
      %v327 = vld [vmem:[#allocation2 + $0x48] sm:$0xff]
      %v328 = vld [vmem:[#allocation2 + $0x50] sm:$0xff]
      %v329 = vld [vmem:[#allocation2 + $0x58] sm:$0xff]
      %v330 = vld [vmem:[%s2] sm:$0x7]
      %v331 = vunpack.c.l.bf16 %v330
      %v333 = vperm.slane %v331, 0
      %v334 = vperm.slane %v331, 2
      %v335 = vperm.slane %v331, 4
      %v339 = vperm.slane %v333, 0
      %v340 = vperm.slane %v334, 0
      %v341 = vperm.slane %v335, 0
      %v342 = vadd.f32 %v318, %v339
      %v343 = vadd.f32 %v319, %v340
      %v344 = vadd.f32 %v320, %v341
      %v345 = vadd.f32 %v321, %v339
      %v346 = vadd.f32 %v322, %v340
      %v347 = vadd.f32 %v323, %v341
      %v348 = vadd.f32 %v324, %v339
      %v349 = vadd.f32 %v325, %v340
      %v350 = vadd.f32 %v326, %v341
      %v351 = vadd.f32 %v327, %v339
      %v352 = vadd.f32 %v328, %v340
      %v353 = vadd.f32 %v329, %v341
      %v354 = vpack.c.bf16 %v343, %v342
      %v355 = vpack.c.bf16 %v344, %v344
      %v356 = vpack.c.bf16 %v346, %v345
      %v357 = vpack.c.bf16 %v347, %v347
      %v358 = vpack.c.bf16 %v349, %v348
      %v359 = vpack.c.bf16 %v350, %v350
      %v360 = vpack.c.bf16 %v352, %v351
      %v361 = vpack.c.bf16 %v353, %v353
      %362 = vst [vmem:[%s3] sm:$0xff] %v354
      %363 = vst [vmem:[%s3 + $0x8] sm:$0xf] %v355
      %364 = vst [vmem:[%s3 + $0xc] sm:$0xff] %v356
      %365 = vst [vmem:[%s3 + $0x14] sm:$0xf] %v357
      %366 = vst [vmem:[%s3 + $0x18] sm:$0xff] %v358
      %367 = vst [vmem:[%s3 + $0x20] sm:$0xf] %v359
      %368 = vst [vmem:[%s3 + $0x24] sm:$0xff] %v360
      %369 = vst [vmem:[%s3 + $0x2c] sm:$0xf] %v361
    $region25: #{gpt_forward.11} parent=1 // pred_fallthru
      _
    // Predicated region
    $region26: #{gpt_forward.11} parent=1 // pred_check
      _
    $region27: #{gpt_forward.11} parent=1 // pred_check_branch
      %371 = sbr.rel (0) target = $region29
    $region28: #{gpt_forward.11} parent=1 // pred_region
      _
    $region29: #{gpt_forward.11} parent=1 // pred_fallthru
      _
    // Predicated region
    $region30: #{gpt_forward.11} parent=1 // pred_check
      _
    $region31: #{gpt_forward.11} parent=1 // pred_check_branch
      %373 = sbr.rel (0) target = $region33
    $region32: #{gpt_forward.11} parent=1 // pred_region
      _
    $region33: #{gpt_forward.11} parent=1 // pred_fallthru
      _
    %374 = vsyncpa [#allocation4], 1

// kernel: gpt_forward.13
$region0: #{gpt_forward.13}
  #allocation0 [shape = 'u32[]', space=smem, size = 0x4, offset = 0x4, fixed_abs, tag = 'smem constant byte address 0x4 - core index']
  #allocation1 [shape = 'u32[72,128]{1,0:T(1,128)}', space=vmem, size = 0x9000, scoped, tag = 'internal scratch']
  #allocation2 [shape = 'f32[32,128]{1,0:T(8,128)}', space=vmem, size = 0x4000, scoped, tag = 'scratch operand']
  %s0 = inlined_call_operand.vmem [shape: bf16[32,128], index: 0, kind: input, shape index: {}]
  %s1 = inlined_call_operand.vmem [shape: bf16[128,128], index: 1, kind: input, shape index: {}]
  %s2 = inlined_call_operand.vmem [shape: bf16[1,128], index: 2, kind: input, shape index: {}]
  %s3 = inlined_call_operand.vmem [shape: bf16[32,128], index: 3, kind: input, shape index: {}]
  %s4 = inlined_call_operand.vmem [shape: bf16[1,128], index: 4, kind: input, shape index: {}]
  %s5 = inlined_call_operand.vmem [shape: bf16[1,128], index: 5, kind: input, shape index: {}]
  %s6 = inlined_call_operand.vmem [shape: bf16[32,128], index: 6, kind: output, shape index: {}]
  %s7 = sld [smem:[#allocation0]]
  $region42: #{gpt_forward.13} parent=0
    _
  %s9 = ssub.s32 1, %s7
  %s10 = scalar_select 0, %s9, %s7
  // Predicated region
  $region2: #{gpt_forward.13} parent=0 // pred_check
    _
  $region3: #{gpt_forward.13} parent=0 // pred_check_branch
    %12 = sbr.rel (0) target = $region5
  $region4: #{gpt_forward.13} parent=0 // pred_region
    _
  $region5: #{gpt_forward.13} parent=0 // pred_fallthru
    _
  // Predicated region
  $region6: #{gpt_forward.13} parent=0 // pred_check
    _
  $region7: #{gpt_forward.13} parent=0 // pred_check_branch
    %14 = sbr.rel (0) target = $region9
  $region8: #{gpt_forward.13} parent=0 // pred_region
    _
  $region9: #{gpt_forward.13} parent=0 // pred_fallthru
    _
  // Predicated region
  $region10: #{gpt_forward.13} parent=0 // pred_check
    _
  $region11: #{gpt_forward.13} parent=0 // pred_check_branch
    %16 = sbr.rel (0) target = $region13
  $region12: #{gpt_forward.13} parent=0 // pred_region
    _
  $region13: #{gpt_forward.13} parent=0 // pred_fallthru
    _
  // Predicated region
  $region14: #{gpt_forward.13} parent=0 // pred_check
    _
  $region15: #{gpt_forward.13} parent=0 // pred_check_branch
    %18 = sbr.rel (0) target = $region17
  $region16: #{gpt_forward.13} parent=0 // pred_region
    _
  $region17: #{gpt_forward.13} parent=0 // pred_fallthru
    _
  // Predicated region
  $region18: #{gpt_forward.13} parent=0 // pred_check
    _
  $region19: #{gpt_forward.13} parent=0 // pred_check_branch
    %20 = sbr.rel (0) target = $region21
  $region20: #{gpt_forward.13} parent=0 // pred_region
    _
  $region21: #{gpt_forward.13} parent=0 // pred_fallthru
    _
  // Predicated region
  $region22: #{gpt_forward.13} parent=0 // pred_check
    _
  $region23: #{gpt_forward.13} parent=0 // pred_check_branch
    %22 = sbr.rel (0) target = $region25
  $region24: #{gpt_forward.13} parent=0 // pred_region
    _
  $region25: #{gpt_forward.13} parent=0 // pred_fallthru
    _
  %p23 = scmp.eq.s32.totalorder 0, 0
  // Predicated region
  $region26: #{gpt_forward.13} parent=0 // pred_check
    %p24 = pneg %p23
  $region27: #{gpt_forward.13} parent=0 // pred_check_branch
    %26 = sbr.rel (%p24) target = $region29
  $region28: #{gpt_forward.13} parent=0 // pred_region
    %27 = vst [vmem:[#allocation2] sm:$0xff] 0.0
    %28 = vst [vmem:[#allocation2 + $0x8] sm:$0xff] 0.0
    %29 = vst [vmem:[#allocation2 + $0x10] sm:$0xff] 0.0
    %30 = vst [vmem:[#allocation2 + $0x18] sm:$0xff] 0.0
  $region29: #{gpt_forward.13} parent=0 // pred_fallthru
    _
  %v31 = vld [vmem:[#allocation2] sm:$0xff]
  %v32 = vld [vmem:[#allocation2 + $0x8] sm:$0xff]
  %v33 = vld [vmem:[#allocation2 + $0x10] sm:$0xff]
  %v34 = vld [vmem:[#allocation2 + $0x18] sm:$0xff]
  %v35 = vld [vmem:[%s0] sm:$0xf]
  %v36 = vld [vmem:[%s0 + $0x4] sm:$0xf]
  %v37 = vld [vmem:[%s0 + $0x8] sm:$0xf]
  %v38 = vld [vmem:[%s0 + $0xc] sm:$0xf]
  %v39 = vld [vmem:[%s1] sm:$0xf]
  %v40 = vld [vmem:[%s1 + $0x4] sm:$0xf]
  %v41 = vld [vmem:[%s1 + $0x8] sm:$0xf]
  %v42 = vld [vmem:[%s1 + $0xc] sm:$0xf]
  %v43 = vld [vmem:[%s1 + $0x10] sm:$0xf]
  %v44 = vld [vmem:[%s1 + $0x14] sm:$0xf]
  %v45 = vld [vmem:[%s1 + $0x18] sm:$0xf]
  %v46 = vld [vmem:[%s1 + $0x1c] sm:$0xf]
  %v47 = vld [vmem:[%s1 + $0x20] sm:$0xf]
  %v48 = vld [vmem:[%s1 + $0x24] sm:$0xf]
  %v49 = vld [vmem:[%s1 + $0x28] sm:$0xf]
  %v50 = vld [vmem:[%s1 + $0x2c] sm:$0xf]
  %v51 = vld [vmem:[%s1 + $0x30] sm:$0xf]
  %v52 = vld [vmem:[%s1 + $0x34] sm:$0xf]
  %v53 = vld [vmem:[%s1 + $0x38] sm:$0xf]
  %v54 = vld [vmem:[%s1 + $0x3c] sm:$0xf]
  %v59 = vunpack.c.l.b16 %v35
  %v60 = vunpack.c.l.b16 %v36
  %v61 = vunpack.c.l.b16 %v37
  %v62 = vunpack.c.l.b16 %v38
  %v63 = vpack.c.b16 %v60, %v59
  %v64 = vpack.c.b16 %v62, %v61
  %v83 = vunpack.c.l.b16 %v39
  %v84 = vunpack.c.l.b16 %v40
  %v85 = vunpack.c.l.b16 %v41
  %v86 = vunpack.c.l.b16 %v42
  %v87 = vunpack.c.l.b16 %v43
  %v88 = vunpack.c.l.b16 %v44
  %v89 = vunpack.c.l.b16 %v45
  %v90 = vunpack.c.l.b16 %v46
  %v91 = vunpack.c.l.b16 %v47
  %v92 = vunpack.c.l.b16 %v48
  %v93 = vunpack.c.l.b16 %v49
  %v94 = vunpack.c.l.b16 %v50
  %v95 = vunpack.c.l.b16 %v51
  %v96 = vunpack.c.l.b16 %v52
  %v97 = vunpack.c.l.b16 %v53
  %v98 = vunpack.c.l.b16 %v54
  %v99 = vpack.c.b16 %v84, %v83
  %v100 = vpack.c.b16 %v86, %v85
  %v101 = vpack.c.b16 %v88, %v87
  %v102 = vpack.c.b16 %v90, %v89
  %v103 = vpack.c.b16 %v92, %v91
  %v104 = vpack.c.b16 %v94, %v93
  %v105 = vpack.c.b16 %v96, %v95
  %v106 = vpack.c.b16 %v98, %v97
  %115 = vmatpush.bf16.msra.mxu0 %v106
  %116 = vmatpush.bf16.msra.mxu0 %v105
  %117 = vmatpush.bf16.msra.mxu0 %v104
  %118 = vmatpush.bf16.msra.mxu0 %v103
  %119 = vmatpush.bf16.msra.mxu0 %v102
  %120 = vmatpush.bf16.msra.mxu0 %v101
  %121 = vmatpush.bf16.msra.mxu0 %v100
  %122 = vmatpush.bf16.msra.mxu0 %v99
  %123 = vmatmul.bf16.gmra.mxu0 %v63
  %v124 = vpop.f32.mrf.mxu0
  %v125 = vadd.f32 0.0, %v124
  %v126 = vpop.f32.mrf.mxu0
  %v127 = vadd.f32 0.0, %v126
  %128 = vmatmul.bf16.gmra.mxu0 %v64
  %v129 = vpop.f32.mrf.mxu0
  %v130 = vadd.f32 0.0, %v129
  %v131 = vpop.f32.mrf.mxu0
  %v132 = vadd.f32 0.0, %v131
  %133 = vdwg.mxu0
  %v134 = vadd.f32 %v31, %v125
  %v135 = vadd.f32 %v32, %v127
  %v136 = vadd.f32 %v33, %v130
  %v137 = vadd.f32 %v34, %v132
  %138 = vst [vmem:[#allocation2] sm:$0xff] %v134
  %139 = vst [vmem:[#allocation2 + $0x8] sm:$0xff] %v135
  %140 = vst [vmem:[#allocation2 + $0x10] sm:$0xff] %v136
  %141 = vst [vmem:[#allocation2 + $0x18] sm:$0xff] %v137
  // Predicated region
  $region30: #{gpt_forward.13} parent=0 // pred_check
    %p142 = pneg %p23
  $region31: #{gpt_forward.13} parent=0 // pred_check_branch
    %144 = sbr.rel (%p142) target = $region33
  $region32: #{gpt_forward.13} parent=0 // pred_region
    %v145 = vld [vmem:[#allocation2] sm:$0xff]
    %v146 = vld [vmem:[#allocation2 + $0x8] sm:$0xff]
    %v147 = vld [vmem:[#allocation2 + $0x10] sm:$0xff]
    %v148 = vld [vmem:[#allocation2 + $0x18] sm:$0xff]
    %v149 = vld [vmem:[%s2] sm:$0x1]
    %v150 = vunpack.c.l.bf16 %v149
    %v151 = vperm.slane %v150, 0
    %v152 = vadd.f32 %v145, %v151
    %v153 = vadd.f32 %v146, %v151
    %v154 = vadd.f32 %v147, %v151
    %v155 = vadd.f32 %v148, %v151
    %v156 = vld [vmem:[%s3] sm:$0xf]
    %v157 = vld [vmem:[%s3 + $0x4] sm:$0xf]
    %v158 = vld [vmem:[%s3 + $0x8] sm:$0xf]
    %v159 = vld [vmem:[%s3 + $0xc] sm:$0xf]
    %v160 = vunpack.c.l.bf16 %v156
    %v161 = vunpack.c.l.bf16 %v157
    %v162 = vunpack.c.l.bf16 %v158
    %v163 = vunpack.c.l.bf16 %v159
    %v164 = vadd.f32 %v152, %v160
    %v165 = vadd.f32 %v153, %v161
    %v166 = vadd.f32 %v154, %v162
    %v167 = vadd.f32 %v155, %v163
    %168 = vadd.xlane.f32.xlu0 %v164
    %v169 = vpop.xlane.xlu0 %168
    %170 = vadd.xlane.f32.xlu0 %v165
    %v171 = vpop.xlane.xlu0 %170
    %172 = vadd.xlane.f32.xlu0 %v166
    %v173 = vpop.xlane.xlu0 %172
    %174 = vadd.xlane.f32.xlu0 %v167
    %v175 = vpop.xlane.xlu0 %174
    %v176 = vrcp.pop 128.0
    %v177 = vmul.f32 128.0, %v176
    %v178 = vsub.f32 1.0, %v177
    %v179 = vmul.f32 %v176, %v178
    %v180 = vadd.f32 %v176, %v179
    %vm181 = vweird.f32 %v176
    %v182 = vsel %vm181, %v176, %v180
    %v183 = vmul.f32 %v169, %v182
    %v184 = vmul.f32 %v171, %v182
    %v185 = vmul.f32 %v173, %v182
    %v186 = vmul.f32 %v175, %v182
    %v187 = vsub.f32 %v164, %v183
    %v188 = vsub.f32 %v165, %v184
    %v189 = vsub.f32 %v166, %v185
    %v190 = vsub.f32 %v167, %v186
    %v191 = vmul.f32 %v187, %v187
    %v192 = vmul.f32 %v188, %v188
    %v193 = vmul.f32 %v189, %v189
    %v194 = vmul.f32 %v190, %v190
    %195 = vadd.xlane.f32.xlu0 %v191
    %v196 = vpop.xlane.xlu0 %195
    %197 = vadd.xlane.f32.xlu0 %v192
    %v198 = vpop.xlane.xlu0 %197
    %199 = vadd.xlane.f32.xlu0 %v193
    %v200 = vpop.xlane.xlu0 %199
    %201 = vadd.xlane.f32.xlu0 %v194
    %v202 = vpop.xlane.xlu0 %201
    %v203 = vmul.f32 %v196, %v182
    %v204 = vmul.f32 %v198, %v182
    %v205 = vmul.f32 %v200, %v182
    %v206 = vmul.f32 %v202, %v182
    %v207 = vadd.f32 %v203, 1e-05
    %v208 = vadd.f32 %v204, 1e-05
    %v209 = vadd.f32 %v205, 1e-05
    %v210 = vadd.f32 %v206, 1e-05
    %v211 = vrsqrt.pop %v207
    %v212 = vmul.f32 %v211, %v207
    %v213 = vmul.f32 %v212, %v211
    %v214 = vmul.f32 0.5, %v213
    %v215 = vsub.f32 1.5, %v214
    %v216 = vmul.f32 %v211, %v215
    %vm217 = vweird.f32 %v207
    %vm218 = vweird.f32 %v211
    %vm219 = vmor %vm217, %vm218
    %v220 = vsel %vm219, %v211, %v216
    %v221 = vrsqrt.pop %v208
    %v222 = vmul.f32 %v221, %v208
    %v223 = vmul.f32 %v222, %v221
    %v224 = vmul.f32 0.5, %v223
    %v225 = vsub.f32 1.5, %v224
    %v226 = vmul.f32 %v221, %v225
    %vm227 = vweird.f32 %v208
    %vm228 = vweird.f32 %v221
    %vm229 = vmor %vm227, %vm228
    %v230 = vsel %vm229, %v221, %v226
    %v231 = vrsqrt.pop %v209
    %v232 = vmul.f32 %v231, %v209
    %v233 = vmul.f32 %v232, %v231
    %v234 = vmul.f32 0.5, %v233
    %v235 = vsub.f32 1.5, %v234
    %v236 = vmul.f32 %v231, %v235
    %vm237 = vweird.f32 %v209
    %vm238 = vweird.f32 %v231
    %vm239 = vmor %vm237, %vm238
    %v240 = vsel %vm239, %v231, %v236
    %v241 = vrsqrt.pop %v210
    %v242 = vmul.f32 %v241, %v210
    %v243 = vmul.f32 %v242, %v241
    %v244 = vmul.f32 0.5, %v243
    %v245 = vsub.f32 1.5, %v244
    %v246 = vmul.f32 %v241, %v245
    %vm247 = vweird.f32 %v210
    %vm248 = vweird.f32 %v241
    %vm249 = vmor %vm247, %vm248
    %v250 = vsel %vm249, %v241, %v246
    %v251 = vmul.f32 %v187, %v220
    %v252 = vmul.f32 %v188, %v230
    %v253 = vmul.f32 %v189, %v240
    %v254 = vmul.f32 %v190, %v250
    %v255 = vld [vmem:[%s4] sm:$0x1]
    %v256 = vunpack.c.l.bf16 %v255
    %v257 = vperm.slane %v256, 0
    %v258 = vmul.f32 %v251, %v257
    %v259 = vmul.f32 %v252, %v257
    %v260 = vmul.f32 %v253, %v257
    %v261 = vmul.f32 %v254, %v257
    %v262 = vld [vmem:[%s5] sm:$0x1]
    %v263 = vunpack.c.l.bf16 %v262
    %v264 = vperm.slane %v263, 0
    %v265 = vadd.f32 %v258, %v264
    %v266 = vadd.f32 %v259, %v264
    %v267 = vadd.f32 %v260, %v264
    %v268 = vadd.f32 %v261, %v264
    %v269 = vpack.c.bf16 %v265, %v265
    %v270 = vpack.c.bf16 %v266, %v266
    %v271 = vpack.c.bf16 %v267, %v267
    %v272 = vpack.c.bf16 %v268, %v268
    %273 = vst [vmem:[%s6] sm:$0xf] %v269
    %274 = vst [vmem:[%s6 + $0x4] sm:$0xf] %v270
    %275 = vst [vmem:[%s6 + $0x8] sm:$0xf] %v271
    %276 = vst [vmem:[%s6 + $0xc] sm:$0xf] %v272
  $region33: #{gpt_forward.13} parent=0 // pred_fallthru
    _
  // Predicated region
  $region34: #{gpt_forward.13} parent=0 // pred_check
    _
  $region35: #{gpt_forward.13} parent=0 // pred_check_branch
    %278 = sbr.rel (0) target = $region37
  $region36: #{gpt_forward.13} parent=0 // pred_region
    _
  $region37: #{gpt_forward.13} parent=0 // pred_fallthru
    _
  // Predicated region
  $region38: #{gpt_forward.13} parent=0 // pred_check
    _
  $region39: #{gpt_forward.13} parent=0 // pred_check_branch
    %280 = sbr.rel (0) target = $region41
  $region40: #{gpt_forward.13} parent=0 // pred_region
    _
  $region41: #{gpt_forward.13} parent=0 // pred_fallthru
    _

// kernel: gpt_forward.14
$region0: #{gpt_forward.14}
  #allocation0 [shape = 'u32[]', space=smem, size = 0x4, offset = 0x4, fixed_abs, tag = 'smem constant byte address 0x4 - core index']
  #allocation1 [shape = 'u32[72,128]{1,0:T(1,128)}', space=vmem, size = 0x9000, scoped, tag = 'internal scratch']
  #allocation2 [shape = 'f32[32,512]{1,0:T(8,128)}', space=vmem, size = 0x10000, scoped, tag = 'scratch operand']
  %s0 = inlined_call_operand.vmem [shape: bf16[32,128], index: 0, kind: input, shape index: {}]
  %s1 = inlined_call_operand.vmem [shape: bf16[128,512], index: 1, kind: input, shape index: {}]
  %s2 = inlined_call_operand.vmem [shape: bf16[1,512], index: 2, kind: input, shape index: {}]
  %s3 = inlined_call_operand.vmem [shape: bf16[32,512], index: 3, kind: output, shape index: {}]
  %s4 = sld [smem:[#allocation0]]
  $region30: #{gpt_forward.14} parent=0
    _
  %s6 = ssub.s32 1, %s4
  %s7 = scalar_select 0, %s6, %s4
  // Predicated region
  $region2: #{gpt_forward.14} parent=0 // pred_check
    _
  $region3: #{gpt_forward.14} parent=0 // pred_check_branch
    %9 = sbr.rel (0) target = $region5
  $region4: #{gpt_forward.14} parent=0 // pred_region
    _
  $region5: #{gpt_forward.14} parent=0 // pred_fallthru
    _
  // Predicated region
  $region6: #{gpt_forward.14} parent=0 // pred_check
    _
  $region7: #{gpt_forward.14} parent=0 // pred_check_branch
    %11 = sbr.rel (0) target = $region9
  $region8: #{gpt_forward.14} parent=0 // pred_region
    _
  $region9: #{gpt_forward.14} parent=0 // pred_fallthru
    _
  // Predicated region
  $region10: #{gpt_forward.14} parent=0 // pred_check
    _
  $region11: #{gpt_forward.14} parent=0 // pred_check_branch
    %13 = sbr.rel (0) target = $region13
  $region12: #{gpt_forward.14} parent=0 // pred_region
    _
  $region13: #{gpt_forward.14} parent=0 // pred_fallthru
    _
  %p14 = scmp.eq.s32.totalorder 0, 0
  // Predicated region
  $region14: #{gpt_forward.14} parent=0 // pred_check
    %p15 = pneg %p14
  $region15: #{gpt_forward.14} parent=0 // pred_check_branch
    %17 = sbr.rel (%p15) target = $region17
  $region16: #{gpt_forward.14} parent=0 // pred_region
    %18 = vst [vmem:[#allocation2] sm:$0xff] 0.0
    %19 = vst [vmem:[#allocation2 + $0x8] sm:$0xff] 0.0
    %20 = vst [vmem:[#allocation2 + $0x10] sm:$0xff] 0.0
    %21 = vst [vmem:[#allocation2 + $0x18] sm:$0xff] 0.0
    %22 = vst [vmem:[#allocation2 + $0x20] sm:$0xff] 0.0
    %23 = vst [vmem:[#allocation2 + $0x28] sm:$0xff] 0.0
    %24 = vst [vmem:[#allocation2 + $0x30] sm:$0xff] 0.0
    %25 = vst [vmem:[#allocation2 + $0x38] sm:$0xff] 0.0
    %26 = vst [vmem:[#allocation2 + $0x40] sm:$0xff] 0.0
    %27 = vst [vmem:[#allocation2 + $0x48] sm:$0xff] 0.0
    %28 = vst [vmem:[#allocation2 + $0x50] sm:$0xff] 0.0
    %29 = vst [vmem:[#allocation2 + $0x58] sm:$0xff] 0.0
    %30 = vst [vmem:[#allocation2 + $0x60] sm:$0xff] 0.0
    %31 = vst [vmem:[#allocation2 + $0x68] sm:$0xff] 0.0
    %32 = vst [vmem:[#allocation2 + $0x70] sm:$0xff] 0.0
    %33 = vst [vmem:[#allocation2 + $0x78] sm:$0xff] 0.0
  $region17: #{gpt_forward.14} parent=0 // pred_fallthru
    _
  %v34 = vld [vmem:[#allocation2] sm:$0xff]
  %v35 = vld [vmem:[#allocation2 + $0x8] sm:$0xff]
  %v36 = vld [vmem:[#allocation2 + $0x10] sm:$0xff]
  %v37 = vld [vmem:[#allocation2 + $0x18] sm:$0xff]
  %v38 = vld [vmem:[#allocation2 + $0x20] sm:$0xff]
  %v39 = vld [vmem:[#allocation2 + $0x28] sm:$0xff]
  %v40 = vld [vmem:[#allocation2 + $0x30] sm:$0xff]
  %v41 = vld [vmem:[#allocation2 + $0x38] sm:$0xff]
  %v42 = vld [vmem:[#allocation2 + $0x40] sm:$0xff]
  %v43 = vld [vmem:[#allocation2 + $0x48] sm:$0xff]
  %v44 = vld [vmem:[#allocation2 + $0x50] sm:$0xff]
  %v45 = vld [vmem:[#allocation2 + $0x58] sm:$0xff]
  %v46 = vld [vmem:[#allocation2 + $0x60] sm:$0xff]
  %v47 = vld [vmem:[#allocation2 + $0x68] sm:$0xff]
  %v48 = vld [vmem:[#allocation2 + $0x70] sm:$0xff]
  %v49 = vld [vmem:[#allocation2 + $0x78] sm:$0xff]
  %v50 = vld [vmem:[%s0] sm:$0xf]
  %v51 = vld [vmem:[%s0 + $0x4] sm:$0xf]
  %v52 = vld [vmem:[%s0 + $0x8] sm:$0xf]
  %v53 = vld [vmem:[%s0 + $0xc] sm:$0xf]
  %v54 = vld [vmem:[%s1] sm:$0xff]
  %v55 = vld [vmem:[%s1 + $0x8] sm:$0xff]
  %v56 = vld [vmem:[%s1 + $0x10] sm:$0xff]
  %v57 = vld [vmem:[%s1 + $0x18] sm:$0xff]
  %v58 = vld [vmem:[%s1 + $0x20] sm:$0xff]
  %v59 = vld [vmem:[%s1 + $0x28] sm:$0xff]
  %v60 = vld [vmem:[%s1 + $0x30] sm:$0xff]
  %v61 = vld [vmem:[%s1 + $0x38] sm:$0xff]
  %v62 = vld [vmem:[%s1 + $0x40] sm:$0xff]
  %v63 = vld [vmem:[%s1 + $0x48] sm:$0xff]
  %v64 = vld [vmem:[%s1 + $0x50] sm:$0xff]
  %v65 = vld [vmem:[%s1 + $0x58] sm:$0xff]
  %v66 = vld [vmem:[%s1 + $0x60] sm:$0xff]
  %v67 = vld [vmem:[%s1 + $0x68] sm:$0xff]
  %v68 = vld [vmem:[%s1 + $0x70] sm:$0xff]
  %v69 = vld [vmem:[%s1 + $0x78] sm:$0xff]
  %v70 = vld [vmem:[%s1 + $0x80] sm:$0xff]
  %v71 = vld [vmem:[%s1 + $0x88] sm:$0xff]
  %v72 = vld [vmem:[%s1 + $0x90] sm:$0xff]
  %v73 = vld [vmem:[%s1 + $0x98] sm:$0xff]
  %v74 = vld [vmem:[%s1 + $0xa0] sm:$0xff]
  %v75 = vld [vmem:[%s1 + $0xa8] sm:$0xff]
  %v76 = vld [vmem:[%s1 + $0xb0] sm:$0xff]
  %v77 = vld [vmem:[%s1 + $0xb8] sm:$0xff]
  %v78 = vld [vmem:[%s1 + $0xc0] sm:$0xff]
  %v79 = vld [vmem:[%s1 + $0xc8] sm:$0xff]
  %v80 = vld [vmem:[%s1 + $0xd0] sm:$0xff]
  %v81 = vld [vmem:[%s1 + $0xd8] sm:$0xff]
  %v82 = vld [vmem:[%s1 + $0xe0] sm:$0xff]
  %v83 = vld [vmem:[%s1 + $0xe8] sm:$0xff]
  %v84 = vld [vmem:[%s1 + $0xf0] sm:$0xff]
  %v85 = vld [vmem:[%s1 + $0xf8] sm:$0xff]
  %v90 = vunpack.c.l.b16 %v50
  %v91 = vunpack.c.l.b16 %v51
  %v92 = vunpack.c.l.b16 %v52
  %v93 = vunpack.c.l.b16 %v53
  %v94 = vpack.c.b16 %v91, %v90
  %v95 = vpack.c.b16 %v93, %v92
  %v130 = vunpack.c.l.b16 %v54
  %v131 = vunpack.c.h.b16 %v54
  %v132 = vunpack.c.l.b16 %v55
  %v133 = vunpack.c.h.b16 %v55
  %v134 = vunpack.c.l.b16 %v56
  %v135 = vunpack.c.h.b16 %v56
  %v136 = vunpack.c.l.b16 %v57
  %v137 = vunpack.c.h.b16 %v57
  %v138 = vunpack.c.l.b16 %v58
  %v139 = vunpack.c.h.b16 %v58
  %v140 = vunpack.c.l.b16 %v59
  %v141 = vunpack.c.h.b16 %v59
  %v142 = vunpack.c.l.b16 %v60
  %v143 = vunpack.c.h.b16 %v60
  %v144 = vunpack.c.l.b16 %v61
  %v145 = vunpack.c.h.b16 %v61
  %v146 = vunpack.c.l.b16 %v62
  %v147 = vunpack.c.h.b16 %v62
  %v148 = vunpack.c.l.b16 %v63
  %v149 = vunpack.c.h.b16 %v63
  %v150 = vunpack.c.l.b16 %v64
  %v151 = vunpack.c.h.b16 %v64
  %v152 = vunpack.c.l.b16 %v65
  %v153 = vunpack.c.h.b16 %v65
  %v154 = vunpack.c.l.b16 %v66
  %v155 = vunpack.c.h.b16 %v66
  %v156 = vunpack.c.l.b16 %v67
  %v157 = vunpack.c.h.b16 %v67
  %v158 = vunpack.c.l.b16 %v68
  %v159 = vunpack.c.h.b16 %v68
  %v160 = vunpack.c.l.b16 %v69
  %v161 = vunpack.c.h.b16 %v69
  %v162 = vunpack.c.l.b16 %v70
  %v163 = vunpack.c.h.b16 %v70
  %v164 = vunpack.c.l.b16 %v71
  %v165 = vunpack.c.h.b16 %v71
  %v166 = vunpack.c.l.b16 %v72
  %v167 = vunpack.c.h.b16 %v72
  %v168 = vunpack.c.l.b16 %v73
  %v169 = vunpack.c.h.b16 %v73
  %v170 = vunpack.c.l.b16 %v74
  %v171 = vunpack.c.h.b16 %v74
  %v172 = vunpack.c.l.b16 %v75
  %v173 = vunpack.c.h.b16 %v75
  %v174 = vunpack.c.l.b16 %v76
  %v175 = vunpack.c.h.b16 %v76
  %v176 = vunpack.c.l.b16 %v77
  %v177 = vunpack.c.h.b16 %v77
  %v178 = vunpack.c.l.b16 %v78
  %v179 = vunpack.c.h.b16 %v78
  %v180 = vunpack.c.l.b16 %v79
  %v181 = vunpack.c.h.b16 %v79
  %v182 = vunpack.c.l.b16 %v80
  %v183 = vunpack.c.h.b16 %v80
  %v184 = vunpack.c.l.b16 %v81
  %v185 = vunpack.c.h.b16 %v81
  %v186 = vunpack.c.l.b16 %v82
  %v187 = vunpack.c.h.b16 %v82
  %v188 = vunpack.c.l.b16 %v83
  %v189 = vunpack.c.h.b16 %v83
  %v190 = vunpack.c.l.b16 %v84
  %v191 = vunpack.c.h.b16 %v84
  %v192 = vunpack.c.l.b16 %v85
  %v193 = vunpack.c.h.b16 %v85
  %v194 = vpack.c.b16 %v134, %v130
  %v195 = vpack.c.b16 %v135, %v131
  %v196 = vpack.c.b16 %v136, %v132
  %v197 = vpack.c.b16 %v137, %v133
  %v198 = vpack.c.b16 %v142, %v138
  %v199 = vpack.c.b16 %v143, %v139
  %v200 = vpack.c.b16 %v144, %v140
  %v201 = vpack.c.b16 %v145, %v141
  %v202 = vpack.c.b16 %v150, %v146
  %v203 = vpack.c.b16 %v151, %v147
  %v204 = vpack.c.b16 %v152, %v148
  %v205 = vpack.c.b16 %v153, %v149
  %v206 = vpack.c.b16 %v158, %v154
  %v207 = vpack.c.b16 %v159, %v155
  %v208 = vpack.c.b16 %v160, %v156
  %v209 = vpack.c.b16 %v161, %v157
  %v210 = vpack.c.b16 %v166, %v162
  %v211 = vpack.c.b16 %v167, %v163
  %v212 = vpack.c.b16 %v168, %v164
  %v213 = vpack.c.b16 %v169, %v165
  %v214 = vpack.c.b16 %v174, %v170
  %v215 = vpack.c.b16 %v175, %v171
  %v216 = vpack.c.b16 %v176, %v172
  %v217 = vpack.c.b16 %v177, %v173
  %v218 = vpack.c.b16 %v182, %v178
  %v219 = vpack.c.b16 %v183, %v179
  %v220 = vpack.c.b16 %v184, %v180
  %v221 = vpack.c.b16 %v185, %v181
  %v222 = vpack.c.b16 %v190, %v186
  %v223 = vpack.c.b16 %v191, %v187
  %v224 = vpack.c.b16 %v192, %v188
  %v225 = vpack.c.b16 %v193, %v189
  %258 = vmatpush.bf16.msra.mxu0 %v222
  %259 = vmatpush.bf16.msra.mxu0 %v218
  %260 = vmatpush.bf16.msra.mxu0 %v214
  %261 = vmatpush.bf16.msra.mxu0 %v210
  %262 = vmatpush.bf16.msra.mxu0 %v206
  %263 = vmatpush.bf16.msra.mxu0 %v202
  %264 = vmatpush.bf16.msra.mxu0 %v198
  %265 = vmatpush.bf16.msra.mxu0 %v194
  %266 = vmatmul.bf16.gmra.mxu0 %v94
  %v267 = vpop.f32.mrf.mxu0
  %v268 = vadd.f32 0.0, %v267
  %v269 = vpop.f32.mrf.mxu0
  %v270 = vadd.f32 0.0, %v269
  %271 = vmatmul.bf16.gmra.mxu0 %v95
  %v272 = vpop.f32.mrf.mxu0
  %v273 = vadd.f32 0.0, %v272
  %v274 = vpop.f32.mrf.mxu0
  %v275 = vadd.f32 0.0, %v274
  %276 = vdwg.mxu0
  %277 = vmatpush.bf16.msra.mxu0 %v223
  %278 = vmatpush.bf16.msra.mxu0 %v219
  %279 = vmatpush.bf16.msra.mxu0 %v215
  %280 = vmatpush.bf16.msra.mxu0 %v211
  %281 = vmatpush.bf16.msra.mxu0 %v207
  %282 = vmatpush.bf16.msra.mxu0 %v203
  %283 = vmatpush.bf16.msra.mxu0 %v199
  %284 = vmatpush.bf16.msra.mxu0 %v195
  %285 = vmatmul.bf16.gmra.mxu0 %v94
  %v286 = vpop.f32.mrf.mxu0
  %v287 = vadd.f32 0.0, %v286
  %v288 = vpop.f32.mrf.mxu0
  %v289 = vadd.f32 0.0, %v288
  %290 = vmatmul.bf16.gmra.mxu0 %v95
  %v291 = vpop.f32.mrf.mxu0
  %v292 = vadd.f32 0.0, %v291
  %v293 = vpop.f32.mrf.mxu0
  %v294 = vadd.f32 0.0, %v293
  %295 = vdwg.mxu0
  %296 = vmatpush.bf16.msra.mxu0 %v224
  %297 = vmatpush.bf16.msra.mxu0 %v220
  %298 = vmatpush.bf16.msra.mxu0 %v216
  %299 = vmatpush.bf16.msra.mxu0 %v212
  %300 = vmatpush.bf16.msra.mxu0 %v208
  %301 = vmatpush.bf16.msra.mxu0 %v204
  %302 = vmatpush.bf16.msra.mxu0 %v200
  %303 = vmatpush.bf16.msra.mxu0 %v196
  %304 = vmatmul.bf16.gmra.mxu0 %v94
  %v305 = vpop.f32.mrf.mxu0
  %v306 = vadd.f32 0.0, %v305
  %v307 = vpop.f32.mrf.mxu0
  %v308 = vadd.f32 0.0, %v307
  %309 = vmatmul.bf16.gmra.mxu0 %v95
  %v310 = vpop.f32.mrf.mxu0
  %v311 = vadd.f32 0.0, %v310
  %v312 = vpop.f32.mrf.mxu0
  %v313 = vadd.f32 0.0, %v312
  %314 = vdwg.mxu0
  %315 = vmatpush.bf16.msra.mxu0 %v225
  %316 = vmatpush.bf16.msra.mxu0 %v221
  %317 = vmatpush.bf16.msra.mxu0 %v217
  %318 = vmatpush.bf16.msra.mxu0 %v213
  %319 = vmatpush.bf16.msra.mxu0 %v209
  %320 = vmatpush.bf16.msra.mxu0 %v205
  %321 = vmatpush.bf16.msra.mxu0 %v201
  %322 = vmatpush.bf16.msra.mxu0 %v197
  %323 = vmatmul.bf16.gmra.mxu0 %v94
  %v324 = vpop.f32.mrf.mxu0
  %v325 = vadd.f32 0.0, %v324
  %v326 = vpop.f32.mrf.mxu0
  %v327 = vadd.f32 0.0, %v326
  %328 = vmatmul.bf16.gmra.mxu0 %v95
  %v329 = vpop.f32.mrf.mxu0
  %v330 = vadd.f32 0.0, %v329
  %v331 = vpop.f32.mrf.mxu0
  %v332 = vadd.f32 0.0, %v331
  %333 = vdwg.mxu0
  %v334 = vadd.f32 %v34, %v268
  %v335 = vadd.f32 %v35, %v287
  %v336 = vadd.f32 %v36, %v306
  %v337 = vadd.f32 %v37, %v325
  %v338 = vadd.f32 %v38, %v270
  %v339 = vadd.f32 %v39, %v289
  %v340 = vadd.f32 %v40, %v308
  %v341 = vadd.f32 %v41, %v327
  %v342 = vadd.f32 %v42, %v273
  %v343 = vadd.f32 %v43, %v292
  %v344 = vadd.f32 %v44, %v311
  %v345 = vadd.f32 %v45, %v330
  %v346 = vadd.f32 %v46, %v275
  %v347 = vadd.f32 %v47, %v294
  %v348 = vadd.f32 %v48, %v313
  %v349 = vadd.f32 %v49, %v332
  %350 = vst [vmem:[#allocation2] sm:$0xff] %v334
  %351 = vst [vmem:[#allocation2 + $0x8] sm:$0xff] %v335
  %352 = vst [vmem:[#allocation2 + $0x10] sm:$0xff] %v336
  %353 = vst [vmem:[#allocation2 + $0x18] sm:$0xff] %v337
  %354 = vst [vmem:[#allocation2 + $0x20] sm:$0xff] %v338
  %355 = vst [vmem:[#allocation2 + $0x28] sm:$0xff] %v339
  %356 = vst [vmem:[#allocation2 + $0x30] sm:$0xff] %v340
  %357 = vst [vmem:[#allocation2 + $0x38] sm:$0xff] %v341
  %358 = vst [vmem:[#allocation2 + $0x40] sm:$0xff] %v342
  %359 = vst [vmem:[#allocation2 + $0x48] sm:$0xff] %v343
  %360 = vst [vmem:[#allocation2 + $0x50] sm:$0xff] %v344
  %361 = vst [vmem:[#allocation2 + $0x58] sm:$0xff] %v345
  %362 = vst [vmem:[#allocation2 + $0x60] sm:$0xff] %v346
  %363 = vst [vmem:[#allocation2 + $0x68] sm:$0xff] %v347
  %364 = vst [vmem:[#allocation2 + $0x70] sm:$0xff] %v348
  %365 = vst [vmem:[#allocation2 + $0x78] sm:$0xff] %v349
  // Predicated region
  $region18: #{gpt_forward.14} parent=0 // pred_check
    %p366 = pneg %p14
  $region19: #{gpt_forward.14} parent=0 // pred_check_branch
    %368 = sbr.rel (%p366) target = $region21
  $region20: #{gpt_forward.14} parent=0 // pred_region
    %v369 = vld [vmem:[#allocation2] sm:$0xff]
    %v370 = vld [vmem:[#allocation2 + $0x8] sm:$0xff]
    %v371 = vld [vmem:[#allocation2 + $0x10] sm:$0xff]
    %v372 = vld [vmem:[#allocation2 + $0x18] sm:$0xff]
    %v373 = vld [vmem:[#allocation2 + $0x20] sm:$0xff]
    %v374 = vld [vmem:[#allocation2 + $0x28] sm:$0xff]
    %v375 = vld [vmem:[#allocation2 + $0x30] sm:$0xff]
    %v376 = vld [vmem:[#allocation2 + $0x38] sm:$0xff]
    %v377 = vld [vmem:[#allocation2 + $0x40] sm:$0xff]
    %v378 = vld [vmem:[#allocation2 + $0x48] sm:$0xff]
    %v379 = vld [vmem:[#allocation2 + $0x50] sm:$0xff]
    %v380 = vld [vmem:[#allocation2 + $0x58] sm:$0xff]
    %v381 = vld [vmem:[#allocation2 + $0x60] sm:$0xff]
    %v382 = vld [vmem:[#allocation2 + $0x68] sm:$0xff]
    %v383 = vld [vmem:[#allocation2 + $0x70] sm:$0xff]
    %v384 = vld [vmem:[#allocation2 + $0x78] sm:$0xff]
    %v385 = vld [vmem:[%s2] sm:$0xf]
    %v386 = vunpack.c.l.bf16 %v385
    %v388 = vperm.slane %v386, 0
    %v389 = vperm.slane %v386, 2
    %v390 = vperm.slane %v386, 4
    %v391 = vperm.slane %v386, 6
    %v396 = vperm.slane %v388, 0
    %v397 = vperm.slane %v389, 0
    %v398 = vperm.slane %v390, 0
    %v399 = vperm.slane %v391, 0
    %v400 = vadd.f32 %v369, %v396
    %v401 = vadd.f32 %v370, %v397
    %v402 = vadd.f32 %v371, %v398
    %v403 = vadd.f32 %v372, %v399
    %v404 = vadd.f32 %v373, %v396
    %v405 = vadd.f32 %v374, %v397
    %v406 = vadd.f32 %v375, %v398
    %v407 = vadd.f32 %v376, %v399
    %v408 = vadd.f32 %v377, %v396
    %v409 = vadd.f32 %v378, %v397
    %v410 = vadd.f32 %v379, %v398
    %v411 = vadd.f32 %v380, %v399
    %v412 = vadd.f32 %v381, %v396
    %v413 = vadd.f32 %v382, %v397
    %v414 = vadd.f32 %v383, %v398
    %v415 = vadd.f32 %v384, %v399
    %v416 = vmul.f32 %v400, 0.70710677
    %v417 = vmul.f32 %v401, 0.70710677
    %v418 = vmul.f32 %v402, 0.70710677
    %v419 = vmul.f32 %v403, 0.70710677
    %v420 = vmul.f32 %v404, 0.70710677
    %v421 = vmul.f32 %v405, 0.70710677
    %v422 = vmul.f32 %v406, 0.70710677
    %v423 = vmul.f32 %v407, 0.70710677
    %v424 = vmul.f32 %v408, 0.70710677
    %v425 = vmul.f32 %v409, 0.70710677
    %v426 = vmul.f32 %v410, 0.70710677
    %v427 = vmul.f32 %v411, 0.70710677
    %v428 = vmul.f32 %v412, 0.70710677
    %v429 = vmul.f32 %v413, 0.70710677
    %v430 = vmul.f32 %v414, 0.70710677
    %v431 = vmul.f32 %v415, 0.70710677
    %v432 = vand.u32 2147483647, %v416
    %v433 = vand.u32 2147483647, %v417
    %v434 = vand.u32 2147483647, %v418
    %v435 = vand.u32 2147483647, %v419
    %v436 = vand.u32 2147483647, %v420
    %v437 = vand.u32 2147483647, %v421
    %v438 = vand.u32 2147483647, %v422
    %v439 = vand.u32 2147483647, %v423
    %v440 = vand.u32 2147483647, %v424
    %v441 = vand.u32 2147483647, %v425
    %v442 = vand.u32 2147483647, %v426
    %v443 = vand.u32 2147483647, %v427
    %v444 = vand.u32 2147483647, %v428
    %v445 = vand.u32 2147483647, %v429
    %v446 = vand.u32 2147483647, %v430
    %v447 = vand.u32 2147483647, %v431
    %v448 = vmul.f32 %v432, 0.3275911
    %v449 = vmul.f32 %v433, 0.3275911
    %v450 = vmul.f32 %v434, 0.3275911
    %v451 = vmul.f32 %v435, 0.3275911
    %v452 = vmul.f32 %v436, 0.3275911
    %v453 = vmul.f32 %v437, 0.3275911
    %v454 = vmul.f32 %v438, 0.3275911
    %v455 = vmul.f32 %v439, 0.3275911
    %v456 = vmul.f32 %v440, 0.3275911
    %v457 = vmul.f32 %v441, 0.3275911
    %v458 = vmul.f32 %v442, 0.3275911
    %v459 = vmul.f32 %v443, 0.3275911
    %v460 = vmul.f32 %v444, 0.3275911
    %v461 = vmul.f32 %v445, 0.3275911
    %v462 = vmul.f32 %v446, 0.3275911
    %v463 = vmul.f32 %v447, 0.3275911
    %v464 = vadd.f32 %v448, 1.0
    %v465 = vadd.f32 %v449, 1.0
    %v466 = vadd.f32 %v450, 1.0
    %v467 = vadd.f32 %v451, 1.0
    %v468 = vadd.f32 %v452, 1.0
    %v469 = vadd.f32 %v453, 1.0
    %v470 = vadd.f32 %v454, 1.0
    %v471 = vadd.f32 %v455, 1.0
    %v472 = vadd.f32 %v456, 1.0
    %v473 = vadd.f32 %v457, 1.0
    %v474 = vadd.f32 %v458, 1.0
    %v475 = vadd.f32 %v459, 1.0
    %v476 = vadd.f32 %v460, 1.0
    %v477 = vadd.f32 %v461, 1.0
    %v478 = vadd.f32 %v462, 1.0
    %v479 = vadd.f32 %v463, 1.0
    %v480 = vrcp.pop %v464
    %v481 = vmul.f32 %v464, %v480
    %v482 = vsub.f32 1.0, %v481
    %v483 = vmul.f32 %v480, %v482
    %v484 = vadd.f32 %v480, %v483
    %vm485 = vweird.f32 %v464
    %vm486 = vweird.f32 %v480
    %vm487 = vmor %vm485, %vm486
    %v488 = vsel %vm487, %v480, %v484
    %v489 = vand.u32 2147483647, %v464
    %vm490 = vcmp.eq.f32.partialorder %v489, 8.507059e+37
    %v491 = vand.u32 %v464, 2147483648
    %v492 = vor.u32 1.1754944e-38, %v491
    %v493 = vsel %vm490, %v492, %v488
    %v494 = vmul.f32 1.0, %v493
    %v495 = vrcp.pop %v465
    %v496 = vmul.f32 %v465, %v495
    %v497 = vsub.f32 1.0, %v496
    %v498 = vmul.f32 %v495, %v497
    %v499 = vadd.f32 %v495, %v498
    %vm500 = vweird.f32 %v465
    %vm501 = vweird.f32 %v495
    %vm502 = vmor %vm500, %vm501
    %v503 = vsel %vm502, %v495, %v499
    %v504 = vand.u32 2147483647, %v465
    %vm505 = vcmp.eq.f32.partialorder %v504, 8.507059e+37
    %v506 = vand.u32 %v465, 2147483648
    %v507 = vor.u32 1.1754944e-38, %v506
    %v508 = vsel %vm505, %v507, %v503
    %v509 = vmul.f32 1.0, %v508
    %v510 = vrcp.pop %v466
    %v511 = vmul.f32 %v466, %v510
    %v512 = vsub.f32 1.0, %v511
    %v513 = vmul.f32 %v510, %v512
    %v514 = vadd.f32 %v510, %v513
    %vm515 = vweird.f32 %v466
    %vm516 = vweird.f32 %v510
    %vm517 = vmor %vm515, %vm516
    %v518 = vsel %vm517, %v510, %v514
    %v519 = vand.u32 2147483647, %v466
    %vm520 = vcmp.eq.f32.partialorder %v519, 8.507059e+37
    %v521 = vand.u32 %v466, 2147483648
    %v522 = vor.u32 1.1754944e-38, %v521
    %v523 = vsel %vm520, %v522, %v518
    %v524 = vmul.f32 1.0, %v523
    %v525 = vrcp.pop %v467
    %v526 = vmul.f32 %v467, %v525
    %v527 = vsub.f32 1.0, %v526
    %v528 = vmul.f32 %v525, %v527
    %v529 = vadd.f32 %v525, %v528
    %vm530 = vweird.f32 %v467
    %vm531 = vweird.f32 %v525
    %vm532 = vmor %vm530, %vm531
    %v533 = vsel %vm532, %v525, %v529
    %v534 = vand.u32 2147483647, %v467
    %vm535 = vcmp.eq.f32.partialorder %v534, 8.507059e+37
    %v536 = vand.u32 %v467, 2147483648
    %v537 = vor.u32 1.1754944e-38, %v536
    %v538 = vsel %vm535, %v537, %v533
    %v539 = vmul.f32 1.0, %v538
    %v540 = vrcp.pop %v468
    %v541 = vmul.f32 %v468, %v540
    %v542 = vsub.f32 1.0, %v541
    %v543 = vmul.f32 %v540, %v542
    %v544 = vadd.f32 %v540, %v543
    %vm545 = vweird.f32 %v468
    %vm546 = vweird.f32 %v540
    %vm547 = vmor %vm545, %vm546
    %v548 = vsel %vm547, %v540, %v544
    %v549 = vand.u32 2147483647, %v468
    %vm550 = vcmp.eq.f32.partialorder %v549, 8.507059e+37
    %v551 = vand.u32 %v468, 2147483648
    %v552 = vor.u32 1.1754944e-38, %v551
    %v553 = vsel %vm550, %v552, %v548
    %v554 = vmul.f32 1.0, %v553
    %v555 = vrcp.pop %v469
    %v556 = vmul.f32 %v469, %v555
    %v557 = vsub.f32 1.0, %v556
    %v558 = vmul.f32 %v555, %v557
    %v559 = vadd.f32 %v555, %v558
    %vm560 = vweird.f32 %v469
    %vm561 = vweird.f32 %v555
    %vm562 = vmor %vm560, %vm561
    %v563 = vsel %vm562, %v555, %v559
    %v564 = vand.u32 2147483647, %v469
    %vm565 = vcmp.eq.f32.partialorder %v564, 8.507059e+37
    %v566 = vand.u32 %v469, 2147483648
    %v567 = vor.u32 1.1754944e-38, %v566
    %v568 = vsel %vm565, %v567, %v563
    %v569 = vmul.f32 1.0, %v568
    %v570 = vrcp.pop %v470
    %v571 = vmul.f32 %v470, %v570
    %v572 = vsub.f32 1.0, %v571
    %v573 = vmul.f32 %v570, %v572
    %v574 = vadd.f32 %v570, %v573
    %vm575 = vweird.f32 %v470
    %vm576 = vweird.f32 %v570
    %vm577 = vmor %vm575, %vm576
    %v578 = vsel %vm577, %v570, %v574
    %v579 = vand.u32 2147483647, %v470
    %vm580 = vcmp.eq.f32.partialorder %v579, 8.507059e+37
    %v581 = vand.u32 %v470, 2147483648
    %v582 = vor.u32 1.1754944e-38, %v581
    %v583 = vsel %vm580, %v582, %v578
    %v584 = vmul.f32 1.0, %v583
    %v585 = vrcp.pop %v471
    %v586 = vmul.f32 %v471, %v585
    %v587 = vsub.f32 1.0, %v586
    %v588 = vmul.f32 %v585, %v587
    %v589 = vadd.f32 %v585, %v588
    %vm590 = vweird.f32 %v471
    %vm591 = vweird.f32 %v585
    %vm592 = vmor %vm590, %vm591
    %v593 = vsel %vm592, %v585, %v589
    %v594 = vand.u32 2147483647, %v471
    %vm595 = vcmp.eq.f32.partialorder %v594, 8.507059e+37
    %v596 = vand.u32 %v471, 2147483648
    %v597 = vor.u32 1.1754944e-38, %v596
    %v598 = vsel %vm595, %v597, %v593
    %v599 = vmul.f32 1.0, %v598
    %v600 = vrcp.pop %v472
    %v601 = vmul.f32 %v472, %v600
    %v602 = vsub.f32 1.0, %v601
    %v603 = vmul.f32 %v600, %v602
    %v604 = vadd.f32 %v600, %v603
    %vm605 = vweird.f32 %v472
    %vm606 = vweird.f32 %v600
    %vm607 = vmor %vm605, %vm606
    %v608 = vsel %vm607, %v600, %v604
    %v609 = vand.u32 2147483647, %v472
    %vm610 = vcmp.eq.f32.partialorder %v609, 8.507059e+37
    %v611 = vand.u32 %v472, 2147483648
    %v612 = vor.u32 1.1754944e-38, %v611
    %v613 = vsel %vm610, %v612, %v608
    %v614 = vmul.f32 1.0, %v613
    %v615 = vrcp.pop %v473
    %v616 = vmul.f32 %v473, %v615
    %v617 = vsub.f32 1.0, %v616
    %v618 = vmul.f32 %v615, %v617
    %v619 = vadd.f32 %v615, %v618
    %vm620 = vweird.f32 %v473
    %vm621 = vweird.f32 %v615
    %vm622 = vmor %vm620, %vm621
    %v623 = vsel %vm622, %v615, %v619
    %v624 = vand.u32 2147483647, %v473
    %vm625 = vcmp.eq.f32.partialorder %v624, 8.507059e+37
    %v626 = vand.u32 %v473, 2147483648
    %v627 = vor.u32 1.1754944e-38, %v626
    %v628 = vsel %vm625, %v627, %v623
    %v629 = vmul.f32 1.0, %v628
    %v630 = vrcp.pop %v474
    %v631 = vmul.f32 %v474, %v630
    %v632 = vsub.f32 1.0, %v631
    %v633 = vmul.f32 %v630, %v632
    %v634 = vadd.f32 %v630, %v633
    %vm635 = vweird.f32 %v474
    %vm636 = vweird.f32 %v630
    %vm637 = vmor %vm635, %vm636
    %v638 = vsel %vm637, %v630, %v634
    %v639 = vand.u32 2147483647, %v474
    %vm640 = vcmp.eq.f32.partialorder %v639, 8.507059e+37
    %v641 = vand.u32 %v474, 2147483648
    %v642 = vor.u32 1.1754944e-38, %v641
    %v643 = vsel %vm640, %v642, %v638
    %v644 = vmul.f32 1.0, %v643
    %v645 = vrcp.pop %v475
    %v646 = vmul.f32 %v475, %v645
    %v647 = vsub.f32 1.0, %v646
    %v648 = vmul.f32 %v645, %v647
    %v649 = vadd.f32 %v645, %v648
    %vm650 = vweird.f32 %v475
    %vm651 = vweird.f32 %v645
    %vm652 = vmor %vm650, %vm651
    %v653 = vsel %vm652, %v645, %v649
    %v654 = vand.u32 2147483647, %v475
    %vm655 = vcmp.eq.f32.partialorder %v654, 8.507059e+37
    %v656 = vand.u32 %v475, 2147483648
    %v657 = vor.u32 1.1754944e-38, %v656
    %v658 = vsel %vm655, %v657, %v653
    %v659 = vmul.f32 1.0, %v658
    %v660 = vrcp.pop %v476
    %v661 = vmul.f32 %v476, %v660
    %v662 = vsub.f32 1.0, %v661
    %v663 = vmul.f32 %v660, %v662
    %v664 = vadd.f32 %v660, %v663
    %vm665 = vweird.f32 %v476
    %vm666 = vweird.f32 %v660
    %vm667 = vmor %vm665, %vm666
    %v668 = vsel %vm667, %v660, %v664
    %v669 = vand.u32 2147483647, %v476
    %vm670 = vcmp.eq.f32.partialorder %v669, 8.507059e+37
    %v671 = vand.u32 %v476, 2147483648
    %v672 = vor.u32 1.1754944e-38, %v671
    %v673 = vsel %vm670, %v672, %v668
    %v674 = vmul.f32 1.0, %v673
    %v675 = vrcp.pop %v477
    %v676 = vmul.f32 %v477, %v675
    %v677 = vsub.f32 1.0, %v676
    %v678 = vmul.f32 %v675, %v677
    %v679 = vadd.f32 %v675, %v678
    %vm680 = vweird.f32 %v477
    %vm681 = vweird.f32 %v675
    %vm682 = vmor %vm680, %vm681
    %v683 = vsel %vm682, %v675, %v679
    %v684 = vand.u32 2147483647, %v477
    %vm685 = vcmp.eq.f32.partialorder %v684, 8.507059e+37
    %v686 = vand.u32 %v477, 2147483648
    %v687 = vor.u32 1.1754944e-38, %v686
    %v688 = vsel %vm685, %v687, %v683
    %v689 = vmul.f32 1.0, %v688
    %v690 = vrcp.pop %v478
    %v691 = vmul.f32 %v478, %v690
    %v692 = vsub.f32 1.0, %v691
    %v693 = vmul.f32 %v690, %v692
    %v694 = vadd.f32 %v690, %v693
    %vm695 = vweird.f32 %v478
    %vm696 = vweird.f32 %v690
    %vm697 = vmor %vm695, %vm696
    %v698 = vsel %vm697, %v690, %v694
    %v699 = vand.u32 2147483647, %v478
    %vm700 = vcmp.eq.f32.partialorder %v699, 8.507059e+37
    %v701 = vand.u32 %v478, 2147483648
    %v702 = vor.u32 1.1754944e-38, %v701
    %v703 = vsel %vm700, %v702, %v698
    %v704 = vmul.f32 1.0, %v703
    %v705 = vrcp.pop %v479
    %v706 = vmul.f32 %v479, %v705
    %v707 = vsub.f32 1.0, %v706
    %v708 = vmul.f32 %v705, %v707
    %v709 = vadd.f32 %v705, %v708
    %vm710 = vweird.f32 %v479
    %vm711 = vweird.f32 %v705
    %vm712 = vmor %vm710, %vm711
    %v713 = vsel %vm712, %v705, %v709
    %v714 = vand.u32 2147483647, %v479
    %vm715 = vcmp.eq.f32.partialorder %v714, 8.507059e+37
    %v716 = vand.u32 %v479, 2147483648
    %v717 = vor.u32 1.1754944e-38, %v716
    %v718 = vsel %vm715, %v717, %v713
    %v719 = vmul.f32 1.0, %v718
    %v720 = vmul.f32 %v494, 1.0614054
    %v721 = vmul.f32 %v509, 1.0614054
    %v722 = vmul.f32 %v524, 1.0614054
    %v723 = vmul.f32 %v539, 1.0614054
    %v724 = vmul.f32 %v554, 1.0614054
    %v725 = vmul.f32 %v569, 1.0614054
    %v726 = vmul.f32 %v584, 1.0614054
    %v727 = vmul.f32 %v599, 1.0614054
    %v728 = vmul.f32 %v614, 1.0614054
    %v729 = vmul.f32 %v629, 1.0614054
    %v730 = vmul.f32 %v644, 1.0614054
    %v731 = vmul.f32 %v659, 1.0614054
    %v732 = vmul.f32 %v674, 1.0614054
    %v733 = vmul.f32 %v689, 1.0614054
    %v734 = vmul.f32 %v704, 1.0614054
    %v735 = vmul.f32 %v719, 1.0614054
    %v736 = vadd.f32 %v720, -1.4531521
    %v737 = vadd.f32 %v721, -1.4531521
    %v738 = vadd.f32 %v722, -1.4531521
    %v739 = vadd.f32 %v723, -1.4531521
    %v740 = vadd.f32 %v724, -1.4531521
    %v741 = vadd.f32 %v725, -1.4531521
    %v742 = vadd.f32 %v726, -1.4531521
    %v743 = vadd.f32 %v727, -1.4531521
    %v744 = vadd.f32 %v728, -1.4531521
    %v745 = vadd.f32 %v729, -1.4531521
    %v746 = vadd.f32 %v730, -1.4531521
    %v747 = vadd.f32 %v731, -1.4531521
    %v748 = vadd.f32 %v732, -1.4531521
    %v749 = vadd.f32 %v733, -1.4531521
    %v750 = vadd.f32 %v734, -1.4531521
    %v751 = vadd.f32 %v735, -1.4531521
    %v752 = vmul.f32 %v494, %v736
    %v753 = vmul.f32 %v509, %v737
    %v754 = vmul.f32 %v524, %v738
    %v755 = vmul.f32 %v539, %v739
    %v756 = vmul.f32 %v554, %v740
    %v757 = vmul.f32 %v569, %v741
    %v758 = vmul.f32 %v584, %v742
    %v759 = vmul.f32 %v599, %v743
    %v760 = vmul.f32 %v614, %v744
    %v761 = vmul.f32 %v629, %v745
    %v762 = vmul.f32 %v644, %v746
    %v763 = vmul.f32 %v659, %v747
    %v764 = vmul.f32 %v674, %v748
    %v765 = vmul.f32 %v689, %v749
    %v766 = vmul.f32 %v704, %v750
    %v767 = vmul.f32 %v719, %v751
    %v768 = vadd.f32 %v752, 1.4214138
    %v769 = vadd.f32 %v753, 1.4214138
    %v770 = vadd.f32 %v754, 1.4214138
    %v771 = vadd.f32 %v755, 1.4214138
    %v772 = vadd.f32 %v756, 1.4214138
    %v773 = vadd.f32 %v757, 1.4214138
    %v774 = vadd.f32 %v758, 1.4214138
    %v775 = vadd.f32 %v759, 1.4214138
    %v776 = vadd.f32 %v760, 1.4214138
    %v777 = vadd.f32 %v761, 1.4214138
    %v778 = vadd.f32 %v762, 1.4214138
    %v779 = vadd.f32 %v763, 1.4214138
    %v780 = vadd.f32 %v764, 1.4214138
    %v781 = vadd.f32 %v765, 1.4214138
    %v782 = vadd.f32 %v766, 1.4214138
    %v783 = vadd.f32 %v767, 1.4214138
    %v784 = vmul.f32 %v494, %v768
    %v785 = vmul.f32 %v509, %v769
    %v786 = vmul.f32 %v524, %v770
    %v787 = vmul.f32 %v539, %v771
    %v788 = vmul.f32 %v554, %v772
    %v789 = vmul.f32 %v569, %v773
    %v790 = vmul.f32 %v584, %v774
    %v791 = vmul.f32 %v599, %v775
    %v792 = vmul.f32 %v614, %v776
    %v793 = vmul.f32 %v629, %v777
    %v794 = vmul.f32 %v644, %v778
    %v795 = vmul.f32 %v659, %v779
    %v796 = vmul.f32 %v674, %v780
    %v797 = vmul.f32 %v689, %v781
    %v798 = vmul.f32 %v704, %v782
    %v799 = vmul.f32 %v719, %v783
    %v800 = vadd.f32 %v784, -0.28449672
    %v801 = vadd.f32 %v785, -0.28449672
    %v802 = vadd.f32 %v786, -0.28449672
    %v803 = vadd.f32 %v787, -0.28449672
    %v804 = vadd.f32 %v788, -0.28449672
    %v805 = vadd.f32 %v789, -0.28449672
    %v806 = vadd.f32 %v790, -0.28449672
    %v807 = vadd.f32 %v791, -0.28449672
    %v808 = vadd.f32 %v792, -0.28449672
    %v809 = vadd.f32 %v793, -0.28449672
    %v810 = vadd.f32 %v794, -0.28449672
    %v811 = vadd.f32 %v795, -0.28449672
    %v812 = vadd.f32 %v796, -0.28449672
    %v813 = vadd.f32 %v797, -0.28449672
    %v814 = vadd.f32 %v798, -0.28449672
    %v815 = vadd.f32 %v799, -0.28449672
    %v816 = vmul.f32 %v494, %v800
    %v817 = vmul.f32 %v509, %v801
    %v818 = vmul.f32 %v524, %v802
    %v819 = vmul.f32 %v539, %v803
    %v820 = vmul.f32 %v554, %v804
    %v821 = vmul.f32 %v569, %v805
    %v822 = vmul.f32 %v584, %v806
    %v823 = vmul.f32 %v599, %v807
    %v824 = vmul.f32 %v614, %v808
    %v825 = vmul.f32 %v629, %v809
    %v826 = vmul.f32 %v644, %v810
    %v827 = vmul.f32 %v659, %v811
    %v828 = vmul.f32 %v674, %v812
    %v829 = vmul.f32 %v689, %v813
    %v830 = vmul.f32 %v704, %v814
    %v831 = vmul.f32 %v719, %v815
    %v832 = vadd.f32 %v816, 0.2548296
    %v833 = vadd.f32 %v817, 0.2548296
    %v834 = vadd.f32 %v818, 0.2548296
    %v835 = vadd.f32 %v819, 0.2548296
    %v836 = vadd.f32 %v820, 0.2548296
    %v837 = vadd.f32 %v821, 0.2548296
    %v838 = vadd.f32 %v822, 0.2548296
    %v839 = vadd.f32 %v823, 0.2548296
    %v840 = vadd.f32 %v824, 0.2548296
    %v841 = vadd.f32 %v825, 0.2548296
    %v842 = vadd.f32 %v826, 0.2548296
    %v843 = vadd.f32 %v827, 0.2548296
    %v844 = vadd.f32 %v828, 0.2548296
    %v845 = vadd.f32 %v829, 0.2548296
    %v846 = vadd.f32 %v830, 0.2548296
    %v847 = vadd.f32 %v831, 0.2548296
    %v848 = vmul.f32 %v494, %v832
    %v849 = vmul.f32 %v509, %v833
    %v850 = vmul.f32 %v524, %v834
    %v851 = vmul.f32 %v539, %v835
    %v852 = vmul.f32 %v554, %v836
    %v853 = vmul.f32 %v569, %v837
    %v854 = vmul.f32 %v584, %v838
    %v855 = vmul.f32 %v599, %v839
    %v856 = vmul.f32 %v614, %v840
    %v857 = vmul.f32 %v629, %v841
    %v858 = vmul.f32 %v644, %v842
    %v859 = vmul.f32 %v659, %v843
    %v860 = vmul.f32 %v674, %v844
    %v861 = vmul.f32 %v689, %v845
    %v862 = vmul.f32 %v704, %v846
    %v863 = vmul.f32 %v719, %v847
    %v864 = vsub.f32 0.0, %v432
    %v865 = vsub.f32 0.0, %v433
    %v866 = vsub.f32 0.0, %v434
    %v867 = vsub.f32 0.0, %v435
    %v868 = vsub.f32 0.0, %v436
    %v869 = vsub.f32 0.0, %v437
    %v870 = vsub.f32 0.0, %v438
    %v871 = vsub.f32 0.0, %v439
    %v872 = vsub.f32 0.0, %v440
    %v873 = vsub.f32 0.0, %v441
    %v874 = vsub.f32 0.0, %v442
    %v875 = vsub.f32 0.0, %v443
    %v876 = vsub.f32 0.0, %v444
    %v877 = vsub.f32 0.0, %v445
    %v878 = vsub.f32 0.0, %v446
    %v879 = vsub.f32 0.0, %v447
    %v880 = vmul.f32 %v864, %v432
    %v881 = vmul.f32 %v865, %v433
    %v882 = vmul.f32 %v866, %v434
    %v883 = vmul.f32 %v867, %v435
    %v884 = vmul.f32 %v868, %v436
    %v885 = vmul.f32 %v869, %v437
    %v886 = vmul.f32 %v870, %v438
    %v887 = vmul.f32 %v871, %v439
    %v888 = vmul.f32 %v872, %v440
    %v889 = vmul.f32 %v873, %v441
    %v890 = vmul.f32 %v874, %v442
    %v891 = vmul.f32 %v875, %v443
    %v892 = vmul.f32 %v876, %v444
    %v893 = vmul.f32 %v877, %v445
    %v894 = vmul.f32 %v878, %v446
    %v895 = vmul.f32 %v879, %v447
    %v896 = vmul.f32 %v880, 1.442695
    %v897 = vpow.pop %v896
    %v898 = vmul.f32 %v881, 1.442695
    %v899 = vpow.pop %v898
    %v900 = vmul.f32 %v882, 1.442695
    %v901 = vpow.pop %v900
    %v902 = vmul.f32 %v883, 1.442695
    %v903 = vpow.pop %v902
    %v904 = vmul.f32 %v884, 1.442695
    %v905 = vpow.pop %v904
    %v906 = vmul.f32 %v885, 1.442695
    %v907 = vpow.pop %v906
    %v908 = vmul.f32 %v886, 1.442695
    %v909 = vpow.pop %v908
    %v910 = vmul.f32 %v887, 1.442695
    %v911 = vpow.pop %v910
    %v912 = vmul.f32 %v888, 1.442695
    %v913 = vpow.pop %v912
    %v914 = vmul.f32 %v889, 1.442695
    %v915 = vpow.pop %v914
    %v916 = vmul.f32 %v890, 1.442695
    %v917 = vpow.pop %v916
    %v918 = vmul.f32 %v891, 1.442695
    %v919 = vpow.pop %v918
    %v920 = vmul.f32 %v892, 1.442695
    %v921 = vpow.pop %v920
    %v922 = vmul.f32 %v893, 1.442695
    %v923 = vpow.pop %v922
    %v924 = vmul.f32 %v894, 1.442695
    %v925 = vpow.pop %v924
    %v926 = vmul.f32 %v895, 1.442695
    %v927 = vpow.pop %v926
    %v928 = vmul.f32 %v848, %v897
    %v929 = vmul.f32 %v849, %v899
    %v930 = vmul.f32 %v850, %v901
    %v931 = vmul.f32 %v851, %v903
    %v932 = vmul.f32 %v852, %v905
    %v933 = vmul.f32 %v853, %v907
    %v934 = vmul.f32 %v854, %v909
    %v935 = vmul.f32 %v855, %v911
    %v936 = vmul.f32 %v856, %v913
    %v937 = vmul.f32 %v857, %v915
    %v938 = vmul.f32 %v858, %v917
    %v939 = vmul.f32 %v859, %v919
    %v940 = vmul.f32 %v860, %v921
    %v941 = vmul.f32 %v861, %v923
    %v942 = vmul.f32 %v862, %v925
    %v943 = vmul.f32 %v863, %v927
    %v944 = vsub.f32 1.0, %v928
    %v945 = vsub.f32 1.0, %v929
    %v946 = vsub.f32 1.0, %v930
    %v947 = vsub.f32 1.0, %v931
    %v948 = vsub.f32 1.0, %v932
    %v949 = vsub.f32 1.0, %v933
    %v950 = vsub.f32 1.0, %v934
    %v951 = vsub.f32 1.0, %v935
    %v952 = vsub.f32 1.0, %v936
    %v953 = vsub.f32 1.0, %v937
    %v954 = vsub.f32 1.0, %v938
    %v955 = vsub.f32 1.0, %v939
    %v956 = vsub.f32 1.0, %v940
    %v957 = vsub.f32 1.0, %v941
    %v958 = vsub.f32 1.0, %v942
    %v959 = vsub.f32 1.0, %v943
    %vm960 = vcmp.ge.f32.partialorder %v416, 0.0
    %vm961 = vcmp.ge.f32.partialorder %v417, 0.0
    %vm962 = vcmp.ge.f32.partialorder %v418, 0.0
    %vm963 = vcmp.ge.f32.partialorder %v419, 0.0
    %vm964 = vcmp.ge.f32.partialorder %v420, 0.0
    %vm965 = vcmp.ge.f32.partialorder %v421, 0.0
    %vm966 = vcmp.ge.f32.partialorder %v422, 0.0
    %vm967 = vcmp.ge.f32.partialorder %v423, 0.0
    %vm968 = vcmp.ge.f32.partialorder %v424, 0.0
    %vm969 = vcmp.ge.f32.partialorder %v425, 0.0
    %vm970 = vcmp.ge.f32.partialorder %v426, 0.0
    %vm971 = vcmp.ge.f32.partialorder %v427, 0.0
    %vm972 = vcmp.ge.f32.partialorder %v428, 0.0
    %vm973 = vcmp.ge.f32.partialorder %v429, 0.0
    %vm974 = vcmp.ge.f32.partialorder %v430, 0.0
    %vm975 = vcmp.ge.f32.partialorder %v431, 0.0
    %v976 = vsub.f32 0.0, %v944
    %v977 = vsub.f32 0.0, %v945
    %v978 = vsub.f32 0.0, %v946
    %v979 = vsub.f32 0.0, %v947
    %v980 = vsub.f32 0.0, %v948
    %v981 = vsub.f32 0.0, %v949
    %v982 = vsub.f32 0.0, %v950
    %v983 = vsub.f32 0.0, %v951
    %v984 = vsub.f32 0.0, %v952
    %v985 = vsub.f32 0.0, %v953
    %v986 = vsub.f32 0.0, %v954
    %v987 = vsub.f32 0.0, %v955
    %v988 = vsub.f32 0.0, %v956
    %v989 = vsub.f32 0.0, %v957
    %v990 = vsub.f32 0.0, %v958
    %v991 = vsub.f32 0.0, %v959
    %v992 = vsel %vm960, %v944, %v976
    %v993 = vsel %vm961, %v945, %v977
    %v994 = vsel %vm962, %v946, %v978
    %v995 = vsel %vm963, %v947, %v979
    %v996 = vsel %vm964, %v948, %v980
    %v997 = vsel %vm965, %v949, %v981
    %v998 = vsel %vm966, %v950, %v982
    %v999 = vsel %vm967, %v951, %v983
    %v1000 = vsel %vm968, %v952, %v984
    %v1001 = vsel %vm969, %v953, %v985
    %v1002 = vsel %vm970, %v954, %v986
    %v1003 = vsel %vm971, %v955, %v987
    %v1004 = vsel %vm972, %v956, %v988
    %v1005 = vsel %vm973, %v957, %v989
    %v1006 = vsel %vm974, %v958, %v990
    %v1007 = vsel %vm975, %v959, %v991
    %v1008 = vmul.f32 %v400, 0.5
    %v1009 = vmul.f32 %v401, 0.5
    %v1010 = vmul.f32 %v402, 0.5
    %v1011 = vmul.f32 %v403, 0.5
    %v1012 = vmul.f32 %v404, 0.5
    %v1013 = vmul.f32 %v405, 0.5
    %v1014 = vmul.f32 %v406, 0.5
    %v1015 = vmul.f32 %v407, 0.5
    %v1016 = vmul.f32 %v408, 0.5
    %v1017 = vmul.f32 %v409, 0.5
    %v1018 = vmul.f32 %v410, 0.5
    %v1019 = vmul.f32 %v411, 0.5
    %v1020 = vmul.f32 %v412, 0.5
    %v1021 = vmul.f32 %v413, 0.5
    %v1022 = vmul.f32 %v414, 0.5
    %v1023 = vmul.f32 %v415, 0.5
    %v1024 = vadd.f32 %v992, 1.0
    %v1025 = vadd.f32 %v993, 1.0
    %v1026 = vadd.f32 %v994, 1.0
    %v1027 = vadd.f32 %v995, 1.0
    %v1028 = vadd.f32 %v996, 1.0
    %v1029 = vadd.f32 %v997, 1.0
    %v1030 = vadd.f32 %v998, 1.0
    %v1031 = vadd.f32 %v999, 1.0
    %v1032 = vadd.f32 %v1000, 1.0
    %v1033 = vadd.f32 %v1001, 1.0
    %v1034 = vadd.f32 %v1002, 1.0
    %v1035 = vadd.f32 %v1003, 1.0
    %v1036 = vadd.f32 %v1004, 1.0
    %v1037 = vadd.f32 %v1005, 1.0
    %v1038 = vadd.f32 %v1006, 1.0
    %v1039 = vadd.f32 %v1007, 1.0
    %v1040 = vmul.f32 %v1008, %v1024
    %v1041 = vmul.f32 %v1009, %v1025
    %v1042 = vmul.f32 %v1010, %v1026
    %v1043 = vmul.f32 %v1011, %v1027
    %v1044 = vmul.f32 %v1012, %v1028
    %v1045 = vmul.f32 %v1013, %v1029
    %v1046 = vmul.f32 %v1014, %v1030
    %v1047 = vmul.f32 %v1015, %v1031
    %v1048 = vmul.f32 %v1016, %v1032
    %v1049 = vmul.f32 %v1017, %v1033
    %v1050 = vmul.f32 %v1018, %v1034
    %v1051 = vmul.f32 %v1019, %v1035
    %v1052 = vmul.f32 %v1020, %v1036
    %v1053 = vmul.f32 %v1021, %v1037
    %v1054 = vmul.f32 %v1022, %v1038
    %v1055 = vmul.f32 %v1023, %v1039
    %v1056 = vpack.c.bf16 %v1041, %v1040
    %v1057 = vpack.c.bf16 %v1043, %v1042
    %v1058 = vpack.c.bf16 %v1045, %v1044
    %v1059 = vpack.c.bf16 %v1047, %v1046
    %v1060 = vpack.c.bf16 %v1049, %v1048
    %v1061 = vpack.c.bf16 %v1051, %v1050
    %v1062 = vpack.c.bf16 %v1053, %v1052
    %v1063 = vpack.c.bf16 %v1055, %v1054
    %1064 = vst [vmem:[%s3] sm:$0xff] %v1056
    %1065 = vst [vmem:[%s3 + $0x8] sm:$0xff] %v1057
    %1066 = vst [vmem:[%s3 + $0x10] sm:$0xff] %v1058
    %1067 = vst [vmem:[%s3 + $0x18] sm:$0xff] %v1059
    %1068 = vst [vmem:[%s3 + $0x20] sm:$0xff] %v1060
    %1069 = vst [vmem:[%s3 + $0x28] sm:$0xff] %v1061
    %1070 = vst [vmem:[%s3 + $0x30] sm:$0xff] %v1062
    %1071 = vst [vmem:[%s3 + $0x38] sm:$0xff] %v1063
  $region21: #{gpt_forward.14} parent=0 // pred_fallthru
    _
  // Predicated region
  $region22: #{gpt_forward.14} parent=0 // pred_check
    _
  $region23: #{gpt_forward.14} parent=0 // pred_check_branch
    %1073 = sbr.rel (0) target = $region25
  $region24: #{gpt_forward.14} parent=0 // pred_region
    _
  $region25: #{gpt_forward.14} parent=0 // pred_fallthru
    _
  // Predicated region
  $region26: #{gpt_forward.14} parent=0 // pred_check
    _
  $region27: #{gpt_forward.14} parent=0 // pred_check_branch
    %1075 = sbr.rel (0) target = $region29
  $region28: #{gpt_forward.14} parent=0 // pred_region
    _
  $region29: #{gpt_forward.14} parent=0 // pred_fallthru
    _

// kernel: gpt_forward.16
$region0: #{gpt_forward.16}
  #allocation0 [shape = 'u32[]', space=smem, size = 0x4, offset = 0x4, fixed_abs, tag = 'smem constant byte address 0x4 - core index']
  #allocation1 [shape = 'u32[72,128]{1,0:T(1,128)}', space=vmem, size = 0x9000, scoped, tag = 'internal scratch']
  #allocation2 [shape = 'f32[32,384]{1,0:T(8,128)}', space=vmem, size = 0xc000, scoped, tag = 'scratch operand']
  %s0 = inlined_call_operand.vmem [shape: bf16[32,128], index: 0, kind: input, shape index: {}]
  %s1 = inlined_call_operand.vmem [shape: bf16[128,384], index: 1, kind: input, shape index: {}]
  %s2 = inlined_call_operand.vmem [shape: bf16[1,384], index: 2, kind: input, shape index: {}]
  %s3 = inlined_call_operand.vmem [shape: bf16[32,384], index: 3, kind: output, shape index: {}]
  %s4 = sld [smem:[#allocation0]]
  $region30: #{gpt_forward.16} parent=0
    _
  %s6 = ssub.s32 1, %s4
  %s7 = scalar_select 0, %s6, %s4
  // Predicated region
  $region2: #{gpt_forward.16} parent=0 // pred_check
    _
  $region3: #{gpt_forward.16} parent=0 // pred_check_branch
    %9 = sbr.rel (0) target = $region5
  $region4: #{gpt_forward.16} parent=0 // pred_region
    _
  $region5: #{gpt_forward.16} parent=0 // pred_fallthru
    _
  // Predicated region
  $region6: #{gpt_forward.16} parent=0 // pred_check
    _
  $region7: #{gpt_forward.16} parent=0 // pred_check_branch
    %11 = sbr.rel (0) target = $region9
  $region8: #{gpt_forward.16} parent=0 // pred_region
    _
  $region9: #{gpt_forward.16} parent=0 // pred_fallthru
    _
  // Predicated region
  $region10: #{gpt_forward.16} parent=0 // pred_check
    _
  $region11: #{gpt_forward.16} parent=0 // pred_check_branch
    %13 = sbr.rel (0) target = $region13
  $region12: #{gpt_forward.16} parent=0 // pred_region
    _
  $region13: #{gpt_forward.16} parent=0 // pred_fallthru
    _
  %p14 = scmp.eq.s32.totalorder 0, 0
  // Predicated region
  $region14: #{gpt_forward.16} parent=0 // pred_check
    %p15 = pneg %p14
  $region15: #{gpt_forward.16} parent=0 // pred_check_branch
    %17 = sbr.rel (%p15) target = $region17
  $region16: #{gpt_forward.16} parent=0 // pred_region
    %18 = vst [vmem:[#allocation2] sm:$0xff] 0.0
    %19 = vst [vmem:[#allocation2 + $0x8] sm:$0xff] 0.0
    %20 = vst [vmem:[#allocation2 + $0x10] sm:$0xff] 0.0
    %21 = vst [vmem:[#allocation2 + $0x18] sm:$0xff] 0.0
    %22 = vst [vmem:[#allocation2 + $0x20] sm:$0xff] 0.0
    %23 = vst [vmem:[#allocation2 + $0x28] sm:$0xff] 0.0
    %24 = vst [vmem:[#allocation2 + $0x30] sm:$0xff] 0.0
    %25 = vst [vmem:[#allocation2 + $0x38] sm:$0xff] 0.0
    %26 = vst [vmem:[#allocation2 + $0x40] sm:$0xff] 0.0
    %27 = vst [vmem:[#allocation2 + $0x48] sm:$0xff] 0.0
    %28 = vst [vmem:[#allocation2 + $0x50] sm:$0xff] 0.0
    %29 = vst [vmem:[#allocation2 + $0x58] sm:$0xff] 0.0
  $region17: #{gpt_forward.16} parent=0 // pred_fallthru
    _
  %v30 = vld [vmem:[#allocation2] sm:$0xff]
  %v31 = vld [vmem:[#allocation2 + $0x8] sm:$0xff]
  %v32 = vld [vmem:[#allocation2 + $0x10] sm:$0xff]
  %v33 = vld [vmem:[#allocation2 + $0x18] sm:$0xff]
  %v34 = vld [vmem:[#allocation2 + $0x20] sm:$0xff]
  %v35 = vld [vmem:[#allocation2 + $0x28] sm:$0xff]
  %v36 = vld [vmem:[#allocation2 + $0x30] sm:$0xff]
  %v37 = vld [vmem:[#allocation2 + $0x38] sm:$0xff]
  %v38 = vld [vmem:[#allocation2 + $0x40] sm:$0xff]
  %v39 = vld [vmem:[#allocation2 + $0x48] sm:$0xff]
  %v40 = vld [vmem:[#allocation2 + $0x50] sm:$0xff]
  %v41 = vld [vmem:[#allocation2 + $0x58] sm:$0xff]
  %v42 = vld [vmem:[%s0] sm:$0xf]
  %v43 = vld [vmem:[%s0 + $0x4] sm:$0xf]
  %v44 = vld [vmem:[%s0 + $0x8] sm:$0xf]
  %v45 = vld [vmem:[%s0 + $0xc] sm:$0xf]
  %v46 = vld [vmem:[%s1] sm:$0xff]
  %v47 = vld [vmem:[%s1 + $0x8] sm:$0xf]
  %v48 = vld [vmem:[%s1 + $0xc] sm:$0xff]
  %v49 = vld [vmem:[%s1 + $0x14] sm:$0xf]
  %v50 = vld [vmem:[%s1 + $0x18] sm:$0xff]
  %v51 = vld [vmem:[%s1 + $0x20] sm:$0xf]
  %v52 = vld [vmem:[%s1 + $0x24] sm:$0xff]
  %v53 = vld [vmem:[%s1 + $0x2c] sm:$0xf]
  %v54 = vld [vmem:[%s1 + $0x30] sm:$0xff]
  %v55 = vld [vmem:[%s1 + $0x38] sm:$0xf]
  %v56 = vld [vmem:[%s1 + $0x3c] sm:$0xff]
  %v57 = vld [vmem:[%s1 + $0x44] sm:$0xf]
  %v58 = vld [vmem:[%s1 + $0x48] sm:$0xff]
  %v59 = vld [vmem:[%s1 + $0x50] sm:$0xf]
  %v60 = vld [vmem:[%s1 + $0x54] sm:$0xff]
  %v61 = vld [vmem:[%s1 + $0x5c] sm:$0xf]
  %v62 = vld [vmem:[%s1 + $0x60] sm:$0xff]
  %v63 = vld [vmem:[%s1 + $0x68] sm:$0xf]
  %v64 = vld [vmem:[%s1 + $0x6c] sm:$0xff]
  %v65 = vld [vmem:[%s1 + $0x74] sm:$0xf]
  %v66 = vld [vmem:[%s1 + $0x78] sm:$0xff]
  %v67 = vld [vmem:[%s1 + $0x80] sm:$0xf]
  %v68 = vld [vmem:[%s1 + $0x84] sm:$0xff]
  %v69 = vld [vmem:[%s1 + $0x8c] sm:$0xf]
  %v70 = vld [vmem:[%s1 + $0x90] sm:$0xff]
  %v71 = vld [vmem:[%s1 + $0x98] sm:$0xf]
  %v72 = vld [vmem:[%s1 + $0x9c] sm:$0xff]
  %v73 = vld [vmem:[%s1 + $0xa4] sm:$0xf]
  %v74 = vld [vmem:[%s1 + $0xa8] sm:$0xff]
  %v75 = vld [vmem:[%s1 + $0xb0] sm:$0xf]
  %v76 = vld [vmem:[%s1 + $0xb4] sm:$0xff]
  %v77 = vld [vmem:[%s1 + $0xbc] sm:$0xf]
  %v82 = vunpack.c.l.b16 %v42
  %v83 = vunpack.c.l.b16 %v43
  %v84 = vunpack.c.l.b16 %v44
  %v85 = vunpack.c.l.b16 %v45
  %v86 = vpack.c.b16 %v83, %v82
  %v87 = vpack.c.b16 %v85, %v84
  %v122 = vunpack.c.l.b16 %v46
  %v123 = vunpack.c.h.b16 %v46
  %v124 = vunpack.c.l.b16 %v47
  %v125 = vunpack.c.l.b16 %v48
  %v126 = vunpack.c.h.b16 %v48
  %v127 = vunpack.c.l.b16 %v49
  %v128 = vunpack.c.l.b16 %v50
  %v129 = vunpack.c.h.b16 %v50
  %v130 = vunpack.c.l.b16 %v51
  %v131 = vunpack.c.l.b16 %v52
  %v132 = vunpack.c.h.b16 %v52
  %v133 = vunpack.c.l.b16 %v53
  %v134 = vunpack.c.l.b16 %v54
  %v135 = vunpack.c.h.b16 %v54
  %v136 = vunpack.c.l.b16 %v55
  %v137 = vunpack.c.l.b16 %v56
  %v138 = vunpack.c.h.b16 %v56
  %v139 = vunpack.c.l.b16 %v57
  %v140 = vunpack.c.l.b16 %v58
  %v141 = vunpack.c.h.b16 %v58
  %v142 = vunpack.c.l.b16 %v59
  %v143 = vunpack.c.l.b16 %v60
  %v144 = vunpack.c.h.b16 %v60
  %v145 = vunpack.c.l.b16 %v61
  %v146 = vunpack.c.l.b16 %v62
  %v147 = vunpack.c.h.b16 %v62
  %v148 = vunpack.c.l.b16 %v63
  %v149 = vunpack.c.l.b16 %v64
  %v150 = vunpack.c.h.b16 %v64
  %v151 = vunpack.c.l.b16 %v65
  %v152 = vunpack.c.l.b16 %v66
  %v153 = vunpack.c.h.b16 %v66
  %v154 = vunpack.c.l.b16 %v67
  %v155 = vunpack.c.l.b16 %v68
  %v156 = vunpack.c.h.b16 %v68
  %v157 = vunpack.c.l.b16 %v69
  %v158 = vunpack.c.l.b16 %v70
  %v159 = vunpack.c.h.b16 %v70
  %v160 = vunpack.c.l.b16 %v71
  %v161 = vunpack.c.l.b16 %v72
  %v162 = vunpack.c.h.b16 %v72
  %v163 = vunpack.c.l.b16 %v73
  %v164 = vunpack.c.l.b16 %v74
  %v165 = vunpack.c.h.b16 %v74
  %v166 = vunpack.c.l.b16 %v75
  %v167 = vunpack.c.l.b16 %v76
  %v168 = vunpack.c.h.b16 %v76
  %v169 = vunpack.c.l.b16 %v77
  %v170 = vpack.c.b16 %v125, %v122
  %v171 = vpack.c.b16 %v126, %v123
  %v172 = vpack.c.b16 %v127, %v124
  %v173 = vpack.c.b16 %v131, %v128
  %v174 = vpack.c.b16 %v132, %v129
  %v175 = vpack.c.b16 %v133, %v130
  %v176 = vpack.c.b16 %v137, %v134
  %v177 = vpack.c.b16 %v138, %v135
  %v178 = vpack.c.b16 %v139, %v136
  %v179 = vpack.c.b16 %v143, %v140
  %v180 = vpack.c.b16 %v144, %v141
  %v181 = vpack.c.b16 %v145, %v142
  %v182 = vpack.c.b16 %v149, %v146
  %v183 = vpack.c.b16 %v150, %v147
  %v184 = vpack.c.b16 %v151, %v148
  %v185 = vpack.c.b16 %v155, %v152
  %v186 = vpack.c.b16 %v156, %v153
  %v187 = vpack.c.b16 %v157, %v154
  %v188 = vpack.c.b16 %v161, %v158
  %v189 = vpack.c.b16 %v162, %v159
  %v190 = vpack.c.b16 %v163, %v160
  %v191 = vpack.c.b16 %v167, %v164
  %v192 = vpack.c.b16 %v168, %v165
  %v193 = vpack.c.b16 %v169, %v166
  %218 = vmatpush.bf16.msra.mxu0 %v191
  %219 = vmatpush.bf16.msra.mxu0 %v188
  %220 = vmatpush.bf16.msra.mxu0 %v185
  %221 = vmatpush.bf16.msra.mxu0 %v182
  %222 = vmatpush.bf16.msra.mxu0 %v179
  %223 = vmatpush.bf16.msra.mxu0 %v176
  %224 = vmatpush.bf16.msra.mxu0 %v173
  %225 = vmatpush.bf16.msra.mxu0 %v170
  %226 = vmatmul.bf16.gmra.mxu0 %v86
  %v227 = vpop.f32.mrf.mxu0
  %v228 = vadd.f32 0.0, %v227
  %v229 = vpop.f32.mrf.mxu0
  %v230 = vadd.f32 0.0, %v229
  %231 = vmatmul.bf16.gmra.mxu0 %v87
  %v232 = vpop.f32.mrf.mxu0
  %v233 = vadd.f32 0.0, %v232
  %v234 = vpop.f32.mrf.mxu0
  %v235 = vadd.f32 0.0, %v234
  %236 = vdwg.mxu0
  %237 = vmatpush.bf16.msra.mxu0 %v192
  %238 = vmatpush.bf16.msra.mxu0 %v189
  %239 = vmatpush.bf16.msra.mxu0 %v186
  %240 = vmatpush.bf16.msra.mxu0 %v183
  %241 = vmatpush.bf16.msra.mxu0 %v180
  %242 = vmatpush.bf16.msra.mxu0 %v177
  %243 = vmatpush.bf16.msra.mxu0 %v174
  %244 = vmatpush.bf16.msra.mxu0 %v171
  %245 = vmatmul.bf16.gmra.mxu0 %v86
  %v246 = vpop.f32.mrf.mxu0
  %v247 = vadd.f32 0.0, %v246
  %v248 = vpop.f32.mrf.mxu0
  %v249 = vadd.f32 0.0, %v248
  %250 = vmatmul.bf16.gmra.mxu0 %v87
  %v251 = vpop.f32.mrf.mxu0
  %v252 = vadd.f32 0.0, %v251
  %v253 = vpop.f32.mrf.mxu0
  %v254 = vadd.f32 0.0, %v253
  %255 = vdwg.mxu0
  %256 = vmatpush.bf16.msra.mxu0 %v193
  %257 = vmatpush.bf16.msra.mxu0 %v190
  %258 = vmatpush.bf16.msra.mxu0 %v187
  %259 = vmatpush.bf16.msra.mxu0 %v184
  %260 = vmatpush.bf16.msra.mxu0 %v181
  %261 = vmatpush.bf16.msra.mxu0 %v178
  %262 = vmatpush.bf16.msra.mxu0 %v175
  %263 = vmatpush.bf16.msra.mxu0 %v172
  %264 = vmatmul.bf16.gmra.mxu0 %v86
  %v265 = vpop.f32.mrf.mxu0
  %v266 = vadd.f32 0.0, %v265
  %v267 = vpop.f32.mrf.mxu0
  %v268 = vadd.f32 0.0, %v267
  %269 = vmatmul.bf16.gmra.mxu0 %v87
  %v270 = vpop.f32.mrf.mxu0
  %v271 = vadd.f32 0.0, %v270
  %v272 = vpop.f32.mrf.mxu0
  %v273 = vadd.f32 0.0, %v272
  %274 = vdwg.mxu0
  %v275 = vadd.f32 %v30, %v228
  %v276 = vadd.f32 %v31, %v247
  %v277 = vadd.f32 %v32, %v266
  %v278 = vadd.f32 %v33, %v230
  %v279 = vadd.f32 %v34, %v249
  %v280 = vadd.f32 %v35, %v268
  %v281 = vadd.f32 %v36, %v233
  %v282 = vadd.f32 %v37, %v252
  %v283 = vadd.f32 %v38, %v271
  %v284 = vadd.f32 %v39, %v235
  %v285 = vadd.f32 %v40, %v254
  %v286 = vadd.f32 %v41, %v273
  %287 = vst [vmem:[#allocation2] sm:$0xff] %v275
  %288 = vst [vmem:[#allocation2 + $0x8] sm:$0xff] %v276
  %289 = vst [vmem:[#allocation2 + $0x10] sm:$0xff] %v277
  %290 = vst [vmem:[#allocation2 + $0x18] sm:$0xff] %v278
  %291 = vst [vmem:[#allocation2 + $0x20] sm:$0xff] %v279
  %292 = vst [vmem:[#allocation2 + $0x28] sm:$0xff] %v280
  %293 = vst [vmem:[#allocation2 + $0x30] sm:$0xff] %v281
  %294 = vst [vmem:[#allocation2 + $0x38] sm:$0xff] %v282
  %295 = vst [vmem:[#allocation2 + $0x40] sm:$0xff] %v283
  %296 = vst [vmem:[#allocation2 + $0x48] sm:$0xff] %v284
  %297 = vst [vmem:[#allocation2 + $0x50] sm:$0xff] %v285
  %298 = vst [vmem:[#allocation2 + $0x58] sm:$0xff] %v286
  // Predicated region
  $region18: #{gpt_forward.16} parent=0 // pred_check
    %p299 = pneg %p14
  $region19: #{gpt_forward.16} parent=0 // pred_check_branch
    %301 = sbr.rel (%p299) target = $region21
  $region20: #{gpt_forward.16} parent=0 // pred_region
    %v302 = vld [vmem:[#allocation2] sm:$0xff]
    %v303 = vld [vmem:[#allocation2 + $0x8] sm:$0xff]
    %v304 = vld [vmem:[#allocation2 + $0x10] sm:$0xff]
    %v305 = vld [vmem:[#allocation2 + $0x18] sm:$0xff]
    %v306 = vld [vmem:[#allocation2 + $0x20] sm:$0xff]
    %v307 = vld [vmem:[#allocation2 + $0x28] sm:$0xff]
    %v308 = vld [vmem:[#allocation2 + $0x30] sm:$0xff]
    %v309 = vld [vmem:[#allocation2 + $0x38] sm:$0xff]
    %v310 = vld [vmem:[#allocation2 + $0x40] sm:$0xff]
    %v311 = vld [vmem:[#allocation2 + $0x48] sm:$0xff]
    %v312 = vld [vmem:[#allocation2 + $0x50] sm:$0xff]
    %v313 = vld [vmem:[#allocation2 + $0x58] sm:$0xff]
    %v314 = vld [vmem:[%s2] sm:$0x7]
    %v315 = vunpack.c.l.bf16 %v314
    %v317 = vperm.slane %v315, 0
    %v318 = vperm.slane %v315, 2
    %v319 = vperm.slane %v315, 4
    %v323 = vperm.slane %v317, 0
    %v324 = vperm.slane %v318, 0
    %v325 = vperm.slane %v319, 0
    %v326 = vadd.f32 %v302, %v323
    %v327 = vadd.f32 %v303, %v324
    %v328 = vadd.f32 %v304, %v325
    %v329 = vadd.f32 %v305, %v323
    %v330 = vadd.f32 %v306, %v324
    %v331 = vadd.f32 %v307, %v325
    %v332 = vadd.f32 %v308, %v323
    %v333 = vadd.f32 %v309, %v324
    %v334 = vadd.f32 %v310, %v325
    %v335 = vadd.f32 %v311, %v323
    %v336 = vadd.f32 %v312, %v324
    %v337 = vadd.f32 %v313, %v325
    %v338 = vpack.c.bf16 %v327, %v326
    %v339 = vpack.c.bf16 %v328, %v328
    %v340 = vpack.c.bf16 %v330, %v329
    %v341 = vpack.c.bf16 %v331, %v331
    %v342 = vpack.c.bf16 %v333, %v332
    %v343 = vpack.c.bf16 %v334, %v334
    %v344 = vpack.c.bf16 %v336, %v335
    %v345 = vpack.c.bf16 %v337, %v337
    %346 = vst [vmem:[%s3] sm:$0xff] %v338
    %347 = vst [vmem:[%s3 + $0x8] sm:$0xf] %v339
    %348 = vst [vmem:[%s3 + $0xc] sm:$0xff] %v340
    %349 = vst [vmem:[%s3 + $0x14] sm:$0xf] %v341
    %350 = vst [vmem:[%s3 + $0x18] sm:$0xff] %v342
    %351 = vst [vmem:[%s3 + $0x20] sm:$0xf] %v343
    %352 = vst [vmem:[%s3 + $0x24] sm:$0xff] %v344
    %353 = vst [vmem:[%s3 + $0x2c] sm:$0xf] %v345
  $region21: #{gpt_forward.16} parent=0 // pred_fallthru
    _
  // Predicated region
  $region22: #{gpt_forward.16} parent=0 // pred_check
    _
  $region23: #{gpt_forward.16} parent=0 // pred_check_branch
    %355 = sbr.rel (0) target = $region25
  $region24: #{gpt_forward.16} parent=0 // pred_region
    _
  $region25: #{gpt_forward.16} parent=0 // pred_fallthru
    _
  // Predicated region
  $region26: #{gpt_forward.16} parent=0 // pred_check
    _
  $region27: #{gpt_forward.16} parent=0 // pred_check_branch
    %357 = sbr.rel (0) target = $region29
  $region28: #{gpt_forward.16} parent=0 // pred_region
    _
  $region29: #{gpt_forward.16} parent=0 // pred_fallthru
    _

// kernel: gpt_forward.21
$region0: #{gpt_forward.21}
  #allocation0 [shape = 'u32[]', space=smem, size = 0x4, offset = 0x4, fixed_abs, tag = 'smem constant byte address 0x4 - core index']
  #allocation1 [shape = 'u32[72,128]{1,0:T(1,128)}', space=vmem, size = 0x9000, scoped, tag = 'internal scratch']
  #allocation2 [shape = 'f32[32,256]{1,0:T(8,128)}', space=vmem, size = 0x8000, scoped, tag = 'scratch operand']
  %s0 = inlined_call_operand.vmem [shape: bf16[32,128], index: 0, kind: input, shape index: {}]
  %s1 = inlined_call_operand.vmem [shape: bf16[128,256], index: 1, kind: input, shape index: {}]
  %s2 = inlined_call_operand.vmem [shape: bf16[1,256], index: 2, kind: input, shape index: {}]
  %s3 = inlined_call_operand.hbm [shape: bf16[32,256], index: 3, kind: output, shape index: {}]
  %s4 = sld [smem:[#allocation0]]
  $region30: #{gpt_forward.21} parent=0
    _
  %s6 = ssub.s32 1, %s4
  %s7 = scalar_select 0, %s6, %s4
  $region1: #{gpt_forward.21} parent=0
    #allocation3 [shape = 'u8[16384]{0}', space=vmem, size = 0x4000, scoped, tag = 'output window, operand 0, single buffered']
    #allocation4 [shape = 's32[1]{0}', space=sflag, size = 0x4, scoped, tag = 'scoped memory for gpt_forward.21']
    %8 = vsyncpa [#allocation4], 0
    // Predicated region
    $region2: #{gpt_forward.21} parent=1 // pred_check
      _
    $region3: #{gpt_forward.21} parent=1 // pred_check_branch
      %10 = sbr.rel (0) target = $region5
    $region4: #{gpt_forward.21} parent=1 // pred_region
      _
    $region5: #{gpt_forward.21} parent=1 // pred_fallthru
      _
    // Predicated region
    $region6: #{gpt_forward.21} parent=1 // pred_check
      _
    $region7: #{gpt_forward.21} parent=1 // pred_check_branch
      %12 = sbr.rel (0) target = $region9
    $region8: #{gpt_forward.21} parent=1 // pred_region
      _
    $region9: #{gpt_forward.21} parent=1 // pred_fallthru
      _
    // Predicated region
    $region10: #{gpt_forward.21} parent=1 // pred_check
      _
    $region11: #{gpt_forward.21} parent=1 // pred_check_branch
      %14 = sbr.rel (0) target = $region13
    $region12: #{gpt_forward.21} parent=1 // pred_region
      _
    $region13: #{gpt_forward.21} parent=1 // pred_fallthru
      _
    %p15 = scmp.eq.s32.totalorder 0, 0
    // Predicated region
    $region14: #{gpt_forward.21} parent=1 // pred_check
      %p16 = pneg %p15
    $region15: #{gpt_forward.21} parent=1 // pred_check_branch
      %18 = sbr.rel (%p16) target = $region17
    $region16: #{gpt_forward.21} parent=1 // pred_region
      %19 = vst [vmem:[#allocation2] sm:$0xff] 0.0
      %20 = vst [vmem:[#allocation2 + $0x8] sm:$0xff] 0.0
      %21 = vst [vmem:[#allocation2 + $0x10] sm:$0xff] 0.0
      %22 = vst [vmem:[#allocation2 + $0x18] sm:$0xff] 0.0
      %23 = vst [vmem:[#allocation2 + $0x20] sm:$0xff] 0.0
      %24 = vst [vmem:[#allocation2 + $0x28] sm:$0xff] 0.0
      %25 = vst [vmem:[#allocation2 + $0x30] sm:$0xff] 0.0
      %26 = vst [vmem:[#allocation2 + $0x38] sm:$0xff] 0.0
    $region17: #{gpt_forward.21} parent=1 // pred_fallthru
      _
    %v27 = vld [vmem:[#allocation2] sm:$0xff]
    %v28 = vld [vmem:[#allocation2 + $0x8] sm:$0xff]
    %v29 = vld [vmem:[#allocation2 + $0x10] sm:$0xff]
    %v30 = vld [vmem:[#allocation2 + $0x18] sm:$0xff]
    %v31 = vld [vmem:[#allocation2 + $0x20] sm:$0xff]
    %v32 = vld [vmem:[#allocation2 + $0x28] sm:$0xff]
    %v33 = vld [vmem:[#allocation2 + $0x30] sm:$0xff]
    %v34 = vld [vmem:[#allocation2 + $0x38] sm:$0xff]
    %v35 = vld [vmem:[%s0] sm:$0xf]
    %v36 = vld [vmem:[%s0 + $0x4] sm:$0xf]
    %v37 = vld [vmem:[%s0 + $0x8] sm:$0xf]
    %v38 = vld [vmem:[%s0 + $0xc] sm:$0xf]
    %v39 = vld [vmem:[%s1] sm:$0xff]
    %v40 = vld [vmem:[%s1 + $0x8] sm:$0xff]
    %v41 = vld [vmem:[%s1 + $0x10] sm:$0xff]
    %v42 = vld [vmem:[%s1 + $0x18] sm:$0xff]
    %v43 = vld [vmem:[%s1 + $0x20] sm:$0xff]
    %v44 = vld [vmem:[%s1 + $0x28] sm:$0xff]
    %v45 = vld [vmem:[%s1 + $0x30] sm:$0xff]
    %v46 = vld [vmem:[%s1 + $0x38] sm:$0xff]
    %v47 = vld [vmem:[%s1 + $0x40] sm:$0xff]
    %v48 = vld [vmem:[%s1 + $0x48] sm:$0xff]
    %v49 = vld [vmem:[%s1 + $0x50] sm:$0xff]
    %v50 = vld [vmem:[%s1 + $0x58] sm:$0xff]
    %v51 = vld [vmem:[%s1 + $0x60] sm:$0xff]
    %v52 = vld [vmem:[%s1 + $0x68] sm:$0xff]
    %v53 = vld [vmem:[%s1 + $0x70] sm:$0xff]
    %v54 = vld [vmem:[%s1 + $0x78] sm:$0xff]
    %v59 = vunpack.c.l.b16 %v35
    %v60 = vunpack.c.l.b16 %v36
    %v61 = vunpack.c.l.b16 %v37
    %v62 = vunpack.c.l.b16 %v38
    %v63 = vpack.c.b16 %v60, %v59
    %v64 = vpack.c.b16 %v62, %v61
    %v83 = vunpack.c.l.b16 %v39
    %v84 = vunpack.c.h.b16 %v39
    %v85 = vunpack.c.l.b16 %v40
    %v86 = vunpack.c.h.b16 %v40
    %v87 = vunpack.c.l.b16 %v41
    %v88 = vunpack.c.h.b16 %v41
    %v89 = vunpack.c.l.b16 %v42
    %v90 = vunpack.c.h.b16 %v42
    %v91 = vunpack.c.l.b16 %v43
    %v92 = vunpack.c.h.b16 %v43
    %v93 = vunpack.c.l.b16 %v44
    %v94 = vunpack.c.h.b16 %v44
    %v95 = vunpack.c.l.b16 %v45
    %v96 = vunpack.c.h.b16 %v45
    %v97 = vunpack.c.l.b16 %v46
    %v98 = vunpack.c.h.b16 %v46
    %v99 = vunpack.c.l.b16 %v47
    %v100 = vunpack.c.h.b16 %v47
    %v101 = vunpack.c.l.b16 %v48
    %v102 = vunpack.c.h.b16 %v48
    %v103 = vunpack.c.l.b16 %v49
    %v104 = vunpack.c.h.b16 %v49
    %v105 = vunpack.c.l.b16 %v50
    %v106 = vunpack.c.h.b16 %v50
    %v107 = vunpack.c.l.b16 %v51
    %v108 = vunpack.c.h.b16 %v51
    %v109 = vunpack.c.l.b16 %v52
    %v110 = vunpack.c.h.b16 %v52
    %v111 = vunpack.c.l.b16 %v53
    %v112 = vunpack.c.h.b16 %v53
    %v113 = vunpack.c.l.b16 %v54
    %v114 = vunpack.c.h.b16 %v54
    %v115 = vpack.c.b16 %v85, %v83
    %v116 = vpack.c.b16 %v86, %v84
    %v117 = vpack.c.b16 %v89, %v87
    %v118 = vpack.c.b16 %v90, %v88
    %v119 = vpack.c.b16 %v93, %v91
    %v120 = vpack.c.b16 %v94, %v92
    %v121 = vpack.c.b16 %v97, %v95
    %v122 = vpack.c.b16 %v98, %v96
    %v123 = vpack.c.b16 %v101, %v99
    %v124 = vpack.c.b16 %v102, %v100
    %v125 = vpack.c.b16 %v105, %v103
    %v126 = vpack.c.b16 %v106, %v104
    %v127 = vpack.c.b16 %v109, %v107
    %v128 = vpack.c.b16 %v110, %v108
    %v129 = vpack.c.b16 %v113, %v111
    %v130 = vpack.c.b16 %v114, %v112
    %147 = vmatpush.bf16.msra.mxu0 %v129
    %148 = vmatpush.bf16.msra.mxu0 %v127
    %149 = vmatpush.bf16.msra.mxu0 %v125
    %150 = vmatpush.bf16.msra.mxu0 %v123
    %151 = vmatpush.bf16.msra.mxu0 %v121
    %152 = vmatpush.bf16.msra.mxu0 %v119
    %153 = vmatpush.bf16.msra.mxu0 %v117
    %154 = vmatpush.bf16.msra.mxu0 %v115
    %155 = vmatmul.bf16.gmra.mxu0 %v63
    %v156 = vpop.f32.mrf.mxu0
    %v157 = vadd.f32 0.0, %v156
    %v158 = vpop.f32.mrf.mxu0
    %v159 = vadd.f32 0.0, %v158
    %160 = vmatmul.bf16.gmra.mxu0 %v64
    %v161 = vpop.f32.mrf.mxu0
    %v162 = vadd.f32 0.0, %v161
    %v163 = vpop.f32.mrf.mxu0
    %v164 = vadd.f32 0.0, %v163
    %165 = vdwg.mxu0
    %166 = vmatpush.bf16.msra.mxu0 %v130
    %167 = vmatpush.bf16.msra.mxu0 %v128
    %168 = vmatpush.bf16.msra.mxu0 %v126
    %169 = vmatpush.bf16.msra.mxu0 %v124
    %170 = vmatpush.bf16.msra.mxu0 %v122
    %171 = vmatpush.bf16.msra.mxu0 %v120
    %172 = vmatpush.bf16.msra.mxu0 %v118
    %173 = vmatpush.bf16.msra.mxu0 %v116
    %174 = vmatmul.bf16.gmra.mxu0 %v63
    %v175 = vpop.f32.mrf.mxu0
    %v176 = vadd.f32 0.0, %v175
    %v177 = vpop.f32.mrf.mxu0
    %v178 = vadd.f32 0.0, %v177
    %179 = vmatmul.bf16.gmra.mxu0 %v64
    %v180 = vpop.f32.mrf.mxu0
    %v181 = vadd.f32 0.0, %v180
    %v182 = vpop.f32.mrf.mxu0
    %v183 = vadd.f32 0.0, %v182
    %184 = vdwg.mxu0
    %v185 = vadd.f32 %v27, %v157
    %v186 = vadd.f32 %v28, %v176
    %v187 = vadd.f32 %v29, %v159
    %v188 = vadd.f32 %v30, %v178
    %v189 = vadd.f32 %v31, %v162
    %v190 = vadd.f32 %v32, %v181
    %v191 = vadd.f32 %v33, %v164
    %v192 = vadd.f32 %v34, %v183
    %193 = vst [vmem:[#allocation2] sm:$0xff] %v185
    %194 = vst [vmem:[#allocation2 + $0x8] sm:$0xff] %v186
    %195 = vst [vmem:[#allocation2 + $0x10] sm:$0xff] %v187
    %196 = vst [vmem:[#allocation2 + $0x18] sm:$0xff] %v188
    %197 = vst [vmem:[#allocation2 + $0x20] sm:$0xff] %v189
    %198 = vst [vmem:[#allocation2 + $0x28] sm:$0xff] %v190
    %199 = vst [vmem:[#allocation2 + $0x30] sm:$0xff] %v191
    %200 = vst [vmem:[#allocation2 + $0x38] sm:$0xff] %v192
    // Predicated region
    $region18: #{gpt_forward.21} parent=1 // pred_check
      %p201 = pneg %p15
    $region19: #{gpt_forward.21} parent=1 // pred_check_branch
      %203 = sbr.rel (%p201) target = $region21
    $region20: #{gpt_forward.21} parent=1 // pred_region
      %v204 = vld [vmem:[#allocation2] sm:$0xff]
      %v205 = vld [vmem:[#allocation2 + $0x8] sm:$0xff]
      %v206 = vld [vmem:[#allocation2 + $0x10] sm:$0xff]
      %v207 = vld [vmem:[#allocation2 + $0x18] sm:$0xff]
      %v208 = vld [vmem:[#allocation2 + $0x20] sm:$0xff]
      %v209 = vld [vmem:[#allocation2 + $0x28] sm:$0xff]
      %v210 = vld [vmem:[#allocation2 + $0x30] sm:$0xff]
      %v211 = vld [vmem:[#allocation2 + $0x38] sm:$0xff]
      %v212 = vld [vmem:[%s2] sm:$0x3]
      %v213 = vunpack.c.l.bf16 %v212
      %v215 = vperm.slane %v213, 0
      %v216 = vperm.slane %v213, 2
      %v219 = vperm.slane %v215, 0
      %v220 = vperm.slane %v216, 0
      %v221 = vadd.f32 %v204, %v219
      %v222 = vadd.f32 %v205, %v220
      %v223 = vadd.f32 %v206, %v219
      %v224 = vadd.f32 %v207, %v220
      %v225 = vadd.f32 %v208, %v219
      %v226 = vadd.f32 %v209, %v220
      %v227 = vadd.f32 %v210, %v219
      %v228 = vadd.f32 %v211, %v220
      %v229 = vpack.c.bf16 %v222, %v221
      %v230 = vpack.c.bf16 %v224, %v223
      %v231 = vpack.c.bf16 %v226, %v225
      %v232 = vpack.c.bf16 %v228, %v227
      %233 = vst [vmem:[#allocation3] sm:$0xff] %v229
      %234 = vst [vmem:[#allocation3 + $0x8] sm:$0xff] %v230
      %235 = vst [vmem:[#allocation3 + $0x10] sm:$0xff] %v231
      %236 = vst [vmem:[#allocation3 + $0x18] sm:$0xff] %v232
    $region21: #{gpt_forward.21} parent=1 // pred_fallthru
      _
    // Predicated region
    $region22: #{gpt_forward.21} parent=1 // pred_check
      _
    $region23: #{gpt_forward.21} parent=1 // pred_check_branch
      %238 = sbr.rel (0) target = $region25
    $region24: #{gpt_forward.21} parent=1 // pred_region
      %240 = vsyncadd [#allocation4], 0
      %s241 = sshll.u32 [#allocation3], 4
      %s242 = int_to_ptr.vmem [resolvable:$true] %s241
      %s243 = sshll.u32 %s3, 4
      %s244 = int_to_ptr.hbm [resolvable:$true] %s243
      %249 = dma.vmem_to_hbm [thread:$0]  %s242, 512, %s244, [#allocation4], 128, 128, 8
    $region25: #{gpt_forward.21} parent=1 // pred_fallthru
      _
    // Predicated region
    $region26: #{gpt_forward.21} parent=1 // pred_check
      _
    $region27: #{gpt_forward.21} parent=1 // pred_check_branch
      %251 = sbr.rel (0) target = $region29
    $region28: #{gpt_forward.21} parent=1 // pred_region
      %253 = dma.done [#allocation4], 512
    $region29: #{gpt_forward.21} parent=1 // pred_fallthru
      _
    %254 = vsyncpa [#allocation4], 1

// kernel: gpt_forward.15
$region0: #{gpt_forward.15}
  #allocation0 [shape = 'u32[]', space=smem, size = 0x4, offset = 0x4, fixed_abs, tag = 'smem constant byte address 0x4 - core index']
  #allocation1 [shape = 'u32[72,128]{1,0:T(1,128)}', space=vmem, size = 0x9000, scoped, tag = 'internal scratch']
  #allocation2 [shape = 'f32[32,128]{1,0:T(8,128)}', space=vmem, size = 0x4000, scoped, tag = 'scratch operand']
  %s0 = inlined_call_operand.vmem [shape: bf16[32,512], index: 0, kind: input, shape index: {}]
  %s1 = inlined_call_operand.vmem [shape: bf16[512,128], index: 1, kind: input, shape index: {}]
  %s2 = inlined_call_operand.vmem [shape: bf16[1,128], index: 2, kind: input, shape index: {}]
  %s3 = inlined_call_operand.vmem [shape: bf16[32,128], index: 3, kind: input, shape index: {}]
  %s4 = inlined_call_operand.vmem [shape: bf16[1,128], index: 4, kind: input, shape index: {}]
  %s5 = inlined_call_operand.vmem [shape: bf16[1,128], index: 5, kind: input, shape index: {}]
  %s6 = inlined_call_operand.vmem [shape: bf16[32,128], index: 6, kind: output, shape index: {}]
  %s7 = sld [smem:[#allocation0]]
  $region42: #{gpt_forward.15} parent=0
    _
  %s9 = ssub.s32 1, %s7
  %s10 = scalar_select 0, %s9, %s7
  // Predicated region
  $region2: #{gpt_forward.15} parent=0 // pred_check
    _
  $region3: #{gpt_forward.15} parent=0 // pred_check_branch
    %12 = sbr.rel (0) target = $region5
  $region4: #{gpt_forward.15} parent=0 // pred_region
    _
  $region5: #{gpt_forward.15} parent=0 // pred_fallthru
    _
  // Predicated region
  $region6: #{gpt_forward.15} parent=0 // pred_check
    _
  $region7: #{gpt_forward.15} parent=0 // pred_check_branch
    %14 = sbr.rel (0) target = $region9
  $region8: #{gpt_forward.15} parent=0 // pred_region
    _
  $region9: #{gpt_forward.15} parent=0 // pred_fallthru
    _
  // Predicated region
  $region10: #{gpt_forward.15} parent=0 // pred_check
    _
  $region11: #{gpt_forward.15} parent=0 // pred_check_branch
    %16 = sbr.rel (0) target = $region13
  $region12: #{gpt_forward.15} parent=0 // pred_region
    _
  $region13: #{gpt_forward.15} parent=0 // pred_fallthru
    _
  // Predicated region
  $region14: #{gpt_forward.15} parent=0 // pred_check
    _
  $region15: #{gpt_forward.15} parent=0 // pred_check_branch
    %18 = sbr.rel (0) target = $region17
  $region16: #{gpt_forward.15} parent=0 // pred_region
    _
  $region17: #{gpt_forward.15} parent=0 // pred_fallthru
    _
  // Predicated region
  $region18: #{gpt_forward.15} parent=0 // pred_check
    _
  $region19: #{gpt_forward.15} parent=0 // pred_check_branch
    %20 = sbr.rel (0) target = $region21
  $region20: #{gpt_forward.15} parent=0 // pred_region
    _
  $region21: #{gpt_forward.15} parent=0 // pred_fallthru
    _
  // Predicated region
  $region22: #{gpt_forward.15} parent=0 // pred_check
    _
  $region23: #{gpt_forward.15} parent=0 // pred_check_branch
    %22 = sbr.rel (0) target = $region25
  $region24: #{gpt_forward.15} parent=0 // pred_region
    _
  $region25: #{gpt_forward.15} parent=0 // pred_fallthru
    _
  %p23 = scmp.eq.s32.totalorder 0, 0
  // Predicated region
  $region26: #{gpt_forward.15} parent=0 // pred_check
    %p24 = pneg %p23
  $region27: #{gpt_forward.15} parent=0 // pred_check_branch
    %26 = sbr.rel (%p24) target = $region29
  $region28: #{gpt_forward.15} parent=0 // pred_region
    %27 = vst [vmem:[#allocation2] sm:$0xff] 0.0
    %28 = vst [vmem:[#allocation2 + $0x8] sm:$0xff] 0.0
    %29 = vst [vmem:[#allocation2 + $0x10] sm:$0xff] 0.0
    %30 = vst [vmem:[#allocation2 + $0x18] sm:$0xff] 0.0
  $region29: #{gpt_forward.15} parent=0 // pred_fallthru
    _
  %v31 = vld [vmem:[#allocation2] sm:$0xff]
  %v32 = vld [vmem:[#allocation2 + $0x8] sm:$0xff]
  %v33 = vld [vmem:[#allocation2 + $0x10] sm:$0xff]
  %v34 = vld [vmem:[#allocation2 + $0x18] sm:$0xff]
  %v35 = vld [vmem:[%s0] sm:$0xff]
  %v36 = vld [vmem:[%s0 + $0x8] sm:$0xff]
  %v37 = vld [vmem:[%s0 + $0x10] sm:$0xff]
  %v38 = vld [vmem:[%s0 + $0x18] sm:$0xff]
  %v39 = vld [vmem:[%s0 + $0x20] sm:$0xff]
  %v40 = vld [vmem:[%s0 + $0x28] sm:$0xff]
  %v41 = vld [vmem:[%s0 + $0x30] sm:$0xff]
  %v42 = vld [vmem:[%s0 + $0x38] sm:$0xff]
  %v43 = vld [vmem:[%s1] sm:$0xf]
  %v44 = vld [vmem:[%s1 + $0x4] sm:$0xf]
  %v45 = vld [vmem:[%s1 + $0x8] sm:$0xf]
  %v46 = vld [vmem:[%s1 + $0xc] sm:$0xf]
  %v47 = vld [vmem:[%s1 + $0x10] sm:$0xf]
  %v48 = vld [vmem:[%s1 + $0x14] sm:$0xf]
  %v49 = vld [vmem:[%s1 + $0x18] sm:$0xf]
  %v50 = vld [vmem:[%s1 + $0x1c] sm:$0xf]
  %v51 = vld [vmem:[%s1 + $0x20] sm:$0xf]
  %v52 = vld [vmem:[%s1 + $0x24] sm:$0xf]
  %v53 = vld [vmem:[%s1 + $0x28] sm:$0xf]
  %v54 = vld [vmem:[%s1 + $0x2c] sm:$0xf]
  %v55 = vld [vmem:[%s1 + $0x30] sm:$0xf]
  %v56 = vld [vmem:[%s1 + $0x34] sm:$0xf]
  %v57 = vld [vmem:[%s1 + $0x38] sm:$0xf]
  %v58 = vld [vmem:[%s1 + $0x3c] sm:$0xf]
  %v59 = vld [vmem:[%s1 + $0x40] sm:$0xf]
  %v60 = vld [vmem:[%s1 + $0x44] sm:$0xf]
  %v61 = vld [vmem:[%s1 + $0x48] sm:$0xf]
  %v62 = vld [vmem:[%s1 + $0x4c] sm:$0xf]
  %v63 = vld [vmem:[%s1 + $0x50] sm:$0xf]
  %v64 = vld [vmem:[%s1 + $0x54] sm:$0xf]
  %v65 = vld [vmem:[%s1 + $0x58] sm:$0xf]
  %v66 = vld [vmem:[%s1 + $0x5c] sm:$0xf]
  %v67 = vld [vmem:[%s1 + $0x60] sm:$0xf]
  %v68 = vld [vmem:[%s1 + $0x64] sm:$0xf]
  %v69 = vld [vmem:[%s1 + $0x68] sm:$0xf]
  %v70 = vld [vmem:[%s1 + $0x6c] sm:$0xf]
  %v71 = vld [vmem:[%s1 + $0x70] sm:$0xf]
  %v72 = vld [vmem:[%s1 + $0x74] sm:$0xf]
  %v73 = vld [vmem:[%s1 + $0x78] sm:$0xf]
  %v74 = vld [vmem:[%s1 + $0x7c] sm:$0xf]
  %v75 = vld [vmem:[%s1 + $0x80] sm:$0xf]
  %v76 = vld [vmem:[%s1 + $0x84] sm:$0xf]
  %v77 = vld [vmem:[%s1 + $0x88] sm:$0xf]
  %v78 = vld [vmem:[%s1 + $0x8c] sm:$0xf]
  %v79 = vld [vmem:[%s1 + $0x90] sm:$0xf]
  %v80 = vld [vmem:[%s1 + $0x94] sm:$0xf]
  %v81 = vld [vmem:[%s1 + $0x98] sm:$0xf]
  %v82 = vld [vmem:[%s1 + $0x9c] sm:$0xf]
  %v83 = vld [vmem:[%s1 + $0xa0] sm:$0xf]
  %v84 = vld [vmem:[%s1 + $0xa4] sm:$0xf]
  %v85 = vld [vmem:[%s1 + $0xa8] sm:$0xf]
  %v86 = vld [vmem:[%s1 + $0xac] sm:$0xf]
  %v87 = vld [vmem:[%s1 + $0xb0] sm:$0xf]
  %v88 = vld [vmem:[%s1 + $0xb4] sm:$0xf]
  %v89 = vld [vmem:[%s1 + $0xb8] sm:$0xf]
  %v90 = vld [vmem:[%s1 + $0xbc] sm:$0xf]
  %v91 = vld [vmem:[%s1 + $0xc0] sm:$0xf]
  %v92 = vld [vmem:[%s1 + $0xc4] sm:$0xf]
  %v93 = vld [vmem:[%s1 + $0xc8] sm:$0xf]
  %v94 = vld [vmem:[%s1 + $0xcc] sm:$0xf]
  %v95 = vld [vmem:[%s1 + $0xd0] sm:$0xf]
  %v96 = vld [vmem:[%s1 + $0xd4] sm:$0xf]
  %v97 = vld [vmem:[%s1 + $0xd8] sm:$0xf]
  %v98 = vld [vmem:[%s1 + $0xdc] sm:$0xf]
  %v99 = vld [vmem:[%s1 + $0xe0] sm:$0xf]
  %v100 = vld [vmem:[%s1 + $0xe4] sm:$0xf]
  %v101 = vld [vmem:[%s1 + $0xe8] sm:$0xf]
  %v102 = vld [vmem:[%s1 + $0xec] sm:$0xf]
  %v103 = vld [vmem:[%s1 + $0xf0] sm:$0xf]
  %v104 = vld [vmem:[%s1 + $0xf4] sm:$0xf]
  %v105 = vld [vmem:[%s1 + $0xf8] sm:$0xf]
  %v106 = vld [vmem:[%s1 + $0xfc] sm:$0xf]
  %v115 = vunpack.c.l.b16 %v35
  %v116 = vunpack.c.h.b16 %v35
  %v117 = vunpack.c.l.b16 %v36
  %v118 = vunpack.c.h.b16 %v36
  %v119 = vunpack.c.l.b16 %v37
  %v120 = vunpack.c.h.b16 %v37
  %v121 = vunpack.c.l.b16 %v38
  %v122 = vunpack.c.h.b16 %v38
  %v123 = vunpack.c.l.b16 %v39
  %v124 = vunpack.c.h.b16 %v39
  %v125 = vunpack.c.l.b16 %v40
  %v126 = vunpack.c.h.b16 %v40
  %v127 = vunpack.c.l.b16 %v41
  %v128 = vunpack.c.h.b16 %v41
  %v129 = vunpack.c.l.b16 %v42
  %v130 = vunpack.c.h.b16 %v42
  %v131 = vpack.c.b16 %v119, %v115
  %v132 = vpack.c.b16 %v120, %v116
  %v133 = vpack.c.b16 %v121, %v117
  %v134 = vpack.c.b16 %v122, %v118
  %v135 = vpack.c.b16 %v127, %v123
  %v136 = vpack.c.b16 %v128, %v124
  %v137 = vpack.c.b16 %v129, %v125
  %v138 = vpack.c.b16 %v130, %v126
  %v211 = vunpack.c.l.b16 %v43
  %v212 = vunpack.c.l.b16 %v44
  %v213 = vunpack.c.l.b16 %v45
  %v214 = vunpack.c.l.b16 %v46
  %v215 = vunpack.c.l.b16 %v47
  %v216 = vunpack.c.l.b16 %v48
  %v217 = vunpack.c.l.b16 %v49
  %v218 = vunpack.c.l.b16 %v50
  %v219 = vunpack.c.l.b16 %v51
  %v220 = vunpack.c.l.b16 %v52
  %v221 = vunpack.c.l.b16 %v53
  %v222 = vunpack.c.l.b16 %v54
  %v223 = vunpack.c.l.b16 %v55
  %v224 = vunpack.c.l.b16 %v56
  %v225 = vunpack.c.l.b16 %v57
  %v226 = vunpack.c.l.b16 %v58
  %v227 = vunpack.c.l.b16 %v59
  %v228 = vunpack.c.l.b16 %v60
  %v229 = vunpack.c.l.b16 %v61
  %v230 = vunpack.c.l.b16 %v62
  %v231 = vunpack.c.l.b16 %v63
  %v232 = vunpack.c.l.b16 %v64
  %v233 = vunpack.c.l.b16 %v65
  %v234 = vunpack.c.l.b16 %v66
  %v235 = vunpack.c.l.b16 %v67
  %v236 = vunpack.c.l.b16 %v68
  %v237 = vunpack.c.l.b16 %v69
  %v238 = vunpack.c.l.b16 %v70
  %v239 = vunpack.c.l.b16 %v71
  %v240 = vunpack.c.l.b16 %v72
  %v241 = vunpack.c.l.b16 %v73
  %v242 = vunpack.c.l.b16 %v74
  %v243 = vunpack.c.l.b16 %v75
  %v244 = vunpack.c.l.b16 %v76
  %v245 = vunpack.c.l.b16 %v77
  %v246 = vunpack.c.l.b16 %v78
  %v247 = vunpack.c.l.b16 %v79
  %v248 = vunpack.c.l.b16 %v80
  %v249 = vunpack.c.l.b16 %v81
  %v250 = vunpack.c.l.b16 %v82
  %v251 = vunpack.c.l.b16 %v83
  %v252 = vunpack.c.l.b16 %v84
  %v253 = vunpack.c.l.b16 %v85
  %v254 = vunpack.c.l.b16 %v86
  %v255 = vunpack.c.l.b16 %v87
  %v256 = vunpack.c.l.b16 %v88
  %v257 = vunpack.c.l.b16 %v89
  %v258 = vunpack.c.l.b16 %v90
  %v259 = vunpack.c.l.b16 %v91
  %v260 = vunpack.c.l.b16 %v92
  %v261 = vunpack.c.l.b16 %v93
  %v262 = vunpack.c.l.b16 %v94
  %v263 = vunpack.c.l.b16 %v95
  %v264 = vunpack.c.l.b16 %v96
  %v265 = vunpack.c.l.b16 %v97
  %v266 = vunpack.c.l.b16 %v98
  %v267 = vunpack.c.l.b16 %v99
  %v268 = vunpack.c.l.b16 %v100
  %v269 = vunpack.c.l.b16 %v101
  %v270 = vunpack.c.l.b16 %v102
  %v271 = vunpack.c.l.b16 %v103
  %v272 = vunpack.c.l.b16 %v104
  %v273 = vunpack.c.l.b16 %v105
  %v274 = vunpack.c.l.b16 %v106
  %v275 = vpack.c.b16 %v212, %v211
  %v276 = vpack.c.b16 %v214, %v213
  %v277 = vpack.c.b16 %v216, %v215
  %v278 = vpack.c.b16 %v218, %v217
  %v279 = vpack.c.b16 %v220, %v219
  %v280 = vpack.c.b16 %v222, %v221
  %v281 = vpack.c.b16 %v224, %v223
  %v282 = vpack.c.b16 %v226, %v225
  %v283 = vpack.c.b16 %v228, %v227
  %v284 = vpack.c.b16 %v230, %v229
  %v285 = vpack.c.b16 %v232, %v231
  %v286 = vpack.c.b16 %v234, %v233
  %v287 = vpack.c.b16 %v236, %v235
  %v288 = vpack.c.b16 %v238, %v237
  %v289 = vpack.c.b16 %v240, %v239
  %v290 = vpack.c.b16 %v242, %v241
  %v291 = vpack.c.b16 %v244, %v243
  %v292 = vpack.c.b16 %v246, %v245
  %v293 = vpack.c.b16 %v248, %v247
  %v294 = vpack.c.b16 %v250, %v249
  %v295 = vpack.c.b16 %v252, %v251
  %v296 = vpack.c.b16 %v254, %v253
  %v297 = vpack.c.b16 %v256, %v255
  %v298 = vpack.c.b16 %v258, %v257
  %v299 = vpack.c.b16 %v260, %v259
  %v300 = vpack.c.b16 %v262, %v261
  %v301 = vpack.c.b16 %v264, %v263
  %v302 = vpack.c.b16 %v266, %v265
  %v303 = vpack.c.b16 %v268, %v267
  %v304 = vpack.c.b16 %v270, %v269
  %v305 = vpack.c.b16 %v272, %v271
  %v306 = vpack.c.b16 %v274, %v273
  %339 = vmatpush.bf16.msra.mxu0 %v282
  %340 = vmatpush.bf16.msra.mxu0 %v281
  %341 = vmatpush.bf16.msra.mxu0 %v280
  %342 = vmatpush.bf16.msra.mxu0 %v279
  %343 = vmatpush.bf16.msra.mxu0 %v278
  %344 = vmatpush.bf16.msra.mxu0 %v277
  %345 = vmatpush.bf16.msra.mxu0 %v276
  %346 = vmatpush.bf16.msra.mxu0 %v275
  %347 = vmatmul.bf16.gmra.mxu0 %v131
  %v348 = vpop.f32.mrf.mxu0
  %v349 = vadd.f32 0.0, %v348
  %v350 = vpop.f32.mrf.mxu0
  %v351 = vadd.f32 0.0, %v350
  %352 = vmatmul.bf16.gmra.mxu0 %v135
  %v353 = vpop.f32.mrf.mxu0
  %v354 = vadd.f32 0.0, %v353
  %v355 = vpop.f32.mrf.mxu0
  %v356 = vadd.f32 0.0, %v355
  %357 = vdwg.mxu0
  %358 = vmatpush.bf16.msra.mxu0 %v290
  %359 = vmatpush.bf16.msra.mxu0 %v289
  %360 = vmatpush.bf16.msra.mxu0 %v288
  %361 = vmatpush.bf16.msra.mxu0 %v287
  %362 = vmatpush.bf16.msra.mxu0 %v286
  %363 = vmatpush.bf16.msra.mxu0 %v285
  %364 = vmatpush.bf16.msra.mxu0 %v284
  %365 = vmatpush.bf16.msra.mxu0 %v283
  %366 = vmatmul.bf16.gmra.mxu0 %v132
  %v367 = vpop.f32.mrf.mxu0
  %v368 = vadd.f32 %v349, %v367
  %v369 = vpop.f32.mrf.mxu0
  %v370 = vadd.f32 %v351, %v369
  %371 = vmatmul.bf16.gmra.mxu0 %v136
  %v372 = vpop.f32.mrf.mxu0
  %v373 = vadd.f32 %v354, %v372
  %v374 = vpop.f32.mrf.mxu0
  %v375 = vadd.f32 %v356, %v374
  %376 = vdwg.mxu0
  %377 = vmatpush.bf16.msra.mxu0 %v298
  %378 = vmatpush.bf16.msra.mxu0 %v297
  %379 = vmatpush.bf16.msra.mxu0 %v296
  %380 = vmatpush.bf16.msra.mxu0 %v295
  %381 = vmatpush.bf16.msra.mxu0 %v294
  %382 = vmatpush.bf16.msra.mxu0 %v293
  %383 = vmatpush.bf16.msra.mxu0 %v292
  %384 = vmatpush.bf16.msra.mxu0 %v291
  %385 = vmatmul.bf16.gmra.mxu0 %v133
  %v386 = vpop.f32.mrf.mxu0
  %v387 = vadd.f32 %v368, %v386
  %v388 = vpop.f32.mrf.mxu0
  %v389 = vadd.f32 %v370, %v388
  %390 = vmatmul.bf16.gmra.mxu0 %v137
  %v391 = vpop.f32.mrf.mxu0
  %v392 = vadd.f32 %v373, %v391
  %v393 = vpop.f32.mrf.mxu0
  %v394 = vadd.f32 %v375, %v393
  %395 = vdwg.mxu0
  %396 = vmatpush.bf16.msra.mxu0 %v306
  %397 = vmatpush.bf16.msra.mxu0 %v305
  %398 = vmatpush.bf16.msra.mxu0 %v304
  %399 = vmatpush.bf16.msra.mxu0 %v303
  %400 = vmatpush.bf16.msra.mxu0 %v302
  %401 = vmatpush.bf16.msra.mxu0 %v301
  %402 = vmatpush.bf16.msra.mxu0 %v300
  %403 = vmatpush.bf16.msra.mxu0 %v299
  %404 = vmatmul.bf16.gmra.mxu0 %v134
  %v405 = vpop.f32.mrf.mxu0
  %v406 = vadd.f32 %v387, %v405
  %v407 = vpop.f32.mrf.mxu0
  %v408 = vadd.f32 %v389, %v407
  %409 = vmatmul.bf16.gmra.mxu0 %v138
  %v410 = vpop.f32.mrf.mxu0
  %v411 = vadd.f32 %v392, %v410
  %v412 = vpop.f32.mrf.mxu0
  %v413 = vadd.f32 %v394, %v412
  %414 = vdwg.mxu0
  %v415 = vadd.f32 %v31, %v406
  %v416 = vadd.f32 %v32, %v408
  %v417 = vadd.f32 %v33, %v411
  %v418 = vadd.f32 %v34, %v413
  %419 = vst [vmem:[#allocation2] sm:$0xff] %v415
  %420 = vst [vmem:[#allocation2 + $0x8] sm:$0xff] %v416
  %421 = vst [vmem:[#allocation2 + $0x10] sm:$0xff] %v417
  %422 = vst [vmem:[#allocation2 + $0x18] sm:$0xff] %v418
  // Predicated region
  $region30: #{gpt_forward.15} parent=0 // pred_check
    %p423 = pneg %p23
  $region31: #{gpt_forward.15} parent=0 // pred_check_branch
    %425 = sbr.rel (%p423) target = $region33
  $region32: #{gpt_forward.15} parent=0 // pred_region
    %v426 = vld [vmem:[#allocation2] sm:$0xff]
    %v427 = vld [vmem:[#allocation2 + $0x8] sm:$0xff]
    %v428 = vld [vmem:[#allocation2 + $0x10] sm:$0xff]
    %v429 = vld [vmem:[#allocation2 + $0x18] sm:$0xff]
    %v430 = vld [vmem:[%s2] sm:$0x1]
    %v431 = vunpack.c.l.bf16 %v430
    %v432 = vperm.slane %v431, 0
    %v433 = vadd.f32 %v426, %v432
    %v434 = vadd.f32 %v427, %v432
    %v435 = vadd.f32 %v428, %v432
    %v436 = vadd.f32 %v429, %v432
    %v437 = vld [vmem:[%s3] sm:$0xf]
    %v438 = vld [vmem:[%s3 + $0x4] sm:$0xf]
    %v439 = vld [vmem:[%s3 + $0x8] sm:$0xf]
    %v440 = vld [vmem:[%s3 + $0xc] sm:$0xf]
    %v441 = vunpack.c.l.bf16 %v437
    %v442 = vunpack.c.l.bf16 %v438
    %v443 = vunpack.c.l.bf16 %v439
    %v444 = vunpack.c.l.bf16 %v440
    %v445 = vadd.f32 %v433, %v441
    %v446 = vadd.f32 %v434, %v442
    %v447 = vadd.f32 %v435, %v443
    %v448 = vadd.f32 %v436, %v444
    %449 = vadd.xlane.f32.xlu0 %v445
    %v450 = vpop.xlane.xlu0 %449
    %451 = vadd.xlane.f32.xlu0 %v446
    %v452 = vpop.xlane.xlu0 %451
    %453 = vadd.xlane.f32.xlu0 %v447
    %v454 = vpop.xlane.xlu0 %453
    %455 = vadd.xlane.f32.xlu0 %v448
    %v456 = vpop.xlane.xlu0 %455
    %v457 = vrcp.pop 128.0
    %v458 = vmul.f32 128.0, %v457
    %v459 = vsub.f32 1.0, %v458
    %v460 = vmul.f32 %v457, %v459
    %v461 = vadd.f32 %v457, %v460
    %vm462 = vweird.f32 %v457
    %v463 = vsel %vm462, %v457, %v461
    %v464 = vmul.f32 %v450, %v463
    %v465 = vmul.f32 %v452, %v463
    %v466 = vmul.f32 %v454, %v463
    %v467 = vmul.f32 %v456, %v463
    %v468 = vsub.f32 %v445, %v464
    %v469 = vsub.f32 %v446, %v465
    %v470 = vsub.f32 %v447, %v466
    %v471 = vsub.f32 %v448, %v467
    %v472 = vmul.f32 %v468, %v468
    %v473 = vmul.f32 %v469, %v469
    %v474 = vmul.f32 %v470, %v470
    %v475 = vmul.f32 %v471, %v471
    %476 = vadd.xlane.f32.xlu0 %v472
    %v477 = vpop.xlane.xlu0 %476
    %478 = vadd.xlane.f32.xlu0 %v473
    %v479 = vpop.xlane.xlu0 %478
    %480 = vadd.xlane.f32.xlu0 %v474
    %v481 = vpop.xlane.xlu0 %480
    %482 = vadd.xlane.f32.xlu0 %v475
    %v483 = vpop.xlane.xlu0 %482
    %v484 = vmul.f32 %v477, %v463
    %v485 = vmul.f32 %v479, %v463
    %v486 = vmul.f32 %v481, %v463
    %v487 = vmul.f32 %v483, %v463
    %v488 = vadd.f32 %v484, 1e-05
    %v489 = vadd.f32 %v485, 1e-05
    %v490 = vadd.f32 %v486, 1e-05
    %v491 = vadd.f32 %v487, 1e-05
    %v492 = vrsqrt.pop %v488
    %v493 = vmul.f32 %v492, %v488
    %v494 = vmul.f32 %v493, %v492
    %v495 = vmul.f32 0.5, %v494
    %v496 = vsub.f32 1.5, %v495
    %v497 = vmul.f32 %v492, %v496
    %vm498 = vweird.f32 %v488
    %vm499 = vweird.f32 %v492
    %vm500 = vmor %vm498, %vm499
    %v501 = vsel %vm500, %v492, %v497
    %v502 = vrsqrt.pop %v489
    %v503 = vmul.f32 %v502, %v489
    %v504 = vmul.f32 %v503, %v502
    %v505 = vmul.f32 0.5, %v504
    %v506 = vsub.f32 1.5, %v505
    %v507 = vmul.f32 %v502, %v506
    %vm508 = vweird.f32 %v489
    %vm509 = vweird.f32 %v502
    %vm510 = vmor %vm508, %vm509
    %v511 = vsel %vm510, %v502, %v507
    %v512 = vrsqrt.pop %v490
    %v513 = vmul.f32 %v512, %v490
    %v514 = vmul.f32 %v513, %v512
    %v515 = vmul.f32 0.5, %v514
    %v516 = vsub.f32 1.5, %v515
    %v517 = vmul.f32 %v512, %v516
    %vm518 = vweird.f32 %v490
    %vm519 = vweird.f32 %v512
    %vm520 = vmor %vm518, %vm519
    %v521 = vsel %vm520, %v512, %v517
    %v522 = vrsqrt.pop %v491
    %v523 = vmul.f32 %v522, %v491
    %v524 = vmul.f32 %v523, %v522
    %v525 = vmul.f32 0.5, %v524
    %v526 = vsub.f32 1.5, %v525
    %v527 = vmul.f32 %v522, %v526
    %vm528 = vweird.f32 %v491
    %vm529 = vweird.f32 %v522
    %vm530 = vmor %vm528, %vm529
    %v531 = vsel %vm530, %v522, %v527
    %v532 = vmul.f32 %v468, %v501
    %v533 = vmul.f32 %v469, %v511
    %v534 = vmul.f32 %v470, %v521
    %v535 = vmul.f32 %v471, %v531
    %v536 = vld [vmem:[%s4] sm:$0x1]
    %v537 = vunpack.c.l.bf16 %v536
    %v538 = vperm.slane %v537, 0
    %v539 = vmul.f32 %v532, %v538
    %v540 = vmul.f32 %v533, %v538
    %v541 = vmul.f32 %v534, %v538
    %v542 = vmul.f32 %v535, %v538
    %v543 = vld [vmem:[%s5] sm:$0x1]
    %v544 = vunpack.c.l.bf16 %v543
    %v545 = vperm.slane %v544, 0
    %v546 = vadd.f32 %v539, %v545
    %v547 = vadd.f32 %v540, %v545
    %v548 = vadd.f32 %v541, %v545
    %v549 = vadd.f32 %v542, %v545
    %v550 = vpack.c.bf16 %v546, %v546
    %v551 = vpack.c.bf16 %v547, %v547
    %v552 = vpack.c.bf16 %v548, %v548
    %v553 = vpack.c.bf16 %v549, %v549
    %554 = vst [vmem:[%s6] sm:$0xf] %v550
    %555 = vst [vmem:[%s6 + $0x4] sm:$0xf] %v551
    %556 = vst [vmem:[%s6 + $0x8] sm:$0xf] %v552
    %557 = vst [vmem:[%s6 + $0xc] sm:$0xf] %v553
  $region33: #{gpt_forward.15} parent=0 // pred_fallthru
    _
  // Predicated region
  $region34: #{gpt_forward.15} parent=0 // pred_check
    _
  $region35: #{gpt_forward.15} parent=0 // pred_check_branch
    %559 = sbr.rel (0) target = $region37
  $region36: #{gpt_forward.15} parent=0 // pred_region
    _
  $region37: #{gpt_forward.15} parent=0 // pred_fallthru
    _
  // Predicated region
  $region38: #{gpt_forward.15} parent=0 // pred_check
    _
  $region39: #{gpt_forward.15} parent=0 // pred_check_branch
    %561 = sbr.rel (0) target = $region41
  $region40: #{gpt_forward.15} parent=0 // pred_region
    _
  $region41: #{gpt_forward.15} parent=0 // pred_fallthru
    _

</llo_original>
